<compile_context>
chip_gen: v6e
topology: v6e:2x2x1
jax: 0.10.0
libtpu: 0.0.40
codegen_flags: <defaults>
</compile_context>

<pallas_src>
import functools

import jax
import jax.numpy as jnp
from jax.experimental import pallas as pl
from jax.experimental.pallas import tpu as pltpu


def _sigmoid(x):
    return 1.0 / (1.0 + jnp.exp(-x))


def _round_up(n, m):
    return (n + m - 1) // m * m


PARAM_ORDER = (
    "ew1", "eb1", "ew2", "eb2",
    "msw", "msb",
    "dw1", "db1", "dw2", "db2", "dw3", "db3",
    "tcw1", "tcb1", "tw2", "tb2", "cw2", "cb2",
    "t2w1", "t2b1", "t2w2", "t2b2", "t2w3", "t2b3",
)


def vae_kernel(
    # batch-tiled inputs
    x_ref, noise_ref,
    # resident weights / biases (constant index_map)
    ew1, eb1, ew2, eb2,                 # encoder
    msw, msb,                           # fused code_mean | code_sd
    dw1, db1, dw2, db2, dw3, db3,       # decoder
    tcw1, tcb1, tw2, tb2, cw2, cb2,     # fused task/domain hidden + heads
    t2w1, t2b1, t2w2, t2b2, t2w3, t2b3, # task_classifier2
    # lane-dense output slabs
    dec_out, ms_out, misc_out,
):
    f32 = jnp.float32
    bf16 = jnp.bfloat16
    cs = noise_ref.shape[-1]  # code_size

    def mm(a, w_ref):
        # bf16 MXU matmul, f32 accumulation
        return jnp.dot(a.astype(bf16), w_ref[...], preferred_element_type=f32)

    x = x_ref[...]

    # ---- encoder ----
    h = jnp.maximum(mm(x, ew1) + eb1[...], 0.0)
    h = jnp.maximum(mm(h, ew2) + eb2[...], 0.0)

    # ---- latent code (fused mean|sd, reparameterization) ----
    ms = mm(h, msw) + msb[...]                     # (B, 2*cs) = [mean | sd]
    code_mean = ms[:, :cs]
    code_sd = ms[:, cs:]
    code = code_mean + jnp.exp(0.5 * code_sd) * noise_ref[...]

    # ---- fused task / domain classifier hidden (dropout = identity in eval;
    #      ReverseLayerF = identity in forward) ----
    tc = jnp.maximum(mm(code, tcw1) + tcb1[...], 0.0)   # (B, 64) = [task_h | dom_h]
    t_h = tc[:, :32]
    d_h = tc[:, 32:]
    # N=1 heads as VPU multiply + lane reduction (no 1-lane MXU ops)
    code_task = _sigmoid(jnp.sum(t_h * tw2[...], axis=-1, keepdims=True) + tb2[...])
    code_domain = _sigmoid(jnp.sum(d_h * cw2[...], axis=-1, keepdims=True) + cb2[...])

    # ---- decoder ----
    g = jnp.maximum(mm(code, dw1) + db1[...], 0.0)
    g = jnp.maximum(mm(g, dw2) + db2[...], 0.0)
    decoding = _sigmoid(mm(g, dw3) + db3[...])

    # ---- task classifier 2 on decoding (dropout = identity in eval) ----
    u = jnp.maximum(mm(decoding, t2w1) + t2b1[...], 0.0)
    u = jnp.maximum(mm(u, t2w2) + t2b2[...], 0.0)
    output_task = _sigmoid(jnp.sum(u * t2w3[...], axis=-1, keepdims=True) + t2b3[...])

    # ---- lane-dense output slabs ----
    dec_out[...] = decoding
    ms_out[...] = ms
    misc_out[...] = jnp.zeros_like(misc_out)
    misc_out[:, :cs] = code
    misc_out[:, cs:cs + 1] = code_task
    misc_out[:, cs + 1:cs + 2] = code_domain
    misc_out[:, cs + 2:cs + 3] = output_task


def init_params(key, input_size, code_size):
    """PyTorch-style Linear init: U(-1/sqrt(fan_in), 1/sqrt(fan_in)).
    Weights stored as (in, out); matmul weights cast to bf16; narrow layers fused."""

    def linear(k, fan_in, fan_out):
        kw, kb = jax.random.split(k)
        bound = 1.0 / jnp.sqrt(float(fan_in))
        w = jax.random.uniform(kw, (fan_in, fan_out), jnp.float32, -bound, bound)
        b = jax.random.uniform(kb, (1, fan_out), jnp.float32, -bound, bound)
        return w, b

    ks = jax.random.split(key, 14)
    ew1, eb1 = linear(ks[0], input_size, 512)
    ew2, eb2 = linear(ks[1], 512, 256)
    mw, mb = linear(ks[2], 256, code_size)
    sw, sb = linear(ks[3], 256, code_size)
    dw1, db1 = linear(ks[4], code_size, 256)
    dw2, db2 = linear(ks[5], 256, 512)
    dw3, db3 = linear(ks[6], 512, input_size)
    tw1, tb1 = linear(ks[7], code_size, 32)
    tw2, tb2 = linear(ks[8], 32, 1)
    cw1, cb1 = linear(ks[9], code_size, 32)
    cw2, cb2 = linear(ks[10], 32, 1)
    t2w1, t2b1 = linear(ks[11], input_size, 512)
    t2w2, t2b2 = linear(ks[12], 512, 256)
    t2w3, t2b3 = linear(ks[13], 256, 1)

    bf16 = jnp.bfloat16
    return {
        "ew1": ew1.astype(bf16), "eb1": eb1,
        "ew2": ew2.astype(bf16), "eb2": eb2,
        "msw": jnp.concatenate([mw, sw], axis=1).astype(bf16),
        "msb": jnp.concatenate([mb, sb], axis=1),
        "dw1": dw1.astype(bf16), "db1": db1,
        "dw2": dw2.astype(bf16), "db2": db2,
        "dw3": dw3.astype(bf16), "db3": db3,
        "tcw1": jnp.concatenate([tw1, cw1], axis=1).astype(bf16),
        "tcb1": jnp.concatenate([tb1, cb1], axis=1),
        "tw2": tw2.T, "tb2": tb2,       # (1, 32), (1, 1)
        "cw2": cw2.T, "cb2": cb2,       # (1, 32), (1, 1)
        "t2w1": t2w1.astype(bf16), "t2b1": t2b1,
        "t2w2": t2w2.astype(bf16), "t2b2": t2b2,
        "t2w3": t2w3.T, "t2b3": t2b3,   # (1, 256), (1, 1)
    }


@functools.partial(jax.jit, static_argnames=("input_size", "code_size", "tile_b"))
def vae_forward(x, noise, params, *, input_size, code_size, tile_b=None):
    B = x.shape[0]
    if tile_b is None:
        tile_b = min(256, _round_up(B, 8))
    tile_b = _round_up(tile_b, 8)
    Bp = _round_up(B, tile_b)
    if Bp != B:
        x = jnp.pad(x, ((0, Bp - B), (0, 0)))
        noise = jnp.pad(noise, ((0, Bp - B), (0, 0)))

    misc_width = _round_up(code_size + 3, 128)

    def bspec(feat):
        return pl.BlockSpec((tile_b, feat), lambda i: (i, 0))

    def wspec(arr):
        # constant index_map: weight block revisited -> resident in VMEM
        return pl.BlockSpec(arr.shape, lambda i: (0, 0))

    ordered = [x, noise] + [params[k] for k in PARAM_ORDER]
    in_specs = [bspec(input_size), bspec(code_size)] + [
        wspec(params[k]) for k in PARAM_ORDER
    ]

    out_shape = (
        jax.ShapeDtypeStruct((Bp, input_size), jnp.float32),      # decoding
        jax.ShapeDtypeStruct((Bp, 2 * code_size), jnp.float32),   # [mean | sd]
        jax.ShapeDtypeStruct((Bp, misc_width), jnp.float32),      # [code|task|dom|out|pad]
    )
    out_specs = (
        pl.BlockSpec((tile_b, input_size), lambda i: (i, 0)),
        pl.BlockSpec((tile_b, 2 * code_size), lambda i: (i, 0)),
        pl.BlockSpec((tile_b, misc_width), lambda i: (i, 0)),
    )

    dec, ms, misc = pl.pallas_call(
        vae_kernel,
        out_shape=out_shape,
        grid=(Bp // tile_b,),
        in_specs=in_specs,
        out_specs=out_specs,
        compiler_params=pltpu.CompilerParams(
            dimension_semantics=("parallel",),
        ),
    )(*ordered)

    decoding = dec[:B]
    code_mean = ms[:B, :code_size]
    code_sd = ms[:B, code_size:]
    code = misc[:B, :code_size]
    code_task = misc[:B, code_size]
    code_domain = misc[:B, code_size + 1]
    output_task = misc[:B, code_size + 2]
    # squeeze(1) like the PyTorch module (heads already 1-D here)
    return (decoding, code_mean, code_sd, code, code_task, code_domain, output_task)


if __name__ == "__main__":
    INPUT_SIZE = 128
    CODE_SIZE = 64
    BATCH = 8

    root = jax.random.PRNGKey(0)
    k_params, k_x, k_noise = jax.random.split(root, 3)

    params = init_params(k_params, INPUT_SIZE, CODE_SIZE)
    x = jax.random.normal(k_x, (BATCH, INPUT_SIZE), jnp.float32)
    noise = jax.random.normal(k_noise, (BATCH, CODE_SIZE), jnp.float32)

    outs = vae_forward(x, noise, params,
                       input_size=INPUT_SIZE, code_size=CODE_SIZE)
    outs = jax.block_until_ready(outs)

    decoding, code_mean, code_sd, code, code_task, code_domain, output_task = outs
    assert decoding.shape == (BATCH, INPUT_SIZE)
    assert code_mean.shape == (BATCH, CODE_SIZE)
    assert code_sd.shape == (BATCH, CODE_SIZE)
    assert code.shape == (BATCH, CODE_SIZE)
    assert code_task.shape == (BATCH,)
    assert code_domain.shape == (BATCH,)
    assert output_task.shape == (BATCH,)
    assert all(bool(jnp.all(jnp.isfinite(o))) for o in outs)

    # Multi-step grid check: same rows replicated, small batch tile -> 4 grid
    # steps with weights resident; results must match the single-step run.
    x4 = jnp.tile(x, (4, 1))
    n4 = jnp.tile(noise, (4, 1))
    outs4 = vae_forward(x4, n4, params,
                        input_size=INPUT_SIZE, code_size=CODE_SIZE, tile_b=8)
    outs4 = jax.block_until_ready(outs4)
    assert bool(jnp.allclose(outs4[0][:BATCH], decoding, atol=1e-5, rtol=1e-5))
    assert bool(jnp.allclose(outs4[3][:BATCH], code, atol=1e-5, rtol=1e-5))
    assert bool(jnp.allclose(outs4[6][:BATCH], output_task, atol=1e-5, rtol=1e-5))

    print("KERNEL_OK")
</pallas_src>

<mosaic_0001>
module attributes {stable_mosaic.version = 11 : i64} {
  func.func @vae_kernel(%arg0: i32, %arg1: memref<8x128xf32, #tpu.memory_space<vmem>>, %arg2: memref<8x64xf32, #tpu.memory_space<vmem>>, %arg3: memref<128x512xbf16, #tpu.memory_space<vmem>>, %arg4: memref<1x512xf32, #tpu.memory_space<vmem>>, %arg5: memref<512x256xbf16, #tpu.memory_space<vmem>>, %arg6: memref<1x256xf32, #tpu.memory_space<vmem>>, %arg7: memref<256x128xbf16, #tpu.memory_space<vmem>>, %arg8: memref<1x128xf32, #tpu.memory_space<vmem>>, %arg9: memref<64x256xbf16, #tpu.memory_space<vmem>>, %arg10: memref<1x256xf32, #tpu.memory_space<vmem>>, %arg11: memref<256x512xbf16, #tpu.memory_space<vmem>>, %arg12: memref<1x512xf32, #tpu.memory_space<vmem>>, %arg13: memref<512x128xbf16, #tpu.memory_space<vmem>>, %arg14: memref<1x128xf32, #tpu.memory_space<vmem>>, %arg15: memref<64x64xbf16, #tpu.memory_space<vmem>>, %arg16: memref<1x64xf32, #tpu.memory_space<vmem>>, %arg17: memref<1x32xf32, #tpu.memory_space<vmem>>, %arg18: memref<1x1xf32, #tpu.memory_space<vmem>>, %arg19: memref<1x32xf32, #tpu.memory_space<vmem>>, %arg20: memref<1x1xf32, #tpu.memory_space<vmem>>, %arg21: memref<128x512xbf16, #tpu.memory_space<vmem>>, %arg22: memref<1x512xf32, #tpu.memory_space<vmem>>, %arg23: memref<512x256xbf16, #tpu.memory_space<vmem>>, %arg24: memref<1x256xf32, #tpu.memory_space<vmem>>, %arg25: memref<1x256xf32, #tpu.memory_space<vmem>>, %arg26: memref<1x1xf32, #tpu.memory_space<vmem>>, %arg27: memref<8x128xf32, #tpu.memory_space<vmem>>, %arg28: memref<8x128xf32, #tpu.memory_space<vmem>>, %arg29: memref<8x128xf32, #tpu.memory_space<vmem>>) attributes {dimension_semantics = [#tpu.dimension_semantics<parallel>], iteration_bounds = array<i64: 1>, scalar_prefetch = 0 : i64, scratch_operands = 0 : i64, tpu.core_type = #tpu.core_type<tc>, window_params = [{transform_indices = @transform_0, window_bounds = array<i64: 8, 128>}, {transform_indices = @transform_1, window_bounds = array<i64: 8, 64>}, {pipeline_mode = #tpu.pipeline_mode<synchronous>, transform_indices = @transform_2, window_bounds = array<i64: 128, 512>}, {pipeline_mode = #tpu.pipeline_mode<synchronous>, transform_indices = @transform_3, window_bounds = array<i64: 1, 512>}, {pipeline_mode = #tpu.pipeline_mode<synchronous>, transform_indices = @transform_4, window_bounds = array<i64: 512, 256>}, {pipeline_mode = #tpu.pipeline_mode<synchronous>, transform_indices = @transform_5, window_bounds = array<i64: 1, 256>}, {pipeline_mode = #tpu.pipeline_mode<synchronous>, transform_indices = @transform_6, window_bounds = array<i64: 256, 128>}, {pipeline_mode = #tpu.pipeline_mode<synchronous>, transform_indices = @transform_7, window_bounds = array<i64: 1, 128>}, {pipeline_mode = #tpu.pipeline_mode<synchronous>, transform_indices = @transform_8, window_bounds = array<i64: 64, 256>}, {pipeline_mode = #tpu.pipeline_mode<synchronous>, transform_indices = @transform_9, window_bounds = array<i64: 1, 256>}, {pipeline_mode = #tpu.pipeline_mode<synchronous>, transform_indices = @transform_10, window_bounds = array<i64: 256, 512>}, {pipeline_mode = #tpu.pipeline_mode<synchronous>, transform_indices = @transform_11, window_bounds = array<i64: 1, 512>}, {pipeline_mode = #tpu.pipeline_mode<synchronous>, transform_indices = @transform_12, window_bounds = array<i64: 512, 128>}, {pipeline_mode = #tpu.pipeline_mode<synchronous>, transform_indices = @transform_13, window_bounds = array<i64: 1, 128>}, {pipeline_mode = #tpu.pipeline_mode<synchronous>, transform_indices = @transform_14, window_bounds = array<i64: 64, 64>}, {pipeline_mode = #tpu.pipeline_mode<synchronous>, transform_indices = @transform_15, window_bounds = array<i64: 1, 64>}, {pipeline_mode = #tpu.pipeline_mode<synchronous>, transform_indices = @transform_16, window_bounds = array<i64: 1, 32>}, {pipeline_mode = #tpu.pipeline_mode<synchronous>, transform_indices = @transform_17, window_bounds = array<i64: 1, 1>}, {pipeline_mode = #tpu.pipeline_mode<synchronous>, transform_indices = @transform_18, window_bounds = array<i64: 1, 32>}, {pipeline_mode = #tpu.pipeline_mode<synchronous>, transform_indices = @transform_19, window_bounds = array<i64: 1, 1>}, {pipeline_mode = #tpu.pipeline_mode<synchronous>, transform_indices = @transform_20, window_bounds = array<i64: 128, 512>}, {pipeline_mode = #tpu.pipeline_mode<synchronous>, transform_indices = @transform_21, window_bounds = array<i64: 1, 512>}, {pipeline_mode = #tpu.pipeline_mode<synchronous>, transform_indices = @transform_22, window_bounds = array<i64: 512, 256>}, {pipeline_mode = #tpu.pipeline_mode<synchronous>, transform_indices = @transform_23, window_bounds = array<i64: 1, 256>}, {pipeline_mode = #tpu.pipeline_mode<synchronous>, transform_indices = @transform_24, window_bounds = array<i64: 1, 256>}, {pipeline_mode = #tpu.pipeline_mode<synchronous>, transform_indices = @transform_25, window_bounds = array<i64: 1, 1>}, {transform_indices = @transform_26, window_bounds = array<i64: 8, 128>}, {transform_indices = @transform_27, window_bounds = array<i64: 8, 128>}, {transform_indices = @transform_28, window_bounds = array<i64: 8, 128>}]} {
    %c0 = arith.constant 0 : index
    %c0_0 = arith.constant 0 : index
    %0 = vector.load %arg1[%c0, %c0_0] : memref<8x128xf32, #tpu.memory_space<vmem>>, vector<8x128xf32>
    %1 = arith.truncf %0 : vector<8x128xf32> to vector<8x128xbf16>
    %c0_1 = arith.constant 0 : index
    %c0_2 = arith.constant 0 : index
    %2 = vector.load %arg3[%c0_1, %c0_2] : memref<128x512xbf16, #tpu.memory_space<vmem>>, vector<128x512xbf16>
    %cst = arith.constant dense<0.000000e+00> : vector<8x512xf32>
    %3 = tpu.matmul %1, %2, %cst {dimension_numbers = #tpu.dot_dimension_numbers<[1], [0], [0], [1], [0, 0, 1, 1], [], []>} : vector<8x128xbf16>, vector<128x512xbf16>, vector<8x512xf32> -> vector<8x512xf32>
    %c0_3 = arith.constant 0 : index
    %c0_4 = arith.constant 0 : index
    %4 = vector.load %arg4[%c0_3, %c0_4] : memref<1x512xf32, #tpu.memory_space<vmem>>, vector<1x512xf32>
    %5 = vector.broadcast %4 : vector<1x512xf32> to vector<8x512xf32>
    %6 = arith.addf %3, %5 : vector<8x512xf32>
    %cst_5 = arith.constant 0.000000e+00 : f32
    %7 = vector.broadcast %cst_5 : f32 to vector<8x512xf32>
    %8 = arith.maximumf %6, %7 : vector<8x512xf32>
    %9 = arith.truncf %8 : vector<8x512xf32> to vector<8x512xbf16>
    %c0_6 = arith.constant 0 : index
    %c0_7 = arith.constant 0 : index
    %10 = vector.load %arg5[%c0_6, %c0_7] : memref<512x256xbf16, #tpu.memory_space<vmem>>, vector<512x256xbf16>
    %cst_8 = arith.constant dense<0.000000e+00> : vector<8x256xf32>
    %11 = tpu.matmul %9, %10, %cst_8 {dimension_numbers = #tpu.dot_dimension_numbers<[1], [0], [0], [1], [0, 0, 1, 1], [], []>} : vector<8x512xbf16>, vector<512x256xbf16>, vector<8x256xf32> -> vector<8x256xf32>
    %c0_9 = arith.constant 0 : index
    %c0_10 = arith.constant 0 : index
    %12 = vector.load %arg6[%c0_9, %c0_10] : memref<1x256xf32, #tpu.memory_space<vmem>>, vector<1x256xf32>
    %13 = vector.broadcast %12 : vector<1x256xf32> to vector<8x256xf32>
    %14 = arith.addf %11, %13 : vector<8x256xf32>
    %cst_11 = arith.constant 0.000000e+00 : f32
    %15 = vector.broadcast %cst_11 : f32 to vector<8x256xf32>
    %16 = arith.maximumf %14, %15 : vector<8x256xf32>
    %17 = arith.truncf %16 : vector<8x256xf32> to vector<8x256xbf16>
    %c0_12 = arith.constant 0 : index
    %c0_13 = arith.constant 0 : index
    %18 = vector.load %arg7[%c0_12, %c0_13] : memref<256x128xbf16, #tpu.memory_space<vmem>>, vector<256x128xbf16>
    %cst_14 = arith.constant dense<0.000000e+00> : vector<8x128xf32>
    %19 = tpu.matmul %17, %18, %cst_14 {dimension_numbers = #tpu.dot_dimension_numbers<[1], [0], [0], [1], [0, 0, 1, 1], [], []>} : vector<8x256xbf16>, vector<256x128xbf16>, vector<8x128xf32> -> vector<8x128xf32>
    %c0_15 = arith.constant 0 : index
    %c0_16 = arith.constant 0 : index
    %20 = vector.load %arg8[%c0_15, %c0_16] : memref<1x128xf32, #tpu.memory_space<vmem>>, vector<1x128xf32>
    %21 = vector.broadcast %20 : vector<1x128xf32> to vector<8x128xf32>
    %22 = arith.addf %19, %21 : vector<8x128xf32>
    %23 = vector.extract_strided_slice %22 {offsets = [0, 0], sizes = [8, 64], strides = [1, 1]} : vector<8x128xf32> to vector<8x64xf32>
    %24 = vector.extract_strided_slice %22 {offsets = [0, 64], sizes = [8, 64], strides = [1, 1]} : vector<8x128xf32> to vector<8x64xf32>
    %cst_17 = arith.constant 5.000000e-01 : f32
    %25 = vector.broadcast %cst_17 : f32 to vector<8x64xf32>
    %26 = arith.mulf %25, %24 : vector<8x64xf32>
    %27 = math.exp %26 : vector<8x64xf32>
    %c0_18 = arith.constant 0 : index
    %c0_19 = arith.constant 0 : index
    %28 = vector.load %arg2[%c0_18, %c0_19] : memref<8x64xf32, #tpu.memory_space<vmem>>, vector<8x64xf32>
    %29 = arith.mulf %27, %28 : vector<8x64xf32>
    %30 = arith.addf %23, %29 : vector<8x64xf32>
    %31 = arith.truncf %30 : vector<8x64xf32> to vector<8x64xbf16>
    %c0_20 = arith.constant 0 : index
    %c0_21 = arith.constant 0 : index
    %32 = vector.load %arg15[%c0_20, %c0_21] : memref<64x64xbf16, #tpu.memory_space<vmem>>, vector<64x64xbf16>
    %cst_22 = arith.constant dense<0.000000e+00> : vector<8x64xf32>
    %33 = tpu.matmul %31, %32, %cst_22 {dimension_numbers = #tpu.dot_dimension_numbers<[1], [0], [0], [1], [0, 0, 1, 1], [], []>} : vector<8x64xbf16>, vector<64x64xbf16>, vector<8x64xf32> -> vector<8x64xf32>
    %c0_23 = arith.constant 0 : index
    %c0_24 = arith.constant 0 : index
    %34 = vector.load %arg16[%c0_23, %c0_24] : memref<1x64xf32, #tpu.memory_space<vmem>>, vector<1x64xf32>
    %35 = vector.broadcast %34 : vector<1x64xf32> to vector<8x64xf32>
    %36 = arith.addf %33, %35 : vector<8x64xf32>
    %cst_25 = arith.constant 0.000000e+00 : f32
    %37 = vector.broadcast %cst_25 : f32 to vector<8x64xf32>
    %38 = arith.maximumf %36, %37 : vector<8x64xf32>
    %39 = vector.extract_strided_slice %38 {offsets = [0, 0], sizes = [8, 32], strides = [1, 1]} : vector<8x64xf32> to vector<8x32xf32>
    %40 = vector.extract_strided_slice %38 {offsets = [0, 32], sizes = [8, 32], strides = [1, 1]} : vector<8x64xf32> to vector<8x32xf32>
    %c0_26 = arith.constant 0 : index
    %c0_27 = arith.constant 0 : index
    %41 = vector.load %arg17[%c0_26, %c0_27] : memref<1x32xf32, #tpu.memory_space<vmem>>, vector<1x32xf32>
    %42 = vector.broadcast %41 : vector<1x32xf32> to vector<8x32xf32>
    %43 = arith.mulf %39, %42 : vector<8x32xf32>
    %cst_28 = arith.constant dense<0.000000e+00> : vector<8xf32>
    %44 = vector.multi_reduction <add>, %43, %cst_28 [1] : vector<8x32xf32> to vector<8xf32>
    %45 = vector.shape_cast %44 : vector<8xf32> to vector<8x1xf32>
    %c0_29 = arith.constant 0 : index
    %c0_30 = arith.constant 0 : index
    %46 = vector.load %arg18[%c0_29, %c0_30] : memref<1x1xf32, #tpu.memory_space<vmem>>, vector<1x1xf32>
    %47 = vector.broadcast %46 : vector<1x1xf32> to vector<8x1xf32>
    %48 = arith.addf %45, %47 : vector<8x1xf32>
    %cst_31 = arith.constant 0.000000e+00 : f32
    %49 = vector.broadcast %cst_31 : f32 to vector<8x1xf32>
    %50 = arith.subf %49, %48 : vector<8x1xf32>
    %51 = math.exp %50 : vector<8x1xf32>
    %cst_32 = arith.constant 1.000000e+00 : f32
    %52 = vector.broadcast %cst_32 : f32 to vector<8x1xf32>
    %53 = arith.addf %52, %51 : vector<8x1xf32>
    %cst_33 = arith.constant 1.000000e+00 : f32
    %54 = vector.broadcast %cst_33 : f32 to vector<8x1xf32>
    %55 = arith.divf %54, %53 : vector<8x1xf32>
    %c0_34 = arith.constant 0 : index
    %c0_35 = arith.constant 0 : index
    %56 = vector.load %arg19[%c0_34, %c0_35] : memref<1x32xf32, #tpu.memory_space<vmem>>, vector<1x32xf32>
    %57 = vector.broadcast %56 : vector<1x32xf32> to vector<8x32xf32>
    %58 = arith.mulf %40, %57 : vector<8x32xf32>
    %cst_36 = arith.constant dense<0.000000e+00> : vector<8xf32>
    %59 = vector.multi_reduction <add>, %58, %cst_36 [1] : vector<8x32xf32> to vector<8xf32>
    %60 = vector.shape_cast %59 : vector<8xf32> to vector<8x1xf32>
    %c0_37 = arith.constant 0 : index
    %c0_38 = arith.constant 0 : index
    %61 = vector.load %arg20[%c0_37, %c0_38] : memref<1x1xf32, #tpu.memory_space<vmem>>, vector<1x1xf32>
    %62 = vector.broadcast %61 : vector<1x1xf32> to vector<8x1xf32>
    %63 = arith.addf %60, %62 : vector<8x1xf32>
    %cst_39 = arith.constant 0.000000e+00 : f32
    %64 = vector.broadcast %cst_39 : f32 to vector<8x1xf32>
    %65 = arith.subf %64, %63 : vector<8x1xf32>
    %66 = math.exp %65 : vector<8x1xf32>
    %cst_40 = arith.constant 1.000000e+00 : f32
    %67 = vector.broadcast %cst_40 : f32 to vector<8x1xf32>
    %68 = arith.addf %67, %66 : vector<8x1xf32>
    %cst_41 = arith.constant 1.000000e+00 : f32
    %69 = vector.broadcast %cst_41 : f32 to vector<8x1xf32>
    %70 = arith.divf %69, %68 : vector<8x1xf32>
    %71 = arith.truncf %30 : vector<8x64xf32> to vector<8x64xbf16>
    %c0_42 = arith.constant 0 : index
    %c0_43 = arith.constant 0 : index
    %72 = vector.load %arg9[%c0_42, %c0_43] : memref<64x256xbf16, #tpu.memory_space<vmem>>, vector<64x256xbf16>
    %cst_44 = arith.constant dense<0.000000e+00> : vector<8x256xf32>
    %73 = tpu.matmul %71, %72, %cst_44 {dimension_numbers = #tpu.dot_dimension_numbers<[1], [0], [0], [1], [0, 0, 1, 1], [], []>} : vector<8x64xbf16>, vector<64x256xbf16>, vector<8x256xf32> -> vector<8x256xf32>
    %c0_45 = arith.constant 0 : index
    %c0_46 = arith.constant 0 : index
    %74 = vector.load %arg10[%c0_45, %c0_46] : memref<1x256xf32, #tpu.memory_space<vmem>>, vector<1x256xf32>
    %75 = vector.broadcast %74 : vector<1x256xf32> to vector<8x256xf32>
    %76 = arith.addf %73, %75 : vector<8x256xf32>
    %cst_47 = arith.constant 0.000000e+00 : f32
    %77 = vector.broadcast %cst_47 : f32 to vector<8x256xf32>
    %78 = arith.maximumf %76, %77 : vector<8x256xf32>
    %79 = arith.truncf %78 : vector<8x256xf32> to vector<8x256xbf16>
    %c0_48 = arith.constant 0 : index
    %c0_49 = arith.constant 0 : index
    %80 = vector.load %arg11[%c0_48, %c0_49] : memref<256x512xbf16, #tpu.memory_space<vmem>>, vector<256x512xbf16>
    %cst_50 = arith.constant dense<0.000000e+00> : vector<8x512xf32>
    %81 = tpu.matmul %79, %80, %cst_50 {dimension_numbers = #tpu.dot_dimension_numbers<[1], [0], [0], [1], [0, 0, 1, 1], [], []>} : vector<8x256xbf16>, vector<256x512xbf16>, vector<8x512xf32> -> vector<8x512xf32>
    %c0_51 = arith.constant 0 : index
    %c0_52 = arith.constant 0 : index
    %82 = vector.load %arg12[%c0_51, %c0_52] : memref<1x512xf32, #tpu.memory_space<vmem>>, vector<1x512xf32>
    %83 = vector.broadcast %82 : vector<1x512xf32> to vector<8x512xf32>
    %84 = arith.addf %81, %83 : vector<8x512xf32>
    %cst_53 = arith.constant 0.000000e+00 : f32
    %85 = vector.broadcast %cst_53 : f32 to vector<8x512xf32>
    %86 = arith.maximumf %84, %85 : vector<8x512xf32>
    %87 = arith.truncf %86 : vector<8x512xf32> to vector<8x512xbf16>
    %c0_54 = arith.constant 0 : index
    %c0_55 = arith.constant 0 : index
    %88 = vector.load %arg13[%c0_54, %c0_55] : memref<512x128xbf16, #tpu.memory_space<vmem>>, vector<512x128xbf16>
    %cst_56 = arith.constant dense<0.000000e+00> : vector<8x128xf32>
    %89 = tpu.matmul %87, %88, %cst_56 {dimension_numbers = #tpu.dot_dimension_numbers<[1], [0], [0], [1], [0, 0, 1, 1], [], []>} : vector<8x512xbf16>, vector<512x128xbf16>, vector<8x128xf32> -> vector<8x128xf32>
    %c0_57 = arith.constant 0 : index
    %c0_58 = arith.constant 0 : index
    %90 = vector.load %arg14[%c0_57, %c0_58] : memref<1x128xf32, #tpu.memory_space<vmem>>, vector<1x128xf32>
    %91 = vector.broadcast %90 : vector<1x128xf32> to vector<8x128xf32>
    %92 = arith.addf %89, %91 : vector<8x128xf32>
    %cst_59 = arith.constant 0.000000e+00 : f32
    %93 = vector.broadcast %cst_59 : f32 to vector<8x128xf32>
    %94 = arith.subf %93, %92 : vector<8x128xf32>
    %95 = math.exp %94 : vector<8x128xf32>
    %cst_60 = arith.constant 1.000000e+00 : f32
    %96 = vector.broadcast %cst_60 : f32 to vector<8x128xf32>
    %97 = arith.addf %96, %95 : vector<8x128xf32>
    %cst_61 = arith.constant 1.000000e+00 : f32
    %98 = vector.broadcast %cst_61 : f32 to vector<8x128xf32>
    %99 = arith.divf %98, %97 : vector<8x128xf32>
    %100 = arith.truncf %99 : vector<8x128xf32> to vector<8x128xbf16>
    %c0_62 = arith.constant 0 : index
    %c0_63 = arith.constant 0 : index
    %101 = vector.load %arg21[%c0_62, %c0_63] : memref<128x512xbf16, #tpu.memory_space<vmem>>, vector<128x512xbf16>
    %cst_64 = arith.constant dense<0.000000e+00> : vector<8x512xf32>
    %102 = tpu.matmul %100, %101, %cst_64 {dimension_numbers = #tpu.dot_dimension_numbers<[1], [0], [0], [1], [0, 0, 1, 1], [], []>} : vector<8x128xbf16>, vector<128x512xbf16>, vector<8x512xf32> -> vector<8x512xf32>
    %c0_65 = arith.constant 0 : index
    %c0_66 = arith.constant 0 : index
    %103 = vector.load %arg22[%c0_65, %c0_66] : memref<1x512xf32, #tpu.memory_space<vmem>>, vector<1x512xf32>
    %104 = vector.broadcast %103 : vector<1x512xf32> to vector<8x512xf32>
    %105 = arith.addf %102, %104 : vector<8x512xf32>
    %cst_67 = arith.constant 0.000000e+00 : f32
    %106 = vector.broadcast %cst_67 : f32 to vector<8x512xf32>
    %107 = arith.maximumf %105, %106 : vector<8x512xf32>
    %108 = arith.truncf %107 : vector<8x512xf32> to vector<8x512xbf16>
    %c0_68 = arith.constant 0 : index
    %c0_69 = arith.constant 0 : index
    %109 = vector.load %arg23[%c0_68, %c0_69] : memref<512x256xbf16, #tpu.memory_space<vmem>>, vector<512x256xbf16>
    %cst_70 = arith.constant dense<0.000000e+00> : vector<8x256xf32>
    %110 = tpu.matmul %108, %109, %cst_70 {dimension_numbers = #tpu.dot_dimension_numbers<[1], [0], [0], [1], [0, 0, 1, 1], [], []>} : vector<8x512xbf16>, vector<512x256xbf16>, vector<8x256xf32> -> vector<8x256xf32>
    %c0_71 = arith.constant 0 : index
    %c0_72 = arith.constant 0 : index
    %111 = vector.load %arg24[%c0_71, %c0_72] : memref<1x256xf32, #tpu.memory_space<vmem>>, vector<1x256xf32>
    %112 = vector.broadcast %111 : vector<1x256xf32> to vector<8x256xf32>
    %113 = arith.addf %110, %112 : vector<8x256xf32>
    %cst_73 = arith.constant 0.000000e+00 : f32
    %114 = vector.broadcast %cst_73 : f32 to vector<8x256xf32>
    %115 = arith.maximumf %113, %114 : vector<8x256xf32>
    %c0_74 = arith.constant 0 : index
    %c0_75 = arith.constant 0 : index
    %116 = vector.load %arg25[%c0_74, %c0_75] : memref<1x256xf32, #tpu.memory_space<vmem>>, vector<1x256xf32>
    %117 = vector.broadcast %116 : vector<1x256xf32> to vector<8x256xf32>
    %118 = arith.mulf %115, %117 : vector<8x256xf32>
    %cst_76 = arith.constant dense<0.000000e+00> : vector<8xf32>
    %119 = vector.multi_reduction <add>, %118, %cst_76 [1] : vector<8x256xf32> to vector<8xf32>
    %120 = vector.shape_cast %119 : vector<8xf32> to vector<8x1xf32>
    %c0_77 = arith.constant 0 : index
    %c0_78 = arith.constant 0 : index
    %121 = vector.load %arg26[%c0_77, %c0_78] : memref<1x1xf32, #tpu.memory_space<vmem>>, vector<1x1xf32>
    %122 = vector.broadcast %121 : vector<1x1xf32> to vector<8x1xf32>
    %123 = arith.addf %120, %122 : vector<8x1xf32>
    %cst_79 = arith.constant 0.000000e+00 : f32
    %124 = vector.broadcast %cst_79 : f32 to vector<8x1xf32>
    %125 = arith.subf %124, %123 : vector<8x1xf32>
    %126 = math.exp %125 : vector<8x1xf32>
    %cst_80 = arith.constant 1.000000e+00 : f32
    %127 = vector.broadcast %cst_80 : f32 to vector<8x1xf32>
    %128 = arith.addf %127, %126 : vector<8x1xf32>
    %cst_81 = arith.constant 1.000000e+00 : f32
    %129 = vector.broadcast %cst_81 : f32 to vector<8x1xf32>
    %130 = arith.divf %129, %128 : vector<8x1xf32>
    %c0_82 = arith.constant 0 : index
    %c0_83 = arith.constant 0 : index
    %131 = vector.load %arg27[%c0_82, %c0_83] : memref<8x128xf32, #tpu.memory_space<vmem>>, vector<8x128xf32>
    tpu.vector_store %arg27[%c0_82, %c0_83], %99 {strides = array<i32>} : memref<8x128xf32, #tpu.memory_space<vmem>>, vector<8x128xf32>,
    %c0_84 = arith.constant 0 : index
    %c0_85 = arith.constant 0 : index
    %132 = vector.load %arg28[%c0_84, %c0_85] : memref<8x128xf32, #tpu.memory_space<vmem>>, vector<8x128xf32>
    tpu.vector_store %arg28[%c0_84, %c0_85], %22 {strides = array<i32>} : memref<8x128xf32, #tpu.memory_space<vmem>>, vector<8x128xf32>,
    %cst_86 = arith.constant 0.000000e+00 : f32
    %133 = vector.broadcast %cst_86 : f32 to vector<8x128xf32>
    %c0_87 = arith.constant 0 : index
    %c0_88 = arith.constant 0 : index
    %134 = vector.load %arg29[%c0_87, %c0_88] : memref<8x128xf32, #tpu.memory_space<vmem>>, vector<8x128xf32>
    tpu.vector_store %arg29[%c0_87, %c0_88], %133 {strides = array<i32>} : memref<8x128xf32, #tpu.memory_space<vmem>>, vector<8x128xf32>,
    %c0_89 = arith.constant 0 : index
    %c0_90 = arith.constant 0 : index
    %135 = vector.load %arg29[%c0_89, %c0_90] : memref<8x128xf32, #tpu.memory_space<vmem>>, vector<8x64xf32>
    tpu.vector_store %arg29[%c0_89, %c0_90], %30 {strides = array<i32>} : memref<8x128xf32, #tpu.memory_space<vmem>>, vector<8x64xf32>,
    %c0_91 = arith.constant 0 : index
    %c64 = arith.constant 64 : index
    %136 = vector.load %arg29[%c0_91, %c64] : memref<8x128xf32, #tpu.memory_space<vmem>>, vector<8x1xf32>
    tpu.vector_store %arg29[%c0_91, %c64], %55 {strides = array<i32>} : memref<8x128xf32, #tpu.memory_space<vmem>>, vector<8x1xf32>,
    %c0_92 = arith.constant 0 : index
    %c65 = arith.constant 65 : index
    %137 = vector.load %arg29[%c0_92, %c65] : memref<8x128xf32, #tpu.memory_space<vmem>>, vector<8x1xf32>
    tpu.vector_store %arg29[%c0_92, %c65], %70 {strides = array<i32>} : memref<8x128xf32, #tpu.memory_space<vmem>>, vector<8x1xf32>,
    %c0_93 = arith.constant 0 : index
    %c66 = arith.constant 66 : index
    %138 = vector.load %arg29[%c0_93, %c66] : memref<8x128xf32, #tpu.memory_space<vmem>>, vector<8x1xf32>
    tpu.vector_store %arg29[%c0_93, %c66], %130 {strides = array<i32>} : memref<8x128xf32, #tpu.memory_space<vmem>>, vector<8x1xf32>,
    return
  }
  func.func @transform_0(%arg0: i32) -> (i32, i32) {
    %c0_i32 = arith.constant 0 : i32
    %c0_i32_0 = arith.constant 0 : i32
    return %arg0, %c0_i32 : i32, i32
  }
  func.func @transform_1(%arg0: i32) -> (i32, i32) {
    %c0_i32 = arith.constant 0 : i32
    %c0_i32_0 = arith.constant 0 : i32
    return %arg0, %c0_i32 : i32, i32
  }
  func.func @transform_2(%arg0: i32) -> (i32, i32) {
    %c0_i32 = arith.constant 0 : i32
    %c0_i32_0 = arith.constant 0 : i32
    %c0_i32_1 = arith.constant 0 : i32
    return %c0_i32, %c0_i32_0 : i32, i32
  }
  func.func @transform_3(%arg0: i32) -> (i32, i32) {
    %c0_i32 = arith.constant 0 : i32
    %c0_i32_0 = arith.constant 0 : i32
    %c0_i32_1 = arith.constant 0 : i32
    return %c0_i32, %c0_i32_0 : i32, i32
  }
  func.func @transform_4(%arg0: i32) -> (i32, i32) {
    %c0_i32 = arith.constant 0 : i32
    %c0_i32_0 = arith.constant 0 : i32
    %c0_i32_1 = arith.constant 0 : i32
    return %c0_i32, %c0_i32_0 : i32, i32
  }
  func.func @transform_5(%arg0: i32) -> (i32, i32) {
    %c0_i32 = arith.constant 0 : i32
    %c0_i32_0 = arith.constant 0 : i32
    %c0_i32_1 = arith.constant 0 : i32
    return %c0_i32, %c0_i32_0 : i32, i32
  }
  func.func @transform_6(%arg0: i32) -> (i32, i32) {
    %c0_i32 = arith.constant 0 : i32
    %c0_i32_0 = arith.constant 0 : i32
    %c0_i32_1 = arith.constant 0 : i32
    return %c0_i32, %c0_i32_0 : i32, i32
  }
  func.func @transform_7(%arg0: i32) -> (i32, i32) {
    %c0_i32 = arith.constant 0 : i32
    %c0_i32_0 = arith.constant 0 : i32
    %c0_i32_1 = arith.constant 0 : i32
    return %c0_i32, %c0_i32_0 : i32, i32
  }
  func.func @transform_8(%arg0: i32) -> (i32, i32) {
    %c0_i32 = arith.constant 0 : i32
    %c0_i32_0 = arith.constant 0 : i32
    %c0_i32_1 = arith.constant 0 : i32
    return %c0_i32, %c0_i32_0 : i32, i32
  }
  func.func @transform_9(%arg0: i32) -> (i32, i32) {
    %c0_i32 = arith.constant 0 : i32
    %c0_i32_0 = arith.constant 0 : i32
    %c0_i32_1 = arith.constant 0 : i32
    return %c0_i32, %c0_i32_0 : i32, i32
  }
  func.func @transform_10(%arg0: i32) -> (i32, i32) {
    %c0_i32 = arith.constant 0 : i32
    %c0_i32_0 = arith.constant 0 : i32
    %c0_i32_1 = arith.constant 0 : i32
    return %c0_i32, %c0_i32_0 : i32, i32
  }
  func.func @transform_11(%arg0: i32) -> (i32, i32) {
    %c0_i32 = arith.constant 0 : i32
    %c0_i32_0 = arith.constant 0 : i32
    %c0_i32_1 = arith.constant 0 : i32
    return %c0_i32, %c0_i32_0 : i32, i32
  }
  func.func @transform_12(%arg0: i32) -> (i32, i32) {
    %c0_i32 = arith.constant 0 : i32
    %c0_i32_0 = arith.constant 0 : i32
    %c0_i32_1 = arith.constant 0 : i32
    return %c0_i32, %c0_i32_0 : i32, i32
  }
  func.func @transform_13(%arg0: i32) -> (i32, i32) {
    %c0_i32 = arith.constant 0 : i32
    %c0_i32_0 = arith.constant 0 : i32
    %c0_i32_1 = arith.constant 0 : i32
    return %c0_i32, %c0_i32_0 : i32, i32
  }
  func.func @transform_14(%arg0: i32) -> (i32, i32) {
    %c0_i32 = arith.constant 0 : i32
    %c0_i32_0 = arith.constant 0 : i32
    %c0_i32_1 = arith.constant 0 : i32
    return %c0_i32, %c0_i32_0 : i32, i32
  }
  func.func @transform_15(%arg0: i32) -> (i32, i32) {
    %c0_i32 = arith.constant 0 : i32
    %c0_i32_0 = arith.constant 0 : i32
    %c0_i32_1 = arith.constant 0 : i32
    return %c0_i32, %c0_i32_0 : i32, i32
  }
  func.func @transform_16(%arg0: i32) -> (i32, i32) {
    %c0_i32 = arith.constant 0 : i32
    %c0_i32_0 = arith.constant 0 : i32
    %c0_i32_1 = arith.constant 0 : i32
    return %c0_i32, %c0_i32_0 : i32, i32
  }
  func.func @transform_17(%arg0: i32) -> (i32, i32) {
    %c0_i32 = arith.constant 0 : i32
    %c0_i32_0 = arith.constant 0 : i32
    %c0_i32_1 = arith.constant 0 : i32
    return %c0_i32, %c0_i32_0 : i32, i32
  }
  func.func @transform_18(%arg0: i32) -> (i32, i32) {
    %c0_i32 = arith.constant 0 : i32
    %c0_i32_0 = arith.constant 0 : i32
    %c0_i32_1 = arith.constant 0 : i32
    return %c0_i32, %c0_i32_0 : i32, i32
  }
  func.func @transform_19(%arg0: i32) -> (i32, i32) {
    %c0_i32 = arith.constant 0 : i32
    %c0_i32_0 = arith.constant 0 : i32
    %c0_i32_1 = arith.constant 0 : i32
    return %c0_i32, %c0_i32_0 : i32, i32
  }
  func.func @transform_20(%arg0: i32) -> (i32, i32) {
    %c0_i32 = arith.constant 0 : i32
    %c0_i32_0 = arith.constant 0 : i32
    %c0_i32_1 = arith.constant 0 : i32
    return %c0_i32, %c0_i32_0 : i32, i32
  }
  func.func @transform_21(%arg0: i32) -> (i32, i32) {
    %c0_i32 = arith.constant 0 : i32
    %c0_i32_0 = arith.constant 0 : i32
    %c0_i32_1 = arith.constant 0 : i32
    return %c0_i32, %c0_i32_0 : i32, i32
  }
  func.func @transform_22(%arg0: i32) -> (i32, i32) {
    %c0_i32 = arith.constant 0 : i32
    %c0_i32_0 = arith.constant 0 : i32
    %c0_i32_1 = arith.constant 0 : i32
    return %c0_i32, %c0_i32_0 : i32, i32
  }
  func.func @transform_23(%arg0: i32) -> (i32, i32) {
    %c0_i32 = arith.constant 0 : i32
    %c0_i32_0 = arith.constant 0 : i32
    %c0_i32_1 = arith.constant 0 : i32
    return %c0_i32, %c0_i32_0 : i32, i32
  }
  func.func @transform_24(%arg0: i32) -> (i32, i32) {
    %c0_i32 = arith.constant 0 : i32
    %c0_i32_0 = arith.constant 0 : i32
    %c0_i32_1 = arith.constant 0 : i32
    return %c0_i32, %c0_i32_0 : i32, i32
  }
  func.func @transform_25(%arg0: i32) -> (i32, i32) {
    %c0_i32 = arith.constant 0 : i32
    %c0_i32_0 = arith.constant 0 : i32
    %c0_i32_1 = arith.constant 0 : i32
    return %c0_i32, %c0_i32_0 : i32, i32
  }
  func.func @transform_26(%arg0: i32) -> (i32, i32) {
    %c0_i32 = arith.constant 0 : i32
    %c0_i32_0 = arith.constant 0 : i32
    return %arg0, %c0_i32 : i32, i32
  }
  func.func @transform_27(%arg0: i32) -> (i32, i32) {
    %c0_i32 = arith.constant 0 : i32
    %c0_i32_0 = arith.constant 0 : i32
    return %arg0, %c0_i32 : i32, i32
  }
  func.func @transform_28(%arg0: i32) -> (i32, i32) {
    %c0_i32 = arith.constant 0 : i32
    %c0_i32_0 = arith.constant 0 : i32
    return %arg0, %c0_i32 : i32, i32
  }
}

</mosaic_0001>

<llo_original>
// kernel: vae_forward.1
$region0: #{vae_forward.1}
  #allocation0 [shape = 'u32[]', space=smem, size = 0x4, offset = 0x4, fixed_abs, tag = 'smem constant byte address 0x4 - core index']
  #allocation1 [shape = 'u32[144,128]{1,0:T(1,128)}', space=vmem, size = 0x12000, scoped, tag = 'internal scratch']
  #allocation2 [shape = 'f32[1,1]{1,0:T(1,128)S(1)}', space=vmem, size = 0x200, scoped, tag = 'scoped memory for vae_forward.1']
  #allocation3 [shape = 'f32[1,1]{1,0:T(1,128)S(1)}', space=vmem, size = 0x200, scoped, tag = 'scoped memory for vae_forward.1']
  #allocation4 [shape = 'f32[1,1]{1,0:T(1,128)S(1)}', space=vmem, size = 0x200, scoped, tag = 'scoped memory for vae_forward.1']
  %s0 = inlined_call_operand.vmem [shape: f32[8,128], index: 0, kind: input, shape index: {}]
  %s1 = inlined_call_operand.vmem [shape: f32[8,64], index: 1, kind: input, shape index: {}]
  %s2 = inlined_call_operand.hbm [shape: bf16[128,512], index: 2, kind: input, shape index: {}]
  %s3 = inlined_call_operand.vmem [shape: f32[1,512], index: 3, kind: input, shape index: {}]
  %s4 = inlined_call_operand.hbm [shape: bf16[512,256], index: 4, kind: input, shape index: {}]
  %s5 = inlined_call_operand.vmem [shape: f32[1,256], index: 5, kind: input, shape index: {}]
  %s6 = inlined_call_operand.hbm [shape: bf16[256,128], index: 6, kind: input, shape index: {}]
  %s7 = inlined_call_operand.vmem [shape: f32[1,128], index: 7, kind: input, shape index: {}]
  %s8 = inlined_call_operand.hbm [shape: bf16[64,256], index: 8, kind: input, shape index: {}]
  %s9 = inlined_call_operand.vmem [shape: f32[1,256], index: 9, kind: input, shape index: {}]
  %s10 = inlined_call_operand.hbm [shape: bf16[256,512], index: 10, kind: input, shape index: {}]
  %s11 = inlined_call_operand.vmem [shape: f32[1,512], index: 11, kind: input, shape index: {}]
  %s12 = inlined_call_operand.hbm [shape: bf16[512,128], index: 12, kind: input, shape index: {}]
  %s13 = inlined_call_operand.hbm [shape: f32[1,128], index: 13, kind: input, shape index: {}]
  %s14 = inlined_call_operand.hbm [shape: bf16[64,64], index: 14, kind: input, shape index: {}]
  %s15 = inlined_call_operand.hbm [shape: f32[1,64], index: 15, kind: input, shape index: {}]
  %s16 = inlined_call_operand.hbm [shape: f32[1,32], index: 16, kind: input, shape index: {}]
  %s17 = inlined_call_operand.<no memory space> [shape: f32[1,1], index: 17, kind: input, shape index: {}]
  %s18 = inlined_call_operand.hbm [shape: f32[1,32], index: 18, kind: input, shape index: {}]
  %s19 = inlined_call_operand.<no memory space> [shape: f32[1,1], index: 19, kind: input, shape index: {}]
  %s20 = inlined_call_operand.hbm [shape: bf16[128,512], index: 20, kind: input, shape index: {}]
  %s21 = inlined_call_operand.hbm [shape: f32[1,512], index: 21, kind: input, shape index: {}]
  %s22 = inlined_call_operand.hbm [shape: bf16[512,256], index: 22, kind: input, shape index: {}]
  %s23 = inlined_call_operand.hbm [shape: f32[1,256], index: 23, kind: input, shape index: {}]
  %s24 = inlined_call_operand.hbm [shape: f32[1,256], index: 24, kind: input, shape index: {}]
  %s25 = inlined_call_operand.<no memory space> [shape: f32[1,1], index: 25, kind: input, shape index: {}]
  %s26 = inlined_call_operand.hbm [shape: f32[8,128], index: 26, kind: output, shape index: {0}]
  %s27 = inlined_call_operand.vmem [shape: f32[8,128], index: 27, kind: output, shape index: {1}]
  %s28 = inlined_call_operand.vmem [shape: f32[8,128], index: 28, kind: output, shape index: {2}]
  %29 = xla_tuple %s26, %s27, %s28
  %s30 = sld [smem:[#allocation0]]
  $region194: #{vae_forward.1} parent=0
    _
  %s32 = ssub.s32 1, %s30
  %s33 = scalar_select 0, %s32, %s30
  %v34 = vstv %s17
  %35 = vst [vmem:[#allocation2] sm:$0x1] %v34
  %v36 = vstv %s19
  %37 = vst [vmem:[#allocation3] sm:$0x1] %v36
  %v38 = vstv %s25
  %39 = vst [vmem:[#allocation4] sm:$0x1] %v38
  $region1: #{vae_forward.1} parent=0
    #allocation5 [shape = 'u8[131072]{0}', space=vmem, size = 0x20000, scoped, tag = 'input window, operand 2, single buffered']
    #allocation6 [shape = 's32[1]{0}', space=sflag, size = 0x4, scoped, tag = 'scoped memory for vae_forward.1']
    #allocation7 [shape = 's32[1]{0}', space=sflag, size = 0x4, scoped, tag = 'scoped memory for vae_forward.1']
    #allocation8 [shape = 'u8[262144]{0}', space=vmem, size = 0x40000, scoped, tag = 'input window, operand 4, single buffered']
    #allocation9 [shape = 's32[1]{0}', space=sflag, size = 0x4, scoped, tag = 'scoped memory for vae_forward.1']
    #allocation10 [shape = 'u8[65536]{0}', space=vmem, size = 0x10000, scoped, tag = 'input window, operand 6, single buffered']
    #allocation11 [shape = 'u8[32768]{0}', space=vmem, size = 0x8000, scoped, tag = 'input window, operand 8, single buffered']
    #allocation12 [shape = 's32[1]{0}', space=sflag, size = 0x4, scoped, tag = 'scoped memory for vae_forward.1']
    #allocation13 [shape = 'u8[262144]{0}', space=vmem, size = 0x40000, scoped, tag = 'input window, operand 10, single buffered']
    #allocation14 [shape = 'u8[131072]{0}', space=vmem, size = 0x20000, scoped, tag = 'input window, operand 12, single buffered']
    #allocation15 [shape = 's32[1]{0}', space=sflag, size = 0x4, scoped, tag = 'scoped memory for vae_forward.1']
    #allocation16 [shape = 'u8[512]{0}', space=vmem, size = 0x400, scoped, tag = 'input window, operand 13, single buffered']
    #allocation17 [shape = 'u8[16384]{0}', space=vmem, size = 0x4000, scoped, tag = 'input window, operand 14, single buffered']
    #allocation18 [shape = 's32[1]{0}', space=sflag, size = 0x4, scoped, tag = 'scoped memory for vae_forward.1']
    #allocation19 [shape = 'u8[512]{0}', space=vmem, size = 0x400, scoped, tag = 'input window, operand 15, single buffered']
    #allocation20 [shape = 'u8[512]{0}', space=vmem, size = 0x400, scoped, tag = 'input window, operand 16, single buffered']
    #allocation21 [shape = 's32[1]{0}', space=sflag, size = 0x4, scoped, tag = 'scoped memory for vae_forward.1']
    #allocation22 [shape = 'u8[512]{0}', space=vmem, size = 0x400, scoped, tag = 'input window, operand 18, single buffered']
    #allocation23 [shape = 'u8[131072]{0}', space=vmem, size = 0x20000, scoped, tag = 'input window, operand 20, single buffered']
    #allocation24 [shape = 's32[1]{0}', space=sflag, size = 0x4, scoped, tag = 'scoped memory for vae_forward.1']
    #allocation25 [shape = 'u8[2048]{0}', space=vmem, size = 0x800, scoped, tag = 'input window, operand 21, single buffered']
    #allocation26 [shape = 'u8[262144]{0}', space=vmem, size = 0x40000, scoped, tag = 'input window, operand 22, single buffered']
    #allocation27 [shape = 's32[1]{0}', space=sflag, size = 0x4, scoped, tag = 'scoped memory for vae_forward.1']
    #allocation28 [shape = 'u8[1024]{0}', space=vmem, size = 0x400, scoped, tag = 'input window, operand 23, single buffered']
    #allocation29 [shape = 'u8[1024]{0}', space=vmem, size = 0x400, scoped, tag = 'input window, operand 24, single buffered']
    #allocation30 [shape = 's32[1]{0}', space=sflag, size = 0x4, scoped, tag = 'scoped memory for vae_forward.1']
    #allocation31 [shape = 'u8[4096]{0}', space=vmem, size = 0x1000, scoped, tag = 'output window, operand 0, single buffered']
    %40 = vsyncpa [#allocation6], 0
    %41 = vsyncpa [#allocation9], 0
    %42 = vsyncpa [#allocation12], 0
    %43 = vsyncpa [#allocation15], 0
    %44 = vsyncpa [#allocation18], 0
    %45 = vsyncpa [#allocation21], 0
    %46 = vsyncpa [#allocation24], 0
    %47 = vsyncpa [#allocation27], 0
    %48 = vsyncpa [#allocation30], 0
    %49 = vsyncpa [#allocation7], 0
    // Predicated region
    $region2: #{vae_forward.1} parent=1 // pred_check
      _
    $region3: #{vae_forward.1} parent=1 // pred_check_branch
      %51 = sbr.rel (0) target = $region5
    $region4: #{vae_forward.1} parent=1 // pred_region
      _
    $region5: #{vae_forward.1} parent=1 // pred_fallthru
      _
    // Predicated region
    $region6: #{vae_forward.1} parent=1 // pred_check
      _
    $region7: #{vae_forward.1} parent=1 // pred_check_branch
      %53 = sbr.rel (0) target = $region9
    $region8: #{vae_forward.1} parent=1 // pred_region
      _
    $region9: #{vae_forward.1} parent=1 // pred_fallthru
      _
    // Predicated region
    $region10: #{vae_forward.1} parent=1 // pred_check
      _
    $region11: #{vae_forward.1} parent=1 // pred_check_branch
      %55 = sbr.rel (0) target = $region13
    $region12: #{vae_forward.1} parent=1 // pred_region
      %s57 = ssub.s32 4096, 4096
      %58 = vsyncadd [#allocation6], %s57
      %s59 = sshll.u32 [#allocation5], 4
      %s60 = int_to_ptr.vmem [resolvable:$true] %s59
      %65 = dma.hbm_to_vmem [thread:$0]  %s2, 4096, %s60, [#allocation6], 256, 256, 16
    $region13: #{vae_forward.1} parent=1 // pred_fallthru
      _
    // Predicated region
    $region14: #{vae_forward.1} parent=1 // pred_check
      _
    $region15: #{vae_forward.1} parent=1 // pred_check_branch
      %67 = sbr.rel (0) target = $region17
    $region16: #{vae_forward.1} parent=1 // pred_region
      _
    $region17: #{vae_forward.1} parent=1 // pred_fallthru
      _
    // Predicated region
    $region18: #{vae_forward.1} parent=1 // pred_check
      _
    $region19: #{vae_forward.1} parent=1 // pred_check_branch
      %69 = sbr.rel (0) target = $region21
    $region20: #{vae_forward.1} parent=1 // pred_region
      %s71 = ssub.s32 8192, 8192
      %72 = vsyncadd [#allocation9], %s71
      %s73 = sshll.u32 [#allocation8], 4
      %s74 = int_to_ptr.vmem [resolvable:$true] %s73
      %79 = dma.hbm_to_vmem [thread:$0]  %s4, 8192, %s74, [#allocation9], 128, 128, 8
    $region21: #{vae_forward.1} parent=1 // pred_fallthru
      _
    // Predicated region
    $region22: #{vae_forward.1} parent=1 // pred_check
      _
    $region23: #{vae_forward.1} parent=1 // pred_check_branch
      %81 = sbr.rel (0) target = $region25
    $region24: #{vae_forward.1} parent=1 // pred_region
      _
    $region25: #{vae_forward.1} parent=1 // pred_fallthru
      _
    // Predicated region
    $region26: #{vae_forward.1} parent=1 // pred_check
      _
    $region27: #{vae_forward.1} parent=1 // pred_check_branch
      %83 = sbr.rel (0) target = $region29
    $region28: #{vae_forward.1} parent=1 // pred_region
      %s85 = ssub.s32 2048, 2048
      %86 = vsyncadd [#allocation9], %s85
      %s87 = sshll.u32 [#allocation10], 4
      %s88 = int_to_ptr.vmem [resolvable:$true] %s87
      %93 = dma.hbm_to_vmem [thread:$0]  %s6, 2048, %s88, [#allocation9], 64, 64, 4
    $region29: #{vae_forward.1} parent=1 // pred_fallthru
      _
    // Predicated region
    $region30: #{vae_forward.1} parent=1 // pred_check
      _
    $region31: #{vae_forward.1} parent=1 // pred_check_branch
      %95 = sbr.rel (0) target = $region33
    $region32: #{vae_forward.1} parent=1 // pred_region
      _
    $region33: #{vae_forward.1} parent=1 // pred_fallthru
      _
    // Predicated region
    $region34: #{vae_forward.1} parent=1 // pred_check
      _
    $region35: #{vae_forward.1} parent=1 // pred_check_branch
      %97 = sbr.rel (0) target = $region37
    $region36: #{vae_forward.1} parent=1 // pred_region
      %s99 = ssub.s32 1024, 1024
      %100 = vsyncadd [#allocation12], %s99
      %s101 = sshll.u32 [#allocation11], 4
      %s102 = int_to_ptr.vmem [resolvable:$true] %s101
      %107 = dma.hbm_to_vmem [thread:$0]  %s8, 1024, %s102, [#allocation12], 128, 128, 8
    $region37: #{vae_forward.1} parent=1 // pred_fallthru
      _
    // Predicated region
    $region38: #{vae_forward.1} parent=1 // pred_check
      _
    $region39: #{vae_forward.1} parent=1 // pred_check_branch
      %109 = sbr.rel (0) target = $region41
    $region40: #{vae_forward.1} parent=1 // pred_region
      _
    $region41: #{vae_forward.1} parent=1 // pred_fallthru
      _
    // Predicated region
    $region42: #{vae_forward.1} parent=1 // pred_check
      _
    $region43: #{vae_forward.1} parent=1 // pred_check_branch
      %111 = sbr.rel (0) target = $region45
    $region44: #{vae_forward.1} parent=1 // pred_region
      %s113 = ssub.s32 8192, 8192
      %114 = vsyncadd [#allocation12], %s113
      %s115 = sshll.u32 [#allocation13], 4
      %s116 = int_to_ptr.vmem [resolvable:$true] %s115
      %121 = dma.hbm_to_vmem [thread:$0]  %s10, 8192, %s116, [#allocation12], 256, 256, 16
    $region45: #{vae_forward.1} parent=1 // pred_fallthru
      _
    // Predicated region
    $region46: #{vae_forward.1} parent=1 // pred_check
      _
    $region47: #{vae_forward.1} parent=1 // pred_check_branch
      %123 = sbr.rel (0) target = $region49
    $region48: #{vae_forward.1} parent=1 // pred_region
      _
    $region49: #{vae_forward.1} parent=1 // pred_fallthru
      _
    // Predicated region
    $region50: #{vae_forward.1} parent=1 // pred_check
      _
    $region51: #{vae_forward.1} parent=1 // pred_check_branch
      %125 = sbr.rel (0) target = $region53
    $region52: #{vae_forward.1} parent=1 // pred_region
      %s127 = ssub.s32 4096, 4096
      %128 = vsyncadd [#allocation15], %s127
      %s129 = sshll.u32 [#allocation14], 4
      %s130 = int_to_ptr.vmem [resolvable:$true] %s129
      %135 = dma.hbm_to_vmem [thread:$0]  %s12, 4096, %s130, [#allocation15], 64, 64, 4
    $region53: #{vae_forward.1} parent=1 // pred_fallthru
      _
    // Predicated region
    $region54: #{vae_forward.1} parent=1 // pred_check
      _
    $region55: #{vae_forward.1} parent=1 // pred_check_branch
      %137 = sbr.rel (0) target = $region57
    $region56: #{vae_forward.1} parent=1 // pred_region
      %s139 = ssub.s32 16, 16
      %140 = vsyncadd [#allocation15], %s139
      %s142 = sshll.u32 [#allocation16], 4
      %s143 = int_to_ptr.vmem [resolvable:$true] %s142
      %145 = dma.hbm_to_vmem [thread:$0]  %s13, 16, %s143, [#allocation15]
    $region57: #{vae_forward.1} parent=1 // pred_fallthru
      _
    // Predicated region
    $region58: #{vae_forward.1} parent=1 // pred_check
      _
    $region59: #{vae_forward.1} parent=1 // pred_check_branch
      %147 = sbr.rel (0) target = $region61
    $region60: #{vae_forward.1} parent=1 // pred_region
      %s149 = ssub.s32 512, 512
      %150 = vsyncadd [#allocation18], %s149
      %s151 = sshll.u32 [#allocation17], 4
      %s152 = int_to_ptr.vmem [resolvable:$true] %s151
      %157 = dma.hbm_to_vmem [thread:$0]  %s14, 512, %s152, [#allocation18], 64, 64, 4
    $region61: #{vae_forward.1} parent=1 // pred_fallthru
      _
    // Predicated region
    $region62: #{vae_forward.1} parent=1 // pred_check
      _
    $region63: #{vae_forward.1} parent=1 // pred_check_branch
      %159 = sbr.rel (0) target = $region65
    $region64: #{vae_forward.1} parent=1 // pred_region
      %s161 = ssub.s32 16, 16
      %162 = vsyncadd [#allocation18], %s161
      %s164 = sshll.u32 [#allocation19], 4
      %s165 = int_to_ptr.vmem [resolvable:$true] %s164
      %167 = dma.hbm_to_vmem [thread:$0]  %s15, 16, %s165, [#allocation18]
    $region65: #{vae_forward.1} parent=1 // pred_fallthru
      _
    // Predicated region
    $region66: #{vae_forward.1} parent=1 // pred_check
      _
    $region67: #{vae_forward.1} parent=1 // pred_check_branch
      %169 = sbr.rel (0) target = $region69
    $region68: #{vae_forward.1} parent=1 // pred_region
      %s171 = ssub.s32 16, 16
      %172 = vsyncadd [#allocation21], %s171
      %s174 = sshll.u32 [#allocation20], 4
      %s175 = int_to_ptr.vmem [resolvable:$true] %s174
      %177 = dma.hbm_to_vmem [thread:$0]  %s16, 16, %s175, [#allocation21]
    $region69: #{vae_forward.1} parent=1 // pred_fallthru
      _
    // Predicated region
    $region70: #{vae_forward.1} parent=1 // pred_check
      _
    $region71: #{vae_forward.1} parent=1 // pred_check_branch
      %179 = sbr.rel (0) target = $region73
    $region72: #{vae_forward.1} parent=1 // pred_region
      _
    $region73: #{vae_forward.1} parent=1 // pred_fallthru
      _
    // Predicated region
    $region74: #{vae_forward.1} parent=1 // pred_check
      _
    $region75: #{vae_forward.1} parent=1 // pred_check_branch
      %181 = sbr.rel (0) target = $region77
    $region76: #{vae_forward.1} parent=1 // pred_region
      %s183 = ssub.s32 16, 16
      %184 = vsyncadd [#allocation21], %s183
      %s186 = sshll.u32 [#allocation22], 4
      %s187 = int_to_ptr.vmem [resolvable:$true] %s186
      %189 = dma.hbm_to_vmem [thread:$0]  %s18, 16, %s187, [#allocation21]
    $region77: #{vae_forward.1} parent=1 // pred_fallthru
      _
    // Predicated region
    $region78: #{vae_forward.1} parent=1 // pred_check
      _
    $region79: #{vae_forward.1} parent=1 // pred_check_branch
      %191 = sbr.rel (0) target = $region81
    $region80: #{vae_forward.1} parent=1 // pred_region
      _
    $region81: #{vae_forward.1} parent=1 // pred_fallthru
      _
    // Predicated region
    $region82: #{vae_forward.1} parent=1 // pred_check
      _
    $region83: #{vae_forward.1} parent=1 // pred_check_branch
      %193 = sbr.rel (0) target = $region85
    $region84: #{vae_forward.1} parent=1 // pred_region
      %s195 = ssub.s32 4096, 4096
      %196 = vsyncadd [#allocation24], %s195
      %s197 = sshll.u32 [#allocation23], 4
      %s198 = int_to_ptr.vmem [resolvable:$true] %s197
      %203 = dma.hbm_to_vmem [thread:$0]  %s20, 4096, %s198, [#allocation24], 256, 256, 16
    $region85: #{vae_forward.1} parent=1 // pred_fallthru
      _
    // Predicated region
    $region86: #{vae_forward.1} parent=1 // pred_check
      _
    $region87: #{vae_forward.1} parent=1 // pred_check_branch
      %205 = sbr.rel (0) target = $region89
    $region88: #{vae_forward.1} parent=1 // pred_region
      %s207 = ssub.s32 64, 64
      %208 = vsyncadd [#allocation24], %s207
      %s210 = sshll.u32 [#allocation25], 4
      %s211 = int_to_ptr.vmem [resolvable:$true] %s210
      %213 = dma.hbm_to_vmem [thread:$0]  %s21, 64, %s211, [#allocation24]
    $region89: #{vae_forward.1} parent=1 // pred_fallthru
      _
    // Predicated region
    $region90: #{vae_forward.1} parent=1 // pred_check
      _
    $region91: #{vae_forward.1} parent=1 // pred_check_branch
      %215 = sbr.rel (0) target = $region93
    $region92: #{vae_forward.1} parent=1 // pred_region
      %s217 = ssub.s32 8192, 8192
      %218 = vsyncadd [#allocation27], %s217
      %s219 = sshll.u32 [#allocation26], 4
      %s220 = int_to_ptr.vmem [resolvable:$true] %s219
      %225 = dma.hbm_to_vmem [thread:$0]  %s22, 8192, %s220, [#allocation27], 128, 128, 8
    $region93: #{vae_forward.1} parent=1 // pred_fallthru
      _
    // Predicated region
    $region94: #{vae_forward.1} parent=1 // pred_check
      _
    $region95: #{vae_forward.1} parent=1 // pred_check_branch
      %227 = sbr.rel (0) target = $region97
    $region96: #{vae_forward.1} parent=1 // pred_region
      %s229 = ssub.s32 32, 32
      %230 = vsyncadd [#allocation27], %s229
      %s232 = sshll.u32 [#allocation28], 4
      %s233 = int_to_ptr.vmem [resolvable:$true] %s232
      %235 = dma.hbm_to_vmem [thread:$0]  %s23, 32, %s233, [#allocation27]
    $region97: #{vae_forward.1} parent=1 // pred_fallthru
      _
    // Predicated region
    $region98: #{vae_forward.1} parent=1 // pred_check
      _
    $region99: #{vae_forward.1} parent=1 // pred_check_branch
      %237 = sbr.rel (0) target = $region101
    $region100: #{vae_forward.1} parent=1 // pred_region
      %s239 = ssub.s32 32, 32
      %240 = vsyncadd [#allocation30], %s239
      %s242 = sshll.u32 [#allocation29], 4
      %s243 = int_to_ptr.vmem [resolvable:$true] %s242
      %245 = dma.hbm_to_vmem [thread:$0]  %s24, 32, %s243, [#allocation30]
    $region101: #{vae_forward.1} parent=1 // pred_fallthru
      _
    // Predicated region
    $region102: #{vae_forward.1} parent=1 // pred_check
      _
    $region103: #{vae_forward.1} parent=1 // pred_check_branch
      %247 = sbr.rel (0) target = $region105
    $region104: #{vae_forward.1} parent=1 // pred_region
      _
    $region105: #{vae_forward.1} parent=1 // pred_fallthru
      _
    // Predicated region
    $region106: #{vae_forward.1} parent=1 // pred_check
      _
    $region107: #{vae_forward.1} parent=1 // pred_check_branch
      %249 = sbr.rel (0) target = $region109
    $region108: #{vae_forward.1} parent=1 // pred_region
      %250 = dma.done [#allocation6], 4096
    $region109: #{vae_forward.1} parent=1 // pred_fallthru
      _
    // Predicated region
    $region110: #{vae_forward.1} parent=1 // pred_check
      _
    $region111: #{vae_forward.1} parent=1 // pred_check_branch
      %252 = sbr.rel (0) target = $region113
    $region112: #{vae_forward.1} parent=1 // pred_region
      %253 = dma.done [#allocation9], 8192
    $region113: #{vae_forward.1} parent=1 // pred_fallthru
      _
    // Predicated region
    $region114: #{vae_forward.1} parent=1 // pred_check
      _
    $region115: #{vae_forward.1} parent=1 // pred_check_branch
      %255 = sbr.rel (0) target = $region117
    $region116: #{vae_forward.1} parent=1 // pred_region
      %256 = dma.done [#allocation9], 2048
    $region117: #{vae_forward.1} parent=1 // pred_fallthru
      _
    // Predicated region
    $region118: #{vae_forward.1} parent=1 // pred_check
      _
    $region119: #{vae_forward.1} parent=1 // pred_check_branch
      %258 = sbr.rel (0) target = $region121
    $region120: #{vae_forward.1} parent=1 // pred_region
      %259 = dma.done [#allocation12], 1024
    $region121: #{vae_forward.1} parent=1 // pred_fallthru
      _
    // Predicated region
    $region122: #{vae_forward.1} parent=1 // pred_check
      _
    $region123: #{vae_forward.1} parent=1 // pred_check_branch
      %261 = sbr.rel (0) target = $region125
    $region124: #{vae_forward.1} parent=1 // pred_region
      %262 = dma.done [#allocation12], 8192
    $region125: #{vae_forward.1} parent=1 // pred_fallthru
      _
    // Predicated region
    $region126: #{vae_forward.1} parent=1 // pred_check
      _
    $region127: #{vae_forward.1} parent=1 // pred_check_branch
      %264 = sbr.rel (0) target = $region129
    $region128: #{vae_forward.1} parent=1 // pred_region
      %265 = dma.done [#allocation15], 4096
    $region129: #{vae_forward.1} parent=1 // pred_fallthru
      _
    // Predicated region
    $region130: #{vae_forward.1} parent=1 // pred_check
      _
    $region131: #{vae_forward.1} parent=1 // pred_check_branch
      %267 = sbr.rel (0) target = $region133
    $region132: #{vae_forward.1} parent=1 // pred_region
      %268 = dma.done [#allocation15], 16
    $region133: #{vae_forward.1} parent=1 // pred_fallthru
      _
    // Predicated region
    $region134: #{vae_forward.1} parent=1 // pred_check
      _
    $region135: #{vae_forward.1} parent=1 // pred_check_branch
      %270 = sbr.rel (0) target = $region137
    $region136: #{vae_forward.1} parent=1 // pred_region
      %271 = dma.done [#allocation18], 512
    $region137: #{vae_forward.1} parent=1 // pred_fallthru
      _
    // Predicated region
    $region138: #{vae_forward.1} parent=1 // pred_check
      _
    $region139: #{vae_forward.1} parent=1 // pred_check_branch
      %273 = sbr.rel (0) target = $region141
    $region140: #{vae_forward.1} parent=1 // pred_region
      %274 = dma.done [#allocation18], 16
    $region141: #{vae_forward.1} parent=1 // pred_fallthru
      _
    // Predicated region
    $region142: #{vae_forward.1} parent=1 // pred_check
      _
    $region143: #{vae_forward.1} parent=1 // pred_check_branch
      %276 = sbr.rel (0) target = $region145
    $region144: #{vae_forward.1} parent=1 // pred_region
      %277 = dma.done [#allocation21], 16
    $region145: #{vae_forward.1} parent=1 // pred_fallthru
      _
    // Predicated region
    $region146: #{vae_forward.1} parent=1 // pred_check
      _
    $region147: #{vae_forward.1} parent=1 // pred_check_branch
      %279 = sbr.rel (0) target = $region149
    $region148: #{vae_forward.1} parent=1 // pred_region
      %280 = dma.done [#allocation21], 16
    $region149: #{vae_forward.1} parent=1 // pred_fallthru
      _
    // Predicated region
    $region150: #{vae_forward.1} parent=1 // pred_check
      _
    $region151: #{vae_forward.1} parent=1 // pred_check_branch
      %282 = sbr.rel (0) target = $region153
    $region152: #{vae_forward.1} parent=1 // pred_region
      %283 = dma.done [#allocation24], 4096
    $region153: #{vae_forward.1} parent=1 // pred_fallthru
      _
    // Predicated region
    $region154: #{vae_forward.1} parent=1 // pred_check
      _
    $region155: #{vae_forward.1} parent=1 // pred_check_branch
      %285 = sbr.rel (0) target = $region157
    $region156: #{vae_forward.1} parent=1 // pred_region
      %286 = dma.done [#allocation24], 64
    $region157: #{vae_forward.1} parent=1 // pred_fallthru
      _
    // Predicated region
    $region158: #{vae_forward.1} parent=1 // pred_check
      _
    $region159: #{vae_forward.1} parent=1 // pred_check_branch
      %288 = sbr.rel (0) target = $region161
    $region160: #{vae_forward.1} parent=1 // pred_region
      %289 = dma.done [#allocation27], 8192
    $region161: #{vae_forward.1} parent=1 // pred_fallthru
      _
    // Predicated region
    $region162: #{vae_forward.1} parent=1 // pred_check
      _
    $region163: #{vae_forward.1} parent=1 // pred_check_branch
      %291 = sbr.rel (0) target = $region165
    $region164: #{vae_forward.1} parent=1 // pred_region
      %292 = dma.done [#allocation27], 32
    $region165: #{vae_forward.1} parent=1 // pred_fallthru
      _
    // Predicated region
    $region166: #{vae_forward.1} parent=1 // pred_check
      _
    $region167: #{vae_forward.1} parent=1 // pred_check_branch
      %294 = sbr.rel (0) target = $region169
    $region168: #{vae_forward.1} parent=1 // pred_region
      %295 = dma.done [#allocation30], 32
    $region169: #{vae_forward.1} parent=1 // pred_fallthru
      _
    %v297 = vld [vmem:[%s0] sm:$0xff]
    %v298 = vpack.c.bf16 %v297, %v297
    %v299 = vld [vmem:[#allocation5] sm:$0xff]
    %v300 = vld [vmem:[#allocation5 + $0x8] sm:$0xff]
    %v301 = vld [vmem:[#allocation5 + $0x10] sm:$0xff]
    %v302 = vld [vmem:[#allocation5 + $0x18] sm:$0xff]
    %v303 = vld [vmem:[#allocation5 + $0x20] sm:$0xff]
    %v304 = vld [vmem:[#allocation5 + $0x28] sm:$0xff]
    %v305 = vld [vmem:[#allocation5 + $0x30] sm:$0xff]
    %v306 = vld [vmem:[#allocation5 + $0x38] sm:$0xff]
    %v307 = vld [vmem:[#allocation5 + $0x40] sm:$0xff]
    %v308 = vld [vmem:[#allocation5 + $0x48] sm:$0xff]
    %v309 = vld [vmem:[#allocation5 + $0x50] sm:$0xff]
    %v310 = vld [vmem:[#allocation5 + $0x58] sm:$0xff]
    %v311 = vld [vmem:[#allocation5 + $0x60] sm:$0xff]
    %v312 = vld [vmem:[#allocation5 + $0x68] sm:$0xff]
    %v313 = vld [vmem:[#allocation5 + $0x70] sm:$0xff]
    %v314 = vld [vmem:[#allocation5 + $0x78] sm:$0xff]
    %v315 = vld [vmem:[#allocation5 + $0x80] sm:$0xff]
    %v316 = vld [vmem:[#allocation5 + $0x88] sm:$0xff]
    %v317 = vld [vmem:[#allocation5 + $0x90] sm:$0xff]
    %v318 = vld [vmem:[#allocation5 + $0x98] sm:$0xff]
    %v319 = vld [vmem:[#allocation5 + $0xa0] sm:$0xff]
    %v320 = vld [vmem:[#allocation5 + $0xa8] sm:$0xff]
    %v321 = vld [vmem:[#allocation5 + $0xb0] sm:$0xff]
    %v322 = vld [vmem:[#allocation5 + $0xb8] sm:$0xff]
    %v323 = vld [vmem:[#allocation5 + $0xc0] sm:$0xff]
    %v324 = vld [vmem:[#allocation5 + $0xc8] sm:$0xff]
    %v325 = vld [vmem:[#allocation5 + $0xd0] sm:$0xff]
    %v326 = vld [vmem:[#allocation5 + $0xd8] sm:$0xff]
    %v327 = vld [vmem:[#allocation5 + $0xe0] sm:$0xff]
    %v328 = vld [vmem:[#allocation5 + $0xe8] sm:$0xff]
    %v329 = vld [vmem:[#allocation5 + $0xf0] sm:$0xff]
    %v330 = vld [vmem:[#allocation5 + $0xf8] sm:$0xff]
    %v331 = vld [vmem:[%s3] sm:$0xf]
    %v333 = vlaneseq
    %v334 = vshrl.u32 %v333, 7
    %v335 = vsub.s32 0, %v334
    %v336 = vrot.slane %v331, %v335
    %v337 = vlaneseq
    %v338 = vshrl.u32 %v337, 7
    %v339 = vsub.s32 1, %v338
    %v340 = vrot.slane %v331, %v339
    %v341 = vlaneseq
    %v342 = vshrl.u32 %v341, 7
    %v343 = vsub.s32 2, %v342
    %v344 = vrot.slane %v331, %v343
    %v345 = vlaneseq
    %v346 = vshrl.u32 %v345, 7
    %v347 = vsub.s32 3, %v346
    %v348 = vrot.slane %v331, %v347
    %v385 = vunpack.c.l.b16 %v299
    %v386 = vunpack.c.h.b16 %v299
    %v387 = vunpack.c.l.b16 %v300
    %v388 = vunpack.c.h.b16 %v300
    %v389 = vunpack.c.l.b16 %v301
    %v390 = vunpack.c.h.b16 %v301
    %v391 = vunpack.c.l.b16 %v302
    %v392 = vunpack.c.h.b16 %v302
    %v393 = vunpack.c.l.b16 %v303
    %v394 = vunpack.c.h.b16 %v303
    %v395 = vunpack.c.l.b16 %v304
    %v396 = vunpack.c.h.b16 %v304
    %v397 = vunpack.c.l.b16 %v305
    %v398 = vunpack.c.h.b16 %v305
    %v399 = vunpack.c.l.b16 %v306
    %v400 = vunpack.c.h.b16 %v306
    %v401 = vunpack.c.l.b16 %v307
    %v402 = vunpack.c.h.b16 %v307
    %v403 = vunpack.c.l.b16 %v308
    %v404 = vunpack.c.h.b16 %v308
    %v405 = vunpack.c.l.b16 %v309
    %v406 = vunpack.c.h.b16 %v309
    %v407 = vunpack.c.l.b16 %v310
    %v408 = vunpack.c.h.b16 %v310
    %v409 = vunpack.c.l.b16 %v311
    %v410 = vunpack.c.h.b16 %v311
    %v411 = vunpack.c.l.b16 %v312
    %v412 = vunpack.c.h.b16 %v312
    %v413 = vunpack.c.l.b16 %v313
    %v414 = vunpack.c.h.b16 %v313
    %v415 = vunpack.c.l.b16 %v314
    %v416 = vunpack.c.h.b16 %v314
    %v417 = vunpack.c.l.b16 %v315
    %v418 = vunpack.c.h.b16 %v315
    %v419 = vunpack.c.l.b16 %v316
    %v420 = vunpack.c.h.b16 %v316
    %v421 = vunpack.c.l.b16 %v317
    %v422 = vunpack.c.h.b16 %v317
    %v423 = vunpack.c.l.b16 %v318
    %v424 = vunpack.c.h.b16 %v318
    %v425 = vunpack.c.l.b16 %v319
    %v426 = vunpack.c.h.b16 %v319
    %v427 = vunpack.c.l.b16 %v320
    %v428 = vunpack.c.h.b16 %v320
    %v429 = vunpack.c.l.b16 %v321
    %v430 = vunpack.c.h.b16 %v321
    %v431 = vunpack.c.l.b16 %v322
    %v432 = vunpack.c.h.b16 %v322
    %v433 = vunpack.c.l.b16 %v323
    %v434 = vunpack.c.h.b16 %v323
    %v435 = vunpack.c.l.b16 %v324
    %v436 = vunpack.c.h.b16 %v324
    %v437 = vunpack.c.l.b16 %v325
    %v438 = vunpack.c.h.b16 %v325
    %v439 = vunpack.c.l.b16 %v326
    %v440 = vunpack.c.h.b16 %v326
    %v441 = vunpack.c.l.b16 %v327
    %v442 = vunpack.c.h.b16 %v327
    %v443 = vunpack.c.l.b16 %v328
    %v444 = vunpack.c.h.b16 %v328
    %v445 = vunpack.c.l.b16 %v329
    %v446 = vunpack.c.h.b16 %v329
    %v447 = vunpack.c.l.b16 %v330
    %v448 = vunpack.c.h.b16 %v330
    %v449 = vpack.c.b16 %v389, %v385
    %v450 = vpack.c.b16 %v390, %v386
    %v451 = vpack.c.b16 %v391, %v387
    %v452 = vpack.c.b16 %v392, %v388
    %v453 = vpack.c.b16 %v397, %v393
    %v454 = vpack.c.b16 %v398, %v394
    %v455 = vpack.c.b16 %v399, %v395
    %v456 = vpack.c.b16 %v400, %v396
    %v457 = vpack.c.b16 %v405, %v401
    %v458 = vpack.c.b16 %v406, %v402
    %v459 = vpack.c.b16 %v407, %v403
    %v460 = vpack.c.b16 %v408, %v404
    %v461 = vpack.c.b16 %v413, %v409
    %v462 = vpack.c.b16 %v414, %v410
    %v463 = vpack.c.b16 %v415, %v411
    %v464 = vpack.c.b16 %v416, %v412
    %v465 = vpack.c.b16 %v421, %v417
    %v466 = vpack.c.b16 %v422, %v418
    %v467 = vpack.c.b16 %v423, %v419
    %v468 = vpack.c.b16 %v424, %v420
    %v469 = vpack.c.b16 %v429, %v425
    %v470 = vpack.c.b16 %v430, %v426
    %v471 = vpack.c.b16 %v431, %v427
    %v472 = vpack.c.b16 %v432, %v428
    %v473 = vpack.c.b16 %v437, %v433
    %v474 = vpack.c.b16 %v438, %v434
    %v475 = vpack.c.b16 %v439, %v435
    %v476 = vpack.c.b16 %v440, %v436
    %v477 = vpack.c.b16 %v445, %v441
    %v478 = vpack.c.b16 %v446, %v442
    %v479 = vpack.c.b16 %v447, %v443
    %v480 = vpack.c.b16 %v448, %v444
    %513 = vmatprep.subr.bf16.mxu0 %v478
    %514 = vmatpush1.bf16.msra.mxu0 %v477
    %515 = vmatprep.subr.bf16.mxu0 %v474
    %516 = vmatpush1.bf16.msra.mxu0 %v473
    %517 = vmatprep.subr.bf16.mxu0 %v470
    %518 = vmatpush1.bf16.msra.mxu0 %v469
    %519 = vmatprep.subr.bf16.mxu0 %v466
    %520 = vmatpush1.bf16.msra.mxu0 %v465
    %521 = vmatprep.subr.bf16.mxu0 %v462
    %522 = vmatpush1.bf16.msra.mxu0 %v461
    %523 = vmatprep.subr.bf16.mxu0 %v458
    %524 = vmatpush1.bf16.msra.mxu0 %v457
    %525 = vmatprep.subr.bf16.mxu0 %v454
    %526 = vmatpush1.bf16.msra.mxu0 %v453
    %527 = vmatprep.subr.bf16.mxu0 %v450
    %528 = vmatpush1.bf16.msra.mxu0 %v449
    %529 = vmatprep.subr.bf16.mxu0 0
    %530 = vmatpush2.bf16.msra.mxu0 0
    %531 = vmatprep.subr.bf16.mxu0 0
    %532 = vmatpush2.bf16.msra.mxu0 0
    %533 = vmatprep.subr.bf16.mxu0 0
    %534 = vmatpush2.bf16.msra.mxu0 0
    %535 = vmatprep.subr.bf16.mxu0 0
    %536 = vmatpush2.bf16.msra.mxu0 0
    %537 = vmatprep.subr.bf16.mxu0 0
    %538 = vmatpush2.bf16.msra.mxu0 0
    %539 = vmatprep.subr.bf16.mxu0 0
    %540 = vmatpush2.bf16.msra.mxu0 0
    %541 = vmatprep.subr.bf16.mxu0 0
    %542 = vmatpush2.bf16.msra.mxu0 0
    %543 = vmatprep.subr.bf16.mxu0 0
    %544 = vmatpush2.bf16.msra.mxu0 0
    %545 = vmatprep.mubr.bf16.mxu0 0
    %546 = vmatmul.mubr.bf16.gmra.mxu0 %v298
    %v547 = vpop.f32.mrf.mxu0
    %v548 = vadd.f32 %v336, %v547
    %v549 = vpop.f32.mrf.mxu0
    %v550 = vadd.f32 %v340, %v549
    %v551 = vpop.f32.mrf.mxu0
    %v552 = vpop.f32.mrf.mxu0
    %553 = vdwg.mxu0
    %554 = vmatprep.subr.bf16.mxu0 %v480
    %555 = vmatpush1.bf16.msra.mxu0 %v479
    %556 = vmatprep.subr.bf16.mxu0 %v476
    %557 = vmatpush1.bf16.msra.mxu0 %v475
    %558 = vmatprep.subr.bf16.mxu0 %v472
    %559 = vmatpush1.bf16.msra.mxu0 %v471
    %560 = vmatprep.subr.bf16.mxu0 %v468
    %561 = vmatpush1.bf16.msra.mxu0 %v467
    %562 = vmatprep.subr.bf16.mxu0 %v464
    %563 = vmatpush1.bf16.msra.mxu0 %v463
    %564 = vmatprep.subr.bf16.mxu0 %v460
    %565 = vmatpush1.bf16.msra.mxu0 %v459
    %566 = vmatprep.subr.bf16.mxu0 %v456
    %567 = vmatpush1.bf16.msra.mxu0 %v455
    %568 = vmatprep.subr.bf16.mxu0 %v452
    %569 = vmatpush1.bf16.msra.mxu0 %v451
    %570 = vmatprep.subr.bf16.mxu0 0
    %571 = vmatpush2.bf16.msra.mxu0 0
    %572 = vmatprep.subr.bf16.mxu0 0
    %573 = vmatpush2.bf16.msra.mxu0 0
    %574 = vmatprep.subr.bf16.mxu0 0
    %575 = vmatpush2.bf16.msra.mxu0 0
    %576 = vmatprep.subr.bf16.mxu0 0
    %577 = vmatpush2.bf16.msra.mxu0 0
    %578 = vmatprep.subr.bf16.mxu0 0
    %579 = vmatpush2.bf16.msra.mxu0 0
    %580 = vmatprep.subr.bf16.mxu0 0
    %581 = vmatpush2.bf16.msra.mxu0 0
    %582 = vmatprep.subr.bf16.mxu0 0
    %583 = vmatpush2.bf16.msra.mxu0 0
    %584 = vmatprep.subr.bf16.mxu0 0
    %585 = vmatpush2.bf16.msra.mxu0 0
    %586 = vmatprep.mubr.bf16.mxu0 0
    %587 = vmatmul.mubr.bf16.gmra.mxu0 %v298
    %v588 = vpop.f32.mrf.mxu0
    %v589 = vadd.f32 %v344, %v588
    %v590 = vpop.f32.mrf.mxu0
    %v591 = vadd.f32 %v348, %v590
    %v592 = vpop.f32.mrf.mxu0
    %v593 = vpop.f32.mrf.mxu0
    %594 = vdwg.mxu0
    %v595 = vmax.f32 %v548, 0.0
    %v596 = vmax.f32 %v550, 0.0
    %v597 = vmax.f32 %v589, 0.0
    %v598 = vmax.f32 %v591, 0.0
    %v599 = vpack.c.bf16 %v595, %v595
    %v600 = vpack.c.bf16 %v596, %v596
    %v601 = vpack.c.bf16 %v597, %v597
    %v602 = vpack.c.bf16 %v598, %v598
    %v603 = vld [vmem:[#allocation8] sm:$0xff]
    %v604 = vld [vmem:[#allocation8 + $0x8] sm:$0xff]
    %v605 = vld [vmem:[#allocation8 + $0x10] sm:$0xff]
    %v606 = vld [vmem:[#allocation8 + $0x18] sm:$0xff]
    %v607 = vld [vmem:[#allocation8 + $0x20] sm:$0xff]
    %v608 = vld [vmem:[#allocation8 + $0x28] sm:$0xff]
    %v609 = vld [vmem:[#allocation8 + $0x30] sm:$0xff]
    %v610 = vld [vmem:[#allocation8 + $0x38] sm:$0xff]
    %v611 = vld [vmem:[#allocation8 + $0x40] sm:$0xff]
    %v612 = vld [vmem:[#allocation8 + $0x48] sm:$0xff]
    %v613 = vld [vmem:[#allocation8 + $0x50] sm:$0xff]
    %v614 = vld [vmem:[#allocation8 + $0x58] sm:$0xff]
    %v615 = vld [vmem:[#allocation8 + $0x60] sm:$0xff]
    %v616 = vld [vmem:[#allocation8 + $0x68] sm:$0xff]
    %v617 = vld [vmem:[#allocation8 + $0x70] sm:$0xff]
    %v618 = vld [vmem:[#allocation8 + $0x78] sm:$0xff]
    %v619 = vld [vmem:[#allocation8 + $0x80] sm:$0xff]
    %v620 = vld [vmem:[#allocation8 + $0x88] sm:$0xff]
    %v621 = vld [vmem:[#allocation8 + $0x90] sm:$0xff]
    %v622 = vld [vmem:[#allocation8 + $0x98] sm:$0xff]
    %v623 = vld [vmem:[#allocation8 + $0xa0] sm:$0xff]
    %v624 = vld [vmem:[#allocation8 + $0xa8] sm:$0xff]
    %v625 = vld [vmem:[#allocation8 + $0xb0] sm:$0xff]
    %v626 = vld [vmem:[#allocation8 + $0xb8] sm:$0xff]
    %v627 = vld [vmem:[#allocation8 + $0xc0] sm:$0xff]
    %v628 = vld [vmem:[#allocation8 + $0xc8] sm:$0xff]
    %v629 = vld [vmem:[#allocation8 + $0xd0] sm:$0xff]
    %v630 = vld [vmem:[#allocation8 + $0xd8] sm:$0xff]
    %v631 = vld [vmem:[#allocation8 + $0xe0] sm:$0xff]
    %v632 = vld [vmem:[#allocation8 + $0xe8] sm:$0xff]
    %v633 = vld [vmem:[#allocation8 + $0xf0] sm:$0xff]
    %v634 = vld [vmem:[#allocation8 + $0xf8] sm:$0xff]
    %v635 = vld [vmem:[#allocation8 + $0x100] sm:$0xff]
    %v636 = vld [vmem:[#allocation8 + $0x108] sm:$0xff]
    %v637 = vld [vmem:[#allocation8 + $0x110] sm:$0xff]
    %v638 = vld [vmem:[#allocation8 + $0x118] sm:$0xff]
    %v639 = vld [vmem:[#allocation8 + $0x120] sm:$0xff]
    %v640 = vld [vmem:[#allocation8 + $0x128] sm:$0xff]
    %v641 = vld [vmem:[#allocation8 + $0x130] sm:$0xff]
    %v642 = vld [vmem:[#allocation8 + $0x138] sm:$0xff]
    %v643 = vld [vmem:[#allocation8 + $0x140] sm:$0xff]
    %v644 = vld [vmem:[#allocation8 + $0x148] sm:$0xff]
    %v645 = vld [vmem:[#allocation8 + $0x150] sm:$0xff]
    %v646 = vld [vmem:[#allocation8 + $0x158] sm:$0xff]
    %v647 = vld [vmem:[#allocation8 + $0x160] sm:$0xff]
    %v648 = vld [vmem:[#allocation8 + $0x168] sm:$0xff]
    %v649 = vld [vmem:[#allocation8 + $0x170] sm:$0xff]
    %v650 = vld [vmem:[#allocation8 + $0x178] sm:$0xff]
    %v651 = vld [vmem:[#allocation8 + $0x180] sm:$0xff]
    %v652 = vld [vmem:[#allocation8 + $0x188] sm:$0xff]
    %v653 = vld [vmem:[#allocation8 + $0x190] sm:$0xff]
    %v654 = vld [vmem:[#allocation8 + $0x198] sm:$0xff]
    %v655 = vld [vmem:[#allocation8 + $0x1a0] sm:$0xff]
    %v656 = vld [vmem:[#allocation8 + $0x1a8] sm:$0xff]
    %v657 = vld [vmem:[#allocation8 + $0x1b0] sm:$0xff]
    %v658 = vld [vmem:[#allocation8 + $0x1b8] sm:$0xff]
    %v659 = vld [vmem:[#allocation8 + $0x1c0] sm:$0xff]
    %v660 = vld [vmem:[#allocation8 + $0x1c8] sm:$0xff]
    %v661 = vld [vmem:[#allocation8 + $0x1d0] sm:$0xff]
    %v662 = vld [vmem:[#allocation8 + $0x1d8] sm:$0xff]
    %v663 = vld [vmem:[#allocation8 + $0x1e0] sm:$0xff]
    %v664 = vld [vmem:[#allocation8 + $0x1e8] sm:$0xff]
    %v665 = vld [vmem:[#allocation8 + $0x1f0] sm:$0xff]
    %v666 = vld [vmem:[#allocation8 + $0x1f8] sm:$0xff]
    %v667 = vld [vmem:[%s5] sm:$0x3]
    %v669 = vlaneseq
    %v670 = vshrl.u32 %v669, 7
    %v671 = vsub.s32 0, %v670
    %v672 = vrot.slane %v667, %v671
    %v673 = vlaneseq
    %v674 = vshrl.u32 %v673, 7
    %v675 = vsub.s32 1, %v674
    %v676 = vrot.slane %v667, %v675
    %v743 = vunpack.c.l.b16 %v603
    %v744 = vunpack.c.h.b16 %v603
    %v745 = vunpack.c.l.b16 %v604
    %v746 = vunpack.c.h.b16 %v604
    %v747 = vunpack.c.l.b16 %v605
    %v748 = vunpack.c.h.b16 %v605
    %v749 = vunpack.c.l.b16 %v606
    %v750 = vunpack.c.h.b16 %v606
    %v751 = vunpack.c.l.b16 %v607
    %v752 = vunpack.c.h.b16 %v607
    %v753 = vunpack.c.l.b16 %v608
    %v754 = vunpack.c.h.b16 %v608
    %v755 = vunpack.c.l.b16 %v609
    %v756 = vunpack.c.h.b16 %v609
    %v757 = vunpack.c.l.b16 %v610
    %v758 = vunpack.c.h.b16 %v610
    %v759 = vunpack.c.l.b16 %v611
    %v760 = vunpack.c.h.b16 %v611
    %v761 = vunpack.c.l.b16 %v612
    %v762 = vunpack.c.h.b16 %v612
    %v763 = vunpack.c.l.b16 %v613
    %v764 = vunpack.c.h.b16 %v613
    %v765 = vunpack.c.l.b16 %v614
    %v766 = vunpack.c.h.b16 %v614
    %v767 = vunpack.c.l.b16 %v615
    %v768 = vunpack.c.h.b16 %v615
    %v769 = vunpack.c.l.b16 %v616
    %v770 = vunpack.c.h.b16 %v616
    %v771 = vunpack.c.l.b16 %v617
    %v772 = vunpack.c.h.b16 %v617
    %v773 = vunpack.c.l.b16 %v618
    %v774 = vunpack.c.h.b16 %v618
    %v775 = vunpack.c.l.b16 %v619
    %v776 = vunpack.c.h.b16 %v619
    %v777 = vunpack.c.l.b16 %v620
    %v778 = vunpack.c.h.b16 %v620
    %v779 = vunpack.c.l.b16 %v621
    %v780 = vunpack.c.h.b16 %v621
    %v781 = vunpack.c.l.b16 %v622
    %v782 = vunpack.c.h.b16 %v622
    %v783 = vunpack.c.l.b16 %v623
    %v784 = vunpack.c.h.b16 %v623
    %v785 = vunpack.c.l.b16 %v624
    %v786 = vunpack.c.h.b16 %v624
    %v787 = vunpack.c.l.b16 %v625
    %v788 = vunpack.c.h.b16 %v625
    %v789 = vunpack.c.l.b16 %v626
    %v790 = vunpack.c.h.b16 %v626
    %v791 = vunpack.c.l.b16 %v627
    %v792 = vunpack.c.h.b16 %v627
    %v793 = vunpack.c.l.b16 %v628
    %v794 = vunpack.c.h.b16 %v628
    %v795 = vunpack.c.l.b16 %v629
    %v796 = vunpack.c.h.b16 %v629
    %v797 = vunpack.c.l.b16 %v630
    %v798 = vunpack.c.h.b16 %v630
    %v799 = vunpack.c.l.b16 %v631
    %v800 = vunpack.c.h.b16 %v631
    %v801 = vunpack.c.l.b16 %v632
    %v802 = vunpack.c.h.b16 %v632
    %v803 = vunpack.c.l.b16 %v633
    %v804 = vunpack.c.h.b16 %v633
    %v805 = vunpack.c.l.b16 %v634
    %v806 = vunpack.c.h.b16 %v634
    %v807 = vunpack.c.l.b16 %v635
    %v808 = vunpack.c.h.b16 %v635
    %v809 = vunpack.c.l.b16 %v636
    %v810 = vunpack.c.h.b16 %v636
    %v811 = vunpack.c.l.b16 %v637
    %v812 = vunpack.c.h.b16 %v637
    %v813 = vunpack.c.l.b16 %v638
    %v814 = vunpack.c.h.b16 %v638
    %v815 = vunpack.c.l.b16 %v639
    %v816 = vunpack.c.h.b16 %v639
    %v817 = vunpack.c.l.b16 %v640
    %v818 = vunpack.c.h.b16 %v640
    %v819 = vunpack.c.l.b16 %v641
    %v820 = vunpack.c.h.b16 %v641
    %v821 = vunpack.c.l.b16 %v642
    %v822 = vunpack.c.h.b16 %v642
    %v823 = vunpack.c.l.b16 %v643
    %v824 = vunpack.c.h.b16 %v643
    %v825 = vunpack.c.l.b16 %v644
    %v826 = vunpack.c.h.b16 %v644
    %v827 = vunpack.c.l.b16 %v645
    %v828 = vunpack.c.h.b16 %v645
    %v829 = vunpack.c.l.b16 %v646
    %v830 = vunpack.c.h.b16 %v646
    %v831 = vunpack.c.l.b16 %v647
    %v832 = vunpack.c.h.b16 %v647
    %v833 = vunpack.c.l.b16 %v648
    %v834 = vunpack.c.h.b16 %v648
    %v835 = vunpack.c.l.b16 %v649
    %v836 = vunpack.c.h.b16 %v649
    %v837 = vunpack.c.l.b16 %v650
    %v838 = vunpack.c.h.b16 %v650
    %v839 = vunpack.c.l.b16 %v651
    %v840 = vunpack.c.h.b16 %v651
    %v841 = vunpack.c.l.b16 %v652
    %v842 = vunpack.c.h.b16 %v652
    %v843 = vunpack.c.l.b16 %v653
    %v844 = vunpack.c.h.b16 %v653
    %v845 = vunpack.c.l.b16 %v654
    %v846 = vunpack.c.h.b16 %v654
    %v847 = vunpack.c.l.b16 %v655
    %v848 = vunpack.c.h.b16 %v655
    %v849 = vunpack.c.l.b16 %v656
    %v850 = vunpack.c.h.b16 %v656
    %v851 = vunpack.c.l.b16 %v657
    %v852 = vunpack.c.h.b16 %v657
    %v853 = vunpack.c.l.b16 %v658
    %v854 = vunpack.c.h.b16 %v658
    %v855 = vunpack.c.l.b16 %v659
    %v856 = vunpack.c.h.b16 %v659
    %v857 = vunpack.c.l.b16 %v660
    %v858 = vunpack.c.h.b16 %v660
    %v859 = vunpack.c.l.b16 %v661
    %v860 = vunpack.c.h.b16 %v661
    %v861 = vunpack.c.l.b16 %v662
    %v862 = vunpack.c.h.b16 %v662
    %v863 = vunpack.c.l.b16 %v663
    %v864 = vunpack.c.h.b16 %v663
    %v865 = vunpack.c.l.b16 %v664
    %v866 = vunpack.c.h.b16 %v664
    %v867 = vunpack.c.l.b16 %v665
    %v868 = vunpack.c.h.b16 %v665
    %v869 = vunpack.c.l.b16 %v666
    %v870 = vunpack.c.h.b16 %v666
    %v871 = vpack.c.b16 %v745, %v743
    %v872 = vpack.c.b16 %v746, %v744
    %v873 = vpack.c.b16 %v749, %v747
    %v874 = vpack.c.b16 %v750, %v748
    %v875 = vpack.c.b16 %v753, %v751
    %v876 = vpack.c.b16 %v754, %v752
    %v877 = vpack.c.b16 %v757, %v755
    %v878 = vpack.c.b16 %v758, %v756
    %v879 = vpack.c.b16 %v761, %v759
    %v880 = vpack.c.b16 %v762, %v760
    %v881 = vpack.c.b16 %v765, %v763
    %v882 = vpack.c.b16 %v766, %v764
    %v883 = vpack.c.b16 %v769, %v767
    %v884 = vpack.c.b16 %v770, %v768
    %v885 = vpack.c.b16 %v773, %v771
    %v886 = vpack.c.b16 %v774, %v772
    %v887 = vpack.c.b16 %v777, %v775
    %v888 = vpack.c.b16 %v778, %v776
    %v889 = vpack.c.b16 %v781, %v779
    %v890 = vpack.c.b16 %v782, %v780
    %v891 = vpack.c.b16 %v785, %v783
    %v892 = vpack.c.b16 %v786, %v784
    %v893 = vpack.c.b16 %v789, %v787
    %v894 = vpack.c.b16 %v790, %v788
    %v895 = vpack.c.b16 %v793, %v791
    %v896 = vpack.c.b16 %v794, %v792
    %v897 = vpack.c.b16 %v797, %v795
    %v898 = vpack.c.b16 %v798, %v796
    %v899 = vpack.c.b16 %v801, %v799
    %v900 = vpack.c.b16 %v802, %v800
    %v901 = vpack.c.b16 %v805, %v803
    %v902 = vpack.c.b16 %v806, %v804
    %v903 = vpack.c.b16 %v809, %v807
    %v904 = vpack.c.b16 %v810, %v808
    %v905 = vpack.c.b16 %v813, %v811
    %v906 = vpack.c.b16 %v814, %v812
    %v907 = vpack.c.b16 %v817, %v815
    %v908 = vpack.c.b16 %v818, %v816
    %v909 = vpack.c.b16 %v821, %v819
    %v910 = vpack.c.b16 %v822, %v820
    %v911 = vpack.c.b16 %v825, %v823
    %v912 = vpack.c.b16 %v826, %v824
    %v913 = vpack.c.b16 %v829, %v827
    %v914 = vpack.c.b16 %v830, %v828
    %v915 = vpack.c.b16 %v833, %v831
    %v916 = vpack.c.b16 %v834, %v832
    %v917 = vpack.c.b16 %v837, %v835
    %v918 = vpack.c.b16 %v838, %v836
    %v919 = vpack.c.b16 %v841, %v839
    %v920 = vpack.c.b16 %v842, %v840
    %v921 = vpack.c.b16 %v845, %v843
    %v922 = vpack.c.b16 %v846, %v844
    %v923 = vpack.c.b16 %v849, %v847
    %v924 = vpack.c.b16 %v850, %v848
    %v925 = vpack.c.b16 %v853, %v851
    %v926 = vpack.c.b16 %v854, %v852
    %v927 = vpack.c.b16 %v857, %v855
    %v928 = vpack.c.b16 %v858, %v856
    %v929 = vpack.c.b16 %v861, %v859
    %v930 = vpack.c.b16 %v862, %v860
    %v931 = vpack.c.b16 %v865, %v863
    %v932 = vpack.c.b16 %v866, %v864
    %v933 = vpack.c.b16 %v869, %v867
    %v934 = vpack.c.b16 %v870, %v868
    %999 = vmatprep.subr.bf16.mxu0 %v886
    %1000 = vmatpush1.bf16.msra.mxu0 %v885
    %1001 = vmatprep.subr.bf16.mxu0 %v884
    %1002 = vmatpush1.bf16.msra.mxu0 %v883
    %1003 = vmatprep.subr.bf16.mxu0 %v882
    %1004 = vmatpush1.bf16.msra.mxu0 %v881
    %1005 = vmatprep.subr.bf16.mxu0 %v880
    %1006 = vmatpush1.bf16.msra.mxu0 %v879
    %1007 = vmatprep.subr.bf16.mxu0 %v878
    %1008 = vmatpush1.bf16.msra.mxu0 %v877
    %1009 = vmatprep.subr.bf16.mxu0 %v876
    %1010 = vmatpush1.bf16.msra.mxu0 %v875
    %1011 = vmatprep.subr.bf16.mxu0 %v874
    %1012 = vmatpush1.bf16.msra.mxu0 %v873
    %1013 = vmatprep.subr.bf16.mxu0 %v872
    %1014 = vmatpush1.bf16.msra.mxu0 %v871
    %1015 = vmatprep.subr.bf16.mxu0 %v902
    %1016 = vmatpush2.bf16.msra.mxu0 %v901
    %1017 = vmatprep.subr.bf16.mxu0 %v900
    %1018 = vmatpush2.bf16.msra.mxu0 %v899
    %1019 = vmatprep.subr.bf16.mxu0 %v898
    %1020 = vmatpush2.bf16.msra.mxu0 %v897
    %1021 = vmatprep.subr.bf16.mxu0 %v896
    %1022 = vmatpush2.bf16.msra.mxu0 %v895
    %1023 = vmatprep.subr.bf16.mxu0 %v894
    %1024 = vmatpush2.bf16.msra.mxu0 %v893
    %1025 = vmatprep.subr.bf16.mxu0 %v892
    %1026 = vmatpush2.bf16.msra.mxu0 %v891
    %1027 = vmatprep.subr.bf16.mxu0 %v890
    %1028 = vmatpush2.bf16.msra.mxu0 %v889
    %1029 = vmatprep.subr.bf16.mxu0 %v888
    %1030 = vmatpush2.bf16.msra.mxu0 %v887
    %1031 = vmatprep.mubr.bf16.mxu0 %v600
    %1032 = vmatmul.mubr.bf16.gmra.mxu0 %v599
    %v1033 = vpop.f32.mrf.mxu0
    %v1034 = vadd.f32 %v672, %v1033
    %v1035 = vpop.f32.mrf.mxu0
    %v1036 = vadd.f32 %v676, %v1035
    %v1037 = vpop.f32.mrf.mxu0
    %v1038 = vpop.f32.mrf.mxu0
    %1039 = vdwg.mxu0
    %1040 = vmatprep.subr.bf16.mxu0 %v918
    %1041 = vmatpush1.bf16.msra.mxu0 %v917
    %1042 = vmatprep.subr.bf16.mxu0 %v916
    %1043 = vmatpush1.bf16.msra.mxu0 %v915
    %1044 = vmatprep.subr.bf16.mxu0 %v914
    %1045 = vmatpush1.bf16.msra.mxu0 %v913
    %1046 = vmatprep.subr.bf16.mxu0 %v912
    %1047 = vmatpush1.bf16.msra.mxu0 %v911
    %1048 = vmatprep.subr.bf16.mxu0 %v910
    %1049 = vmatpush1.bf16.msra.mxu0 %v909
    %1050 = vmatprep.subr.bf16.mxu0 %v908
    %1051 = vmatpush1.bf16.msra.mxu0 %v907
    %1052 = vmatprep.subr.bf16.mxu0 %v906
    %1053 = vmatpush1.bf16.msra.mxu0 %v905
    %1054 = vmatprep.subr.bf16.mxu0 %v904
    %1055 = vmatpush1.bf16.msra.mxu0 %v903
    %1056 = vmatprep.subr.bf16.mxu0 %v934
    %1057 = vmatpush2.bf16.msra.mxu0 %v933
    %1058 = vmatprep.subr.bf16.mxu0 %v932
    %1059 = vmatpush2.bf16.msra.mxu0 %v931
    %1060 = vmatprep.subr.bf16.mxu0 %v930
    %1061 = vmatpush2.bf16.msra.mxu0 %v929
    %1062 = vmatprep.subr.bf16.mxu0 %v928
    %1063 = vmatpush2.bf16.msra.mxu0 %v927
    %1064 = vmatprep.subr.bf16.mxu0 %v926
    %1065 = vmatpush2.bf16.msra.mxu0 %v925
    %1066 = vmatprep.subr.bf16.mxu0 %v924
    %1067 = vmatpush2.bf16.msra.mxu0 %v923
    %1068 = vmatprep.subr.bf16.mxu0 %v922
    %1069 = vmatpush2.bf16.msra.mxu0 %v921
    %1070 = vmatprep.subr.bf16.mxu0 %v920
    %1071 = vmatpush2.bf16.msra.mxu0 %v919
    %1072 = vmatprep.mubr.bf16.mxu0 %v602
    %1073 = vmatmul.mubr.bf16.gmra.mxu0 %v601
    %v1074 = vpop.f32.mrf.mxu0
    %v1075 = vadd.f32 %v1034, %v1074
    %v1076 = vpop.f32.mrf.mxu0
    %v1077 = vadd.f32 %v1036, %v1076
    %v1078 = vpop.f32.mrf.mxu0
    %v1079 = vpop.f32.mrf.mxu0
    %1080 = vdwg.mxu0
    %v1081 = vmax.f32 %v1075, 0.0
    %v1082 = vmax.f32 %v1077, 0.0
    %v1083 = vpack.c.bf16 %v1081, %v1081
    %v1084 = vpack.c.bf16 %v1082, %v1082
    %v1085 = vld [vmem:[#allocation10] sm:$0xf]
    %v1086 = vld [vmem:[#allocation10 + $0x4] sm:$0xf]
    %v1087 = vld [vmem:[#allocation10 + $0x8] sm:$0xf]
    %v1088 = vld [vmem:[#allocation10 + $0xc] sm:$0xf]
    %v1089 = vld [vmem:[#allocation10 + $0x10] sm:$0xf]
    %v1090 = vld [vmem:[#allocation10 + $0x14] sm:$0xf]
    %v1091 = vld [vmem:[#allocation10 + $0x18] sm:$0xf]
    %v1092 = vld [vmem:[#allocation10 + $0x1c] sm:$0xf]
    %v1093 = vld [vmem:[#allocation10 + $0x20] sm:$0xf]
    %v1094 = vld [vmem:[#allocation10 + $0x24] sm:$0xf]
    %v1095 = vld [vmem:[#allocation10 + $0x28] sm:$0xf]
    %v1096 = vld [vmem:[#allocation10 + $0x2c] sm:$0xf]
    %v1097 = vld [vmem:[#allocation10 + $0x30] sm:$0xf]
    %v1098 = vld [vmem:[#allocation10 + $0x34] sm:$0xf]
    %v1099 = vld [vmem:[#allocation10 + $0x38] sm:$0xf]
    %v1100 = vld [vmem:[#allocation10 + $0x3c] sm:$0xf]
    %v1101 = vld [vmem:[#allocation10 + $0x40] sm:$0xf]
    %v1102 = vld [vmem:[#allocation10 + $0x44] sm:$0xf]
    %v1103 = vld [vmem:[#allocation10 + $0x48] sm:$0xf]
    %v1104 = vld [vmem:[#allocation10 + $0x4c] sm:$0xf]
    %v1105 = vld [vmem:[#allocation10 + $0x50] sm:$0xf]
    %v1106 = vld [vmem:[#allocation10 + $0x54] sm:$0xf]
    %v1107 = vld [vmem:[#allocation10 + $0x58] sm:$0xf]
    %v1108 = vld [vmem:[#allocation10 + $0x5c] sm:$0xf]
    %v1109 = vld [vmem:[#allocation10 + $0x60] sm:$0xf]
    %v1110 = vld [vmem:[#allocation10 + $0x64] sm:$0xf]
    %v1111 = vld [vmem:[#allocation10 + $0x68] sm:$0xf]
    %v1112 = vld [vmem:[#allocation10 + $0x6c] sm:$0xf]
    %v1113 = vld [vmem:[#allocation10 + $0x70] sm:$0xf]
    %v1114 = vld [vmem:[#allocation10 + $0x74] sm:$0xf]
    %v1115 = vld [vmem:[#allocation10 + $0x78] sm:$0xf]
    %v1116 = vld [vmem:[#allocation10 + $0x7c] sm:$0xf]
    %v1117 = vld [vmem:[%s7] sm:$0x1]
    %v1119 = vlaneseq
    %v1120 = vshrl.u32 %v1119, 7
    %v1121 = vsub.s32 0, %v1120
    %v1122 = vrot.slane %v1117, %v1121
    %v1156 = vunpack.c.l.b16 %v1085
    %v1157 = vunpack.c.l.b16 %v1086
    %v1158 = vunpack.c.l.b16 %v1087
    %v1159 = vunpack.c.l.b16 %v1088
    %v1160 = vunpack.c.l.b16 %v1089
    %v1161 = vunpack.c.l.b16 %v1090
    %v1162 = vunpack.c.l.b16 %v1091
    %v1163 = vunpack.c.l.b16 %v1092
    %v1164 = vunpack.c.l.b16 %v1093
    %v1165 = vunpack.c.l.b16 %v1094
    %v1166 = vunpack.c.l.b16 %v1095
    %v1167 = vunpack.c.l.b16 %v1096
    %v1168 = vunpack.c.l.b16 %v1097
    %v1169 = vunpack.c.l.b16 %v1098
    %v1170 = vunpack.c.l.b16 %v1099
    %v1171 = vunpack.c.l.b16 %v1100
    %v1172 = vunpack.c.l.b16 %v1101
    %v1173 = vunpack.c.l.b16 %v1102
    %v1174 = vunpack.c.l.b16 %v1103
    %v1175 = vunpack.c.l.b16 %v1104
    %v1176 = vunpack.c.l.b16 %v1105
    %v1177 = vunpack.c.l.b16 %v1106
    %v1178 = vunpack.c.l.b16 %v1107
    %v1179 = vunpack.c.l.b16 %v1108
    %v1180 = vunpack.c.l.b16 %v1109
    %v1181 = vunpack.c.l.b16 %v1110
    %v1182 = vunpack.c.l.b16 %v1111
    %v1183 = vunpack.c.l.b16 %v1112
    %v1184 = vunpack.c.l.b16 %v1113
    %v1185 = vunpack.c.l.b16 %v1114
    %v1186 = vunpack.c.l.b16 %v1115
    %v1187 = vunpack.c.l.b16 %v1116
    %v1188 = vpack.c.b16 %v1157, %v1156
    %v1189 = vpack.c.b16 %v1159, %v1158
    %v1190 = vpack.c.b16 %v1161, %v1160
    %v1191 = vpack.c.b16 %v1163, %v1162
    %v1192 = vpack.c.b16 %v1165, %v1164
    %v1193 = vpack.c.b16 %v1167, %v1166
    %v1194 = vpack.c.b16 %v1169, %v1168
    %v1195 = vpack.c.b16 %v1171, %v1170
    %v1196 = vpack.c.b16 %v1173, %v1172
    %v1197 = vpack.c.b16 %v1175, %v1174
    %v1198 = vpack.c.b16 %v1177, %v1176
    %v1199 = vpack.c.b16 %v1179, %v1178
    %v1200 = vpack.c.b16 %v1181, %v1180
    %v1201 = vpack.c.b16 %v1183, %v1182
    %v1202 = vpack.c.b16 %v1185, %v1184
    %v1203 = vpack.c.b16 %v1187, %v1186
    %1220 = vmatprep.subr.bf16.mxu0 0
    %1221 = vmatpush1.bf16.msra.mxu0 %v1195
    %1222 = vmatprep.subr.bf16.mxu0 0
    %1223 = vmatpush1.bf16.msra.mxu0 %v1194
    %1224 = vmatprep.subr.bf16.mxu0 0
    %1225 = vmatpush1.bf16.msra.mxu0 %v1193
    %1226 = vmatprep.subr.bf16.mxu0 0
    %1227 = vmatpush1.bf16.msra.mxu0 %v1192
    %1228 = vmatprep.subr.bf16.mxu0 0
    %1229 = vmatpush1.bf16.msra.mxu0 %v1191
    %1230 = vmatprep.subr.bf16.mxu0 0
    %1231 = vmatpush1.bf16.msra.mxu0 %v1190
    %1232 = vmatprep.subr.bf16.mxu0 0
    %1233 = vmatpush1.bf16.msra.mxu0 %v1189
    %1234 = vmatprep.subr.bf16.mxu0 0
    %1235 = vmatpush1.bf16.msra.mxu0 %v1188
    %1236 = vmatprep.subr.bf16.mxu0 0
    %1237 = vmatpush2.bf16.msra.mxu0 %v1203
    %1238 = vmatprep.subr.bf16.mxu0 0
    %1239 = vmatpush2.bf16.msra.mxu0 %v1202
    %1240 = vmatprep.subr.bf16.mxu0 0
    %1241 = vmatpush2.bf16.msra.mxu0 %v1201
    %1242 = vmatprep.subr.bf16.mxu0 0
    %1243 = vmatpush2.bf16.msra.mxu0 %v1200
    %1244 = vmatprep.subr.bf16.mxu0 0
    %1245 = vmatpush2.bf16.msra.mxu0 %v1199
    %1246 = vmatprep.subr.bf16.mxu0 0
    %1247 = vmatpush2.bf16.msra.mxu0 %v1198
    %1248 = vmatprep.subr.bf16.mxu0 0
    %1249 = vmatpush2.bf16.msra.mxu0 %v1197
    %1250 = vmatprep.subr.bf16.mxu0 0
    %1251 = vmatpush2.bf16.msra.mxu0 %v1196
    %1252 = vmatprep.mubr.bf16.mxu0 %v1084
    %1253 = vmatmul.mubr.bf16.gmra.mxu0 %v1083
    %v1254 = vpop.f32.mrf.mxu0
    %v1255 = vadd.f32 %v1122, %v1254
    %v1256 = vpop.f32.mrf.mxu0
    %v1257 = vpop.f32.mrf.mxu0
    %v1258 = vpop.f32.mrf.mxu0
    %1259 = vdwg.mxu0
    %v1260 = vmul.f32 %v1255, 0.5
    %v1261 = vmul.f32 %v1260, 1.442695
    %v1262 = vpow.pop %v1261
    %v1263 = vld [vmem:[%s1] sm:$0xff]
    %1265 = vrot.lane.b32.xlu0 %v1263, 64
    %v1266 = vpop.permute.xlu0 %1265
    %v1268 = vmul.f32 %v1262, %v1266
    %1270 = vrot.lane.b32.xlu0 %v1268, 64
    %v1271 = vpop.permute.xlu0 %1270
    %v1273 = vadd.f32 %v1255, %v1271
    %v1274 = vpack.c.bf16 %v1273, %v1273
    %v1275 = vld [vmem:[#allocation17] sm:$0xf]
    %v1276 = vld [vmem:[#allocation17 + $0x4] sm:$0xf]
    %v1277 = vld [vmem:[#allocation17 + $0x8] sm:$0xf]
    %v1278 = vld [vmem:[#allocation17 + $0xc] sm:$0xf]
    %v1279 = vld [vmem:[#allocation17 + $0x10] sm:$0xf]
    %v1280 = vld [vmem:[#allocation17 + $0x14] sm:$0xf]
    %v1281 = vld [vmem:[#allocation17 + $0x18] sm:$0xf]
    %v1282 = vld [vmem:[#allocation17 + $0x1c] sm:$0xf]
    %v1283 = vld [vmem:[#allocation19] sm:$0x1]
    %v1285 = vlaneseq
    %v1286 = vshrl.u32 %v1285, 7
    %v1287 = vsub.s32 0, %v1286
    %v1288 = vrot.slane %v1283, %v1287
    %v1298 = vunpack.c.l.b16 %v1275
    %v1299 = vunpack.c.l.b16 %v1276
    %v1300 = vunpack.c.l.b16 %v1277
    %v1301 = vunpack.c.l.b16 %v1278
    %v1302 = vunpack.c.l.b16 %v1279
    %v1303 = vunpack.c.l.b16 %v1280
    %v1304 = vunpack.c.l.b16 %v1281
    %v1305 = vunpack.c.l.b16 %v1282
    %v1306 = vpack.c.b16 %v1299, %v1298
    %v1307 = vpack.c.b16 %v1301, %v1300
    %v1308 = vpack.c.b16 %v1303, %v1302
    %v1309 = vpack.c.b16 %v1305, %v1304
    %vm1314 = vcmask 523264
    %v1316 = vsel %vm1314, %v1274, 0
    %1318 = vmatprep.subr.bf16.mxu0 0
    %1319 = vmatpush1.bf16.msra.mxu0 0
    %1320 = vmatprep.subr.bf16.mxu0 0
    %1321 = vmatpush1.bf16.msra.mxu0 0
    %1322 = vmatprep.subr.bf16.mxu0 0
    %1323 = vmatpush1.bf16.msra.mxu0 0
    %1324 = vmatprep.subr.bf16.mxu0 0
    %1325 = vmatpush1.bf16.msra.mxu0 0
    %1326 = vmatprep.subr.bf16.mxu0 0
    %1327 = vmatpush1.bf16.msra.mxu0 %v1309
    %1328 = vmatprep.subr.bf16.mxu0 0
    %1329 = vmatpush1.bf16.msra.mxu0 %v1308
    %1330 = vmatprep.subr.bf16.mxu0 0
    %1331 = vmatpush1.bf16.msra.mxu0 %v1307
    %1332 = vmatprep.subr.bf16.mxu0 0
    %1333 = vmatpush1.bf16.msra.mxu0 %v1306
    %1334 = vmatprep.subr.bf16.mxu0 0
    %1335 = vmatpush2.bf16.msra.mxu0 0
    %1336 = vmatprep.subr.bf16.mxu0 0
    %1337 = vmatpush2.bf16.msra.mxu0 0
    %1338 = vmatprep.subr.bf16.mxu0 0
    %1339 = vmatpush2.bf16.msra.mxu0 0
    %1340 = vmatprep.subr.bf16.mxu0 0
    %1341 = vmatpush2.bf16.msra.mxu0 0
    %1342 = vmatprep.subr.bf16.mxu0 0
    %1343 = vmatpush2.bf16.msra.mxu0 0
    %1344 = vmatprep.subr.bf16.mxu0 0
    %1345 = vmatpush2.bf16.msra.mxu0 0
    %1346 = vmatprep.subr.bf16.mxu0 0
    %1347 = vmatpush2.bf16.msra.mxu0 0
    %1348 = vmatprep.subr.bf16.mxu0 0
    %1349 = vmatpush2.bf16.msra.mxu0 0
    %1350 = vmatprep.mubr.bf16.mxu0 0
    %1351 = vmatmul.mubr.bf16.gmra.mxu0 %v1316
    %v1352 = vpop.f32.mrf.mxu0
    %v1353 = vadd.f32 %v1288, %v1352
    %v1354 = vpop.f32.mrf.mxu0
    %v1355 = vpop.f32.mrf.mxu0
    %v1356 = vpop.f32.mrf.mxu0
    %1357 = vdwg.mxu0
    %v1358 = vmax.f32 %v1353, 0.0
    %v1359 = vld [vmem:[#allocation20] sm:$0x1]
    %v1361 = vlaneseq
    %v1362 = vshrl.u32 %v1361, 7
    %v1363 = vsub.s32 0, %v1362
    %v1364 = vrot.slane %v1359, %v1363
    %v1366 = vmul.f32 %v1358, %v1364
    %vm1367 = vcmask 261120
    %v1368 = vsel %vm1367, %v1366, 0.0
    %1369 = vadd.xlane.f32.xlu0 %v1368
    %v1370 = vpop.xlane.xlu0 %1369
    %v1371 = vld [vmem:[#allocation2] sm:$0x1]
    %v1373 = vlaneseq
    %v1374 = vshrl.u32 %v1373, 7
    %v1375 = vsub.s32 0, %v1374
    %v1376 = vrot.slane %v1371, %v1375
    %v1378 = vadd.f32 %v1370, %v1376
    %v1379 = vsub.f32 0.0, %v1378
    %v1380 = vmul.f32 %v1379, 1.442695
    %v1381 = vpow.pop %v1380
    %v1382 = vadd.f32 %v1381, 1.0
    %v1383 = vrcp.pop %v1382
    %v1384 = vmul.f32 1.0, %v1383
    %v1385 = vld [vmem:[#allocation22] sm:$0x1]
    %v1387 = vlaneseq
    %v1388 = vshrl.u32 %v1387, 7
    %v1389 = vsub.s32 0, %v1388
    %v1390 = vrot.slane %v1385, %v1389
    %1391 = vrot.lane.b32.xlu0 %v1390, 32
    %v1392 = vpop.permute.xlu0 %1391
    %v1394 = vmul.f32 %v1358, %v1392
    %1396 = vrot.lane.b32.xlu0 %v1394, 96
    %v1397 = vpop.permute.xlu0 %1396
    %v1399 = vsel %vm1367, %v1397, 0.0
    %1400 = vadd.xlane.f32.xlu0 %v1399
    %v1401 = vpop.xlane.xlu0 %1400
    %v1402 = vld [vmem:[#allocation3] sm:$0x1]
    %v1404 = vlaneseq
    %v1405 = vshrl.u32 %v1404, 7
    %v1406 = vsub.s32 0, %v1405
    %v1407 = vrot.slane %v1402, %v1406
    %v1409 = vadd.f32 %v1401, %v1407
    %v1410 = vsub.f32 0.0, %v1409
    %v1411 = vmul.f32 %v1410, 1.442695
    %v1412 = vpow.pop %v1411
    %v1413 = vadd.f32 %v1412, 1.0
    %v1414 = vrcp.pop %v1413
    %v1415 = vmul.f32 1.0, %v1414
    %v1416 = vld [vmem:[#allocation11] sm:$0xff]
    %v1417 = vld [vmem:[#allocation11 + $0x8] sm:$0xff]
    %v1418 = vld [vmem:[#allocation11 + $0x10] sm:$0xff]
    %v1419 = vld [vmem:[#allocation11 + $0x18] sm:$0xff]
    %v1420 = vld [vmem:[#allocation11 + $0x20] sm:$0xff]
    %v1421 = vld [vmem:[#allocation11 + $0x28] sm:$0xff]
    %v1422 = vld [vmem:[#allocation11 + $0x30] sm:$0xff]
    %v1423 = vld [vmem:[#allocation11 + $0x38] sm:$0xff]
    %v1424 = vld [vmem:[%s9] sm:$0x3]
    %v1426 = vlaneseq
    %v1427 = vshrl.u32 %v1426, 7
    %v1428 = vsub.s32 0, %v1427
    %v1429 = vrot.slane %v1424, %v1428
    %v1430 = vlaneseq
    %v1431 = vshrl.u32 %v1430, 7
    %v1432 = vsub.s32 1, %v1431
    %v1433 = vrot.slane %v1424, %v1432
    %v1444 = vunpack.c.l.b16 %v1416
    %v1445 = vunpack.c.h.b16 %v1416
    %v1446 = vunpack.c.l.b16 %v1417
    %v1447 = vunpack.c.h.b16 %v1417
    %v1448 = vunpack.c.l.b16 %v1418
    %v1449 = vunpack.c.h.b16 %v1418
    %v1450 = vunpack.c.l.b16 %v1419
    %v1451 = vunpack.c.h.b16 %v1419
    %v1452 = vunpack.c.l.b16 %v1420
    %v1453 = vunpack.c.h.b16 %v1420
    %v1454 = vunpack.c.l.b16 %v1421
    %v1455 = vunpack.c.h.b16 %v1421
    %v1456 = vunpack.c.l.b16 %v1422
    %v1457 = vunpack.c.h.b16 %v1422
    %v1458 = vunpack.c.l.b16 %v1423
    %v1459 = vunpack.c.h.b16 %v1423
    %v1460 = vpack.c.b16 %v1446, %v1444
    %v1461 = vpack.c.b16 %v1447, %v1445
    %v1462 = vpack.c.b16 %v1450, %v1448
    %v1463 = vpack.c.b16 %v1451, %v1449
    %v1464 = vpack.c.b16 %v1454, %v1452
    %v1465 = vpack.c.b16 %v1455, %v1453
    %v1466 = vpack.c.b16 %v1458, %v1456
    %v1467 = vpack.c.b16 %v1459, %v1457
    %1476 = vmatprep.subr.bf16.mxu0 0
    %1477 = vmatpush1.bf16.msra.mxu0 0
    %1478 = vmatprep.subr.bf16.mxu0 0
    %1479 = vmatpush1.bf16.msra.mxu0 0
    %1480 = vmatprep.subr.bf16.mxu0 0
    %1481 = vmatpush1.bf16.msra.mxu0 0
    %1482 = vmatprep.subr.bf16.mxu0 0
    %1483 = vmatpush1.bf16.msra.mxu0 0
    %1484 = vmatprep.subr.bf16.mxu0 %v1467
    %1485 = vmatpush1.bf16.msra.mxu0 %v1466
    %1486 = vmatprep.subr.bf16.mxu0 %v1465
    %1487 = vmatpush1.bf16.msra.mxu0 %v1464
    %1488 = vmatprep.subr.bf16.mxu0 %v1463
    %1489 = vmatpush1.bf16.msra.mxu0 %v1462
    %1490 = vmatprep.subr.bf16.mxu0 %v1461
    %1491 = vmatpush1.bf16.msra.mxu0 %v1460
    %1492 = vmatprep.subr.bf16.mxu0 0
    %1493 = vmatpush2.bf16.msra.mxu0 0
    %1494 = vmatprep.subr.bf16.mxu0 0
    %1495 = vmatpush2.bf16.msra.mxu0 0
    %1496 = vmatprep.subr.bf16.mxu0 0
    %1497 = vmatpush2.bf16.msra.mxu0 0
    %1498 = vmatprep.subr.bf16.mxu0 0
    %1499 = vmatpush2.bf16.msra.mxu0 0
    %1500 = vmatprep.subr.bf16.mxu0 0
    %1501 = vmatpush2.bf16.msra.mxu0 0
    %1502 = vmatprep.subr.bf16.mxu0 0
    %1503 = vmatpush2.bf16.msra.mxu0 0
    %1504 = vmatprep.subr.bf16.mxu0 0
    %1505 = vmatpush2.bf16.msra.mxu0 0
    %1506 = vmatprep.subr.bf16.mxu0 0
    %1507 = vmatpush2.bf16.msra.mxu0 0
    %1508 = vmatprep.mubr.bf16.mxu0 0
    %1509 = vmatmul.mubr.bf16.gmra.mxu0 %v1316
    %v1510 = vpop.f32.mrf.mxu0
    %v1511 = vadd.f32 %v1429, %v1510
    %v1512 = vpop.f32.mrf.mxu0
    %v1513 = vadd.f32 %v1433, %v1512
    %v1514 = vpop.f32.mrf.mxu0
    %v1515 = vpop.f32.mrf.mxu0
    %1516 = vdwg.mxu0
    %v1517 = vmax.f32 %v1511, 0.0
    %v1518 = vmax.f32 %v1513, 0.0
    %v1519 = vpack.c.bf16 %v1517, %v1517
    %v1520 = vpack.c.bf16 %v1518, %v1518
    %v1521 = vld [vmem:[#allocation13] sm:$0xff]
    %v1522 = vld [vmem:[#allocation13 + $0x8] sm:$0xff]
    %v1523 = vld [vmem:[#allocation13 + $0x10] sm:$0xff]
    %v1524 = vld [vmem:[#allocation13 + $0x18] sm:$0xff]
    %v1525 = vld [vmem:[#allocation13 + $0x20] sm:$0xff]
    %v1526 = vld [vmem:[#allocation13 + $0x28] sm:$0xff]
    %v1527 = vld [vmem:[#allocation13 + $0x30] sm:$0xff]
    %v1528 = vld [vmem:[#allocation13 + $0x38] sm:$0xff]
    %v1529 = vld [vmem:[#allocation13 + $0x40] sm:$0xff]
    %v1530 = vld [vmem:[#allocation13 + $0x48] sm:$0xff]
    %v1531 = vld [vmem:[#allocation13 + $0x50] sm:$0xff]
    %v1532 = vld [vmem:[#allocation13 + $0x58] sm:$0xff]
    %v1533 = vld [vmem:[#allocation13 + $0x60] sm:$0xff]
    %v1534 = vld [vmem:[#allocation13 + $0x68] sm:$0xff]
    %v1535 = vld [vmem:[#allocation13 + $0x70] sm:$0xff]
    %v1536 = vld [vmem:[#allocation13 + $0x78] sm:$0xff]
    %v1537 = vld [vmem:[#allocation13 + $0x80] sm:$0xff]
    %v1538 = vld [vmem:[#allocation13 + $0x88] sm:$0xff]
    %v1539 = vld [vmem:[#allocation13 + $0x90] sm:$0xff]
    %v1540 = vld [vmem:[#allocation13 + $0x98] sm:$0xff]
    %v1541 = vld [vmem:[#allocation13 + $0xa0] sm:$0xff]
    %v1542 = vld [vmem:[#allocation13 + $0xa8] sm:$0xff]
    %v1543 = vld [vmem:[#allocation13 + $0xb0] sm:$0xff]
    %v1544 = vld [vmem:[#allocation13 + $0xb8] sm:$0xff]
    %v1545 = vld [vmem:[#allocation13 + $0xc0] sm:$0xff]
    %v1546 = vld [vmem:[#allocation13 + $0xc8] sm:$0xff]
    %v1547 = vld [vmem:[#allocation13 + $0xd0] sm:$0xff]
    %v1548 = vld [vmem:[#allocation13 + $0xd8] sm:$0xff]
    %v1549 = vld [vmem:[#allocation13 + $0xe0] sm:$0xff]
    %v1550 = vld [vmem:[#allocation13 + $0xe8] sm:$0xff]
    %v1551 = vld [vmem:[#allocation13 + $0xf0] sm:$0xff]
    %v1552 = vld [vmem:[#allocation13 + $0xf8] sm:$0xff]
    %v1553 = vld [vmem:[#allocation13 + $0x100] sm:$0xff]
    %v1554 = vld [vmem:[#allocation13 + $0x108] sm:$0xff]
    %v1555 = vld [vmem:[#allocation13 + $0x110] sm:$0xff]
    %v1556 = vld [vmem:[#allocation13 + $0x118] sm:$0xff]
    %v1557 = vld [vmem:[#allocation13 + $0x120] sm:$0xff]
    %v1558 = vld [vmem:[#allocation13 + $0x128] sm:$0xff]
    %v1559 = vld [vmem:[#allocation13 + $0x130] sm:$0xff]
    %v1560 = vld [vmem:[#allocation13 + $0x138] sm:$0xff]
    %v1561 = vld [vmem:[#allocation13 + $0x140] sm:$0xff]
    %v1562 = vld [vmem:[#allocation13 + $0x148] sm:$0xff]
    %v1563 = vld [vmem:[#allocation13 + $0x150] sm:$0xff]
    %v1564 = vld [vmem:[#allocation13 + $0x158] sm:$0xff]
    %v1565 = vld [vmem:[#allocation13 + $0x160] sm:$0xff]
    %v1566 = vld [vmem:[#allocation13 + $0x168] sm:$0xff]
    %v1567 = vld [vmem:[#allocation13 + $0x170] sm:$0xff]
    %v1568 = vld [vmem:[#allocation13 + $0x178] sm:$0xff]
    %v1569 = vld [vmem:[#allocation13 + $0x180] sm:$0xff]
    %v1570 = vld [vmem:[#allocation13 + $0x188] sm:$0xff]
    %v1571 = vld [vmem:[#allocation13 + $0x190] sm:$0xff]
    %v1572 = vld [vmem:[#allocation13 + $0x198] sm:$0xff]
    %v1573 = vld [vmem:[#allocation13 + $0x1a0] sm:$0xff]
    %v1574 = vld [vmem:[#allocation13 + $0x1a8] sm:$0xff]
    %v1575 = vld [vmem:[#allocation13 + $0x1b0] sm:$0xff]
    %v1576 = vld [vmem:[#allocation13 + $0x1b8] sm:$0xff]
    %v1577 = vld [vmem:[#allocation13 + $0x1c0] sm:$0xff]
    %v1578 = vld [vmem:[#allocation13 + $0x1c8] sm:$0xff]
    %v1579 = vld [vmem:[#allocation13 + $0x1d0] sm:$0xff]
    %v1580 = vld [vmem:[#allocation13 + $0x1d8] sm:$0xff]
    %v1581 = vld [vmem:[#allocation13 + $0x1e0] sm:$0xff]
    %v1582 = vld [vmem:[#allocation13 + $0x1e8] sm:$0xff]
    %v1583 = vld [vmem:[#allocation13 + $0x1f0] sm:$0xff]
    %v1584 = vld [vmem:[#allocation13 + $0x1f8] sm:$0xff]
    %v1585 = vld [vmem:[%s11] sm:$0xf]
    %v1587 = vlaneseq
    %v1588 = vshrl.u32 %v1587, 7
    %v1589 = vsub.s32 0, %v1588
    %v1590 = vrot.slane %v1585, %v1589
    %v1591 = vlaneseq
    %v1592 = vshrl.u32 %v1591, 7
    %v1593 = vsub.s32 1, %v1592
    %v1594 = vrot.slane %v1585, %v1593
    %v1595 = vlaneseq
    %v1596 = vshrl.u32 %v1595, 7
    %v1597 = vsub.s32 2, %v1596
    %v1598 = vrot.slane %v1585, %v1597
    %v1599 = vlaneseq
    %v1600 = vshrl.u32 %v1599, 7
    %v1601 = vsub.s32 3, %v1600
    %v1602 = vrot.slane %v1585, %v1601
    %v1671 = vunpack.c.l.b16 %v1521
    %v1672 = vunpack.c.h.b16 %v1521
    %v1673 = vunpack.c.l.b16 %v1522
    %v1674 = vunpack.c.h.b16 %v1522
    %v1675 = vunpack.c.l.b16 %v1523
    %v1676 = vunpack.c.h.b16 %v1523
    %v1677 = vunpack.c.l.b16 %v1524
    %v1678 = vunpack.c.h.b16 %v1524
    %v1679 = vunpack.c.l.b16 %v1525
    %v1680 = vunpack.c.h.b16 %v1525
    %v1681 = vunpack.c.l.b16 %v1526
    %v1682 = vunpack.c.h.b16 %v1526
    %v1683 = vunpack.c.l.b16 %v1527
    %v1684 = vunpack.c.h.b16 %v1527
    %v1685 = vunpack.c.l.b16 %v1528
    %v1686 = vunpack.c.h.b16 %v1528
    %v1687 = vunpack.c.l.b16 %v1529
    %v1688 = vunpack.c.h.b16 %v1529
    %v1689 = vunpack.c.l.b16 %v1530
    %v1690 = vunpack.c.h.b16 %v1530
    %v1691 = vunpack.c.l.b16 %v1531
    %v1692 = vunpack.c.h.b16 %v1531
    %v1693 = vunpack.c.l.b16 %v1532
    %v1694 = vunpack.c.h.b16 %v1532
    %v1695 = vunpack.c.l.b16 %v1533
    %v1696 = vunpack.c.h.b16 %v1533
    %v1697 = vunpack.c.l.b16 %v1534
    %v1698 = vunpack.c.h.b16 %v1534
    %v1699 = vunpack.c.l.b16 %v1535
    %v1700 = vunpack.c.h.b16 %v1535
    %v1701 = vunpack.c.l.b16 %v1536
    %v1702 = vunpack.c.h.b16 %v1536
    %v1703 = vunpack.c.l.b16 %v1537
    %v1704 = vunpack.c.h.b16 %v1537
    %v1705 = vunpack.c.l.b16 %v1538
    %v1706 = vunpack.c.h.b16 %v1538
    %v1707 = vunpack.c.l.b16 %v1539
    %v1708 = vunpack.c.h.b16 %v1539
    %v1709 = vunpack.c.l.b16 %v1540
    %v1710 = vunpack.c.h.b16 %v1540
    %v1711 = vunpack.c.l.b16 %v1541
    %v1712 = vunpack.c.h.b16 %v1541
    %v1713 = vunpack.c.l.b16 %v1542
    %v1714 = vunpack.c.h.b16 %v1542
    %v1715 = vunpack.c.l.b16 %v1543
    %v1716 = vunpack.c.h.b16 %v1543
    %v1717 = vunpack.c.l.b16 %v1544
    %v1718 = vunpack.c.h.b16 %v1544
    %v1719 = vunpack.c.l.b16 %v1545
    %v1720 = vunpack.c.h.b16 %v1545
    %v1721 = vunpack.c.l.b16 %v1546
    %v1722 = vunpack.c.h.b16 %v1546
    %v1723 = vunpack.c.l.b16 %v1547
    %v1724 = vunpack.c.h.b16 %v1547
    %v1725 = vunpack.c.l.b16 %v1548
    %v1726 = vunpack.c.h.b16 %v1548
    %v1727 = vunpack.c.l.b16 %v1549
    %v1728 = vunpack.c.h.b16 %v1549
    %v1729 = vunpack.c.l.b16 %v1550
    %v1730 = vunpack.c.h.b16 %v1550
    %v1731 = vunpack.c.l.b16 %v1551
    %v1732 = vunpack.c.h.b16 %v1551
    %v1733 = vunpack.c.l.b16 %v1552
    %v1734 = vunpack.c.h.b16 %v1552
    %v1735 = vunpack.c.l.b16 %v1553
    %v1736 = vunpack.c.h.b16 %v1553
    %v1737 = vunpack.c.l.b16 %v1554
    %v1738 = vunpack.c.h.b16 %v1554
    %v1739 = vunpack.c.l.b16 %v1555
    %v1740 = vunpack.c.h.b16 %v1555
    %v1741 = vunpack.c.l.b16 %v1556
    %v1742 = vunpack.c.h.b16 %v1556
    %v1743 = vunpack.c.l.b16 %v1557
    %v1744 = vunpack.c.h.b16 %v1557
    %v1745 = vunpack.c.l.b16 %v1558
    %v1746 = vunpack.c.h.b16 %v1558
    %v1747 = vunpack.c.l.b16 %v1559
    %v1748 = vunpack.c.h.b16 %v1559
    %v1749 = vunpack.c.l.b16 %v1560
    %v1750 = vunpack.c.h.b16 %v1560
    %v1751 = vunpack.c.l.b16 %v1561
    %v1752 = vunpack.c.h.b16 %v1561
    %v1753 = vunpack.c.l.b16 %v1562
    %v1754 = vunpack.c.h.b16 %v1562
    %v1755 = vunpack.c.l.b16 %v1563
    %v1756 = vunpack.c.h.b16 %v1563
    %v1757 = vunpack.c.l.b16 %v1564
    %v1758 = vunpack.c.h.b16 %v1564
    %v1759 = vunpack.c.l.b16 %v1565
    %v1760 = vunpack.c.h.b16 %v1565
    %v1761 = vunpack.c.l.b16 %v1566
    %v1762 = vunpack.c.h.b16 %v1566
    %v1763 = vunpack.c.l.b16 %v1567
    %v1764 = vunpack.c.h.b16 %v1567
    %v1765 = vunpack.c.l.b16 %v1568
    %v1766 = vunpack.c.h.b16 %v1568
    %v1767 = vunpack.c.l.b16 %v1569
    %v1768 = vunpack.c.h.b16 %v1569
    %v1769 = vunpack.c.l.b16 %v1570
    %v1770 = vunpack.c.h.b16 %v1570
    %v1771 = vunpack.c.l.b16 %v1571
    %v1772 = vunpack.c.h.b16 %v1571
    %v1773 = vunpack.c.l.b16 %v1572
    %v1774 = vunpack.c.h.b16 %v1572
    %v1775 = vunpack.c.l.b16 %v1573
    %v1776 = vunpack.c.h.b16 %v1573
    %v1777 = vunpack.c.l.b16 %v1574
    %v1778 = vunpack.c.h.b16 %v1574
    %v1779 = vunpack.c.l.b16 %v1575
    %v1780 = vunpack.c.h.b16 %v1575
    %v1781 = vunpack.c.l.b16 %v1576
    %v1782 = vunpack.c.h.b16 %v1576
    %v1783 = vunpack.c.l.b16 %v1577
    %v1784 = vunpack.c.h.b16 %v1577
    %v1785 = vunpack.c.l.b16 %v1578
    %v1786 = vunpack.c.h.b16 %v1578
    %v1787 = vunpack.c.l.b16 %v1579
    %v1788 = vunpack.c.h.b16 %v1579
    %v1789 = vunpack.c.l.b16 %v1580
    %v1790 = vunpack.c.h.b16 %v1580
    %v1791 = vunpack.c.l.b16 %v1581
    %v1792 = vunpack.c.h.b16 %v1581
    %v1793 = vunpack.c.l.b16 %v1582
    %v1794 = vunpack.c.h.b16 %v1582
    %v1795 = vunpack.c.l.b16 %v1583
    %v1796 = vunpack.c.h.b16 %v1583
    %v1797 = vunpack.c.l.b16 %v1584
    %v1798 = vunpack.c.h.b16 %v1584
    %v1799 = vpack.c.b16 %v1675, %v1671
    %v1800 = vpack.c.b16 %v1676, %v1672
    %v1801 = vpack.c.b16 %v1677, %v1673
    %v1802 = vpack.c.b16 %v1678, %v1674
    %v1803 = vpack.c.b16 %v1683, %v1679
    %v1804 = vpack.c.b16 %v1684, %v1680
    %v1805 = vpack.c.b16 %v1685, %v1681
    %v1806 = vpack.c.b16 %v1686, %v1682
    %v1807 = vpack.c.b16 %v1691, %v1687
    %v1808 = vpack.c.b16 %v1692, %v1688
    %v1809 = vpack.c.b16 %v1693, %v1689
    %v1810 = vpack.c.b16 %v1694, %v1690
    %v1811 = vpack.c.b16 %v1699, %v1695
    %v1812 = vpack.c.b16 %v1700, %v1696
    %v1813 = vpack.c.b16 %v1701, %v1697
    %v1814 = vpack.c.b16 %v1702, %v1698
    %v1815 = vpack.c.b16 %v1707, %v1703
    %v1816 = vpack.c.b16 %v1708, %v1704
    %v1817 = vpack.c.b16 %v1709, %v1705
    %v1818 = vpack.c.b16 %v1710, %v1706
    %v1819 = vpack.c.b16 %v1715, %v1711
    %v1820 = vpack.c.b16 %v1716, %v1712
    %v1821 = vpack.c.b16 %v1717, %v1713
    %v1822 = vpack.c.b16 %v1718, %v1714
    %v1823 = vpack.c.b16 %v1723, %v1719
    %v1824 = vpack.c.b16 %v1724, %v1720
    %v1825 = vpack.c.b16 %v1725, %v1721
    %v1826 = vpack.c.b16 %v1726, %v1722
    %v1827 = vpack.c.b16 %v1731, %v1727
    %v1828 = vpack.c.b16 %v1732, %v1728
    %v1829 = vpack.c.b16 %v1733, %v1729
    %v1830 = vpack.c.b16 %v1734, %v1730
    %v1831 = vpack.c.b16 %v1739, %v1735
    %v1832 = vpack.c.b16 %v1740, %v1736
    %v1833 = vpack.c.b16 %v1741, %v1737
    %v1834 = vpack.c.b16 %v1742, %v1738
    %v1835 = vpack.c.b16 %v1747, %v1743
    %v1836 = vpack.c.b16 %v1748, %v1744
    %v1837 = vpack.c.b16 %v1749, %v1745
    %v1838 = vpack.c.b16 %v1750, %v1746
    %v1839 = vpack.c.b16 %v1755, %v1751
    %v1840 = vpack.c.b16 %v1756, %v1752
    %v1841 = vpack.c.b16 %v1757, %v1753
    %v1842 = vpack.c.b16 %v1758, %v1754
    %v1843 = vpack.c.b16 %v1763, %v1759
    %v1844 = vpack.c.b16 %v1764, %v1760
    %v1845 = vpack.c.b16 %v1765, %v1761
    %v1846 = vpack.c.b16 %v1766, %v1762
    %v1847 = vpack.c.b16 %v1771, %v1767
    %v1848 = vpack.c.b16 %v1772, %v1768
    %v1849 = vpack.c.b16 %v1773, %v1769
    %v1850 = vpack.c.b16 %v1774, %v1770
    %v1851 = vpack.c.b16 %v1779, %v1775
    %v1852 = vpack.c.b16 %v1780, %v1776
    %v1853 = vpack.c.b16 %v1781, %v1777
    %v1854 = vpack.c.b16 %v1782, %v1778
    %v1855 = vpack.c.b16 %v1787, %v1783
    %v1856 = vpack.c.b16 %v1788, %v1784
    %v1857 = vpack.c.b16 %v1789, %v1785
    %v1858 = vpack.c.b16 %v1790, %v1786
    %v1859 = vpack.c.b16 %v1795, %v1791
    %v1860 = vpack.c.b16 %v1796, %v1792
    %v1861 = vpack.c.b16 %v1797, %v1793
    %v1862 = vpack.c.b16 %v1798, %v1794
    %1927 = vmatprep.subr.bf16.mxu0 %v1828
    %1928 = vmatpush1.bf16.msra.mxu0 %v1827
    %1929 = vmatprep.subr.bf16.mxu0 %v1824
    %1930 = vmatpush1.bf16.msra.mxu0 %v1823
    %1931 = vmatprep.subr.bf16.mxu0 %v1820
    %1932 = vmatpush1.bf16.msra.mxu0 %v1819
    %1933 = vmatprep.subr.bf16.mxu0 %v1816
    %1934 = vmatpush1.bf16.msra.mxu0 %v1815
    %1935 = vmatprep.subr.bf16.mxu0 %v1812
    %1936 = vmatpush1.bf16.msra.mxu0 %v1811
    %1937 = vmatprep.subr.bf16.mxu0 %v1808
    %1938 = vmatpush1.bf16.msra.mxu0 %v1807
    %1939 = vmatprep.subr.bf16.mxu0 %v1804
    %1940 = vmatpush1.bf16.msra.mxu0 %v1803
    %1941 = vmatprep.subr.bf16.mxu0 %v1800
    %1942 = vmatpush1.bf16.msra.mxu0 %v1799
    %1943 = vmatprep.subr.bf16.mxu0 %v1860
    %1944 = vmatpush2.bf16.msra.mxu0 %v1859
    %1945 = vmatprep.subr.bf16.mxu0 %v1856
    %1946 = vmatpush2.bf16.msra.mxu0 %v1855
    %1947 = vmatprep.subr.bf16.mxu0 %v1852
    %1948 = vmatpush2.bf16.msra.mxu0 %v1851
    %1949 = vmatprep.subr.bf16.mxu0 %v1848
    %1950 = vmatpush2.bf16.msra.mxu0 %v1847
    %1951 = vmatprep.subr.bf16.mxu0 %v1844
    %1952 = vmatpush2.bf16.msra.mxu0 %v1843
    %1953 = vmatprep.subr.bf16.mxu0 %v1840
    %1954 = vmatpush2.bf16.msra.mxu0 %v1839
    %1955 = vmatprep.subr.bf16.mxu0 %v1836
    %1956 = vmatpush2.bf16.msra.mxu0 %v1835
    %1957 = vmatprep.subr.bf16.mxu0 %v1832
    %1958 = vmatpush2.bf16.msra.mxu0 %v1831
    %1959 = vmatprep.mubr.bf16.mxu0 %v1520
    %1960 = vmatmul.mubr.bf16.gmra.mxu0 %v1519
    %v1961 = vpop.f32.mrf.mxu0
    %v1962 = vadd.f32 %v1590, %v1961
    %v1963 = vpop.f32.mrf.mxu0
    %v1964 = vadd.f32 %v1594, %v1963
    %v1965 = vpop.f32.mrf.mxu0
    %v1966 = vpop.f32.mrf.mxu0
    %1967 = vdwg.mxu0
    %1968 = vmatprep.subr.bf16.mxu0 %v1830
    %1969 = vmatpush1.bf16.msra.mxu0 %v1829
    %1970 = vmatprep.subr.bf16.mxu0 %v1826
    %1971 = vmatpush1.bf16.msra.mxu0 %v1825
    %1972 = vmatprep.subr.bf16.mxu0 %v1822
    %1973 = vmatpush1.bf16.msra.mxu0 %v1821
    %1974 = vmatprep.subr.bf16.mxu0 %v1818
    %1975 = vmatpush1.bf16.msra.mxu0 %v1817
    %1976 = vmatprep.subr.bf16.mxu0 %v1814
    %1977 = vmatpush1.bf16.msra.mxu0 %v1813
    %1978 = vmatprep.subr.bf16.mxu0 %v1810
    %1979 = vmatpush1.bf16.msra.mxu0 %v1809
    %1980 = vmatprep.subr.bf16.mxu0 %v1806
    %1981 = vmatpush1.bf16.msra.mxu0 %v1805
    %1982 = vmatprep.subr.bf16.mxu0 %v1802
    %1983 = vmatpush1.bf16.msra.mxu0 %v1801
    %1984 = vmatprep.subr.bf16.mxu0 %v1862
    %1985 = vmatpush2.bf16.msra.mxu0 %v1861
    %1986 = vmatprep.subr.bf16.mxu0 %v1858
    %1987 = vmatpush2.bf16.msra.mxu0 %v1857
    %1988 = vmatprep.subr.bf16.mxu0 %v1854
    %1989 = vmatpush2.bf16.msra.mxu0 %v1853
    %1990 = vmatprep.subr.bf16.mxu0 %v1850
    %1991 = vmatpush2.bf16.msra.mxu0 %v1849
    %1992 = vmatprep.subr.bf16.mxu0 %v1846
    %1993 = vmatpush2.bf16.msra.mxu0 %v1845
    %1994 = vmatprep.subr.bf16.mxu0 %v1842
    %1995 = vmatpush2.bf16.msra.mxu0 %v1841
    %1996 = vmatprep.subr.bf16.mxu0 %v1838
    %1997 = vmatpush2.bf16.msra.mxu0 %v1837
    %1998 = vmatprep.subr.bf16.mxu0 %v1834
    %1999 = vmatpush2.bf16.msra.mxu0 %v1833
    %2000 = vmatprep.mubr.bf16.mxu0 %v1520
    %2001 = vmatmul.mubr.bf16.gmra.mxu0 %v1519
    %v2002 = vpop.f32.mrf.mxu0
    %v2003 = vadd.f32 %v1598, %v2002
    %v2004 = vpop.f32.mrf.mxu0
    %v2005 = vadd.f32 %v1602, %v2004
    %v2006 = vpop.f32.mrf.mxu0
    %v2007 = vpop.f32.mrf.mxu0
    %2008 = vdwg.mxu0
    %v2009 = vmax.f32 %v1962, 0.0
    %v2010 = vmax.f32 %v1964, 0.0
    %v2011 = vmax.f32 %v2003, 0.0
    %v2012 = vmax.f32 %v2005, 0.0
    %v2013 = vpack.c.bf16 %v2009, %v2009
    %v2014 = vpack.c.bf16 %v2010, %v2010
    %v2015 = vpack.c.bf16 %v2011, %v2011
    %v2016 = vpack.c.bf16 %v2012, %v2012
    %v2017 = vld [vmem:[#allocation14] sm:$0xf]
    %v2018 = vld [vmem:[#allocation14 + $0x4] sm:$0xf]
    %v2019 = vld [vmem:[#allocation14 + $0x8] sm:$0xf]
    %v2020 = vld [vmem:[#allocation14 + $0xc] sm:$0xf]
    %v2021 = vld [vmem:[#allocation14 + $0x10] sm:$0xf]
    %v2022 = vld [vmem:[#allocation14 + $0x14] sm:$0xf]
    %v2023 = vld [vmem:[#allocation14 + $0x18] sm:$0xf]
    %v2024 = vld [vmem:[#allocation14 + $0x1c] sm:$0xf]
    %v2025 = vld [vmem:[#allocation14 + $0x20] sm:$0xf]
    %v2026 = vld [vmem:[#allocation14 + $0x24] sm:$0xf]
    %v2027 = vld [vmem:[#allocation14 + $0x28] sm:$0xf]
    %v2028 = vld [vmem:[#allocation14 + $0x2c] sm:$0xf]
    %v2029 = vld [vmem:[#allocation14 + $0x30] sm:$0xf]
    %v2030 = vld [vmem:[#allocation14 + $0x34] sm:$0xf]
    %v2031 = vld [vmem:[#allocation14 + $0x38] sm:$0xf]
    %v2032 = vld [vmem:[#allocation14 + $0x3c] sm:$0xf]
    %v2033 = vld [vmem:[#allocation14 + $0x40] sm:$0xf]
    %v2034 = vld [vmem:[#allocation14 + $0x44] sm:$0xf]
    %v2035 = vld [vmem:[#allocation14 + $0x48] sm:$0xf]
    %v2036 = vld [vmem:[#allocation14 + $0x4c] sm:$0xf]
    %v2037 = vld [vmem:[#allocation14 + $0x50] sm:$0xf]
    %v2038 = vld [vmem:[#allocation14 + $0x54] sm:$0xf]
    %v2039 = vld [vmem:[#allocation14 + $0x58] sm:$0xf]
    %v2040 = vld [vmem:[#allocation14 + $0x5c] sm:$0xf]
    %v2041 = vld [vmem:[#allocation14 + $0x60] sm:$0xf]
    %v2042 = vld [vmem:[#allocation14 + $0x64] sm:$0xf]
    %v2043 = vld [vmem:[#allocation14 + $0x68] sm:$0xf]
    %v2044 = vld [vmem:[#allocation14 + $0x6c] sm:$0xf]
    %v2045 = vld [vmem:[#allocation14 + $0x70] sm:$0xf]
    %v2046 = vld [vmem:[#allocation14 + $0x74] sm:$0xf]
    %v2047 = vld [vmem:[#allocation14 + $0x78] sm:$0xf]
    %v2048 = vld [vmem:[#allocation14 + $0x7c] sm:$0xf]
    %v2049 = vld [vmem:[#allocation14 + $0x80] sm:$0xf]
    %v2050 = vld [vmem:[#allocation14 + $0x84] sm:$0xf]
    %v2051 = vld [vmem:[#allocation14 + $0x88] sm:$0xf]
    %v2052 = vld [vmem:[#allocation14 + $0x8c] sm:$0xf]
    %v2053 = vld [vmem:[#allocation14 + $0x90] sm:$0xf]
    %v2054 = vld [vmem:[#allocation14 + $0x94] sm:$0xf]
    %v2055 = vld [vmem:[#allocation14 + $0x98] sm:$0xf]
    %v2056 = vld [vmem:[#allocation14 + $0x9c] sm:$0xf]
    %v2057 = vld [vmem:[#allocation14 + $0xa0] sm:$0xf]
    %v2058 = vld [vmem:[#allocation14 + $0xa4] sm:$0xf]
    %v2059 = vld [vmem:[#allocation14 + $0xa8] sm:$0xf]
    %v2060 = vld [vmem:[#allocation14 + $0xac] sm:$0xf]
    %v2061 = vld [vmem:[#allocation14 + $0xb0] sm:$0xf]
    %v2062 = vld [vmem:[#allocation14 + $0xb4] sm:$0xf]
    %v2063 = vld [vmem:[#allocation14 + $0xb8] sm:$0xf]
    %v2064 = vld [vmem:[#allocation14 + $0xbc] sm:$0xf]
    %v2065 = vld [vmem:[#allocation14 + $0xc0] sm:$0xf]
    %v2066 = vld [vmem:[#allocation14 + $0xc4] sm:$0xf]
    %v2067 = vld [vmem:[#allocation14 + $0xc8] sm:$0xf]
    %v2068 = vld [vmem:[#allocation14 + $0xcc] sm:$0xf]
    %v2069 = vld [vmem:[#allocation14 + $0xd0] sm:$0xf]
    %v2070 = vld [vmem:[#allocation14 + $0xd4] sm:$0xf]
    %v2071 = vld [vmem:[#allocation14 + $0xd8] sm:$0xf]
    %v2072 = vld [vmem:[#allocation14 + $0xdc] sm:$0xf]
    %v2073 = vld [vmem:[#allocation14 + $0xe0] sm:$0xf]
    %v2074 = vld [vmem:[#allocation14 + $0xe4] sm:$0xf]
    %v2075 = vld [vmem:[#allocation14 + $0xe8] sm:$0xf]
    %v2076 = vld [vmem:[#allocation14 + $0xec] sm:$0xf]
    %v2077 = vld [vmem:[#allocation14 + $0xf0] sm:$0xf]
    %v2078 = vld [vmem:[#allocation14 + $0xf4] sm:$0xf]
    %v2079 = vld [vmem:[#allocation14 + $0xf8] sm:$0xf]
    %v2080 = vld [vmem:[#allocation14 + $0xfc] sm:$0xf]
    %v2081 = vld [vmem:[#allocation16] sm:$0x1]
    %v2083 = vlaneseq
    %v2084 = vshrl.u32 %v2083, 7
    %v2085 = vsub.s32 0, %v2084
    %v2086 = vrot.slane %v2081, %v2085
    %v2152 = vunpack.c.l.b16 %v2017
    %v2153 = vunpack.c.l.b16 %v2018
    %v2154 = vunpack.c.l.b16 %v2019
    %v2155 = vunpack.c.l.b16 %v2020
    %v2156 = vunpack.c.l.b16 %v2021
    %v2157 = vunpack.c.l.b16 %v2022
    %v2158 = vunpack.c.l.b16 %v2023
    %v2159 = vunpack.c.l.b16 %v2024
    %v2160 = vunpack.c.l.b16 %v2025
    %v2161 = vunpack.c.l.b16 %v2026
    %v2162 = vunpack.c.l.b16 %v2027
    %v2163 = vunpack.c.l.b16 %v2028
    %v2164 = vunpack.c.l.b16 %v2029
    %v2165 = vunpack.c.l.b16 %v2030
    %v2166 = vunpack.c.l.b16 %v2031
    %v2167 = vunpack.c.l.b16 %v2032
    %v2168 = vunpack.c.l.b16 %v2033
    %v2169 = vunpack.c.l.b16 %v2034
    %v2170 = vunpack.c.l.b16 %v2035
    %v2171 = vunpack.c.l.b16 %v2036
    %v2172 = vunpack.c.l.b16 %v2037
    %v2173 = vunpack.c.l.b16 %v2038
    %v2174 = vunpack.c.l.b16 %v2039
    %v2175 = vunpack.c.l.b16 %v2040
    %v2176 = vunpack.c.l.b16 %v2041
    %v2177 = vunpack.c.l.b16 %v2042
    %v2178 = vunpack.c.l.b16 %v2043
    %v2179 = vunpack.c.l.b16 %v2044
    %v2180 = vunpack.c.l.b16 %v2045
    %v2181 = vunpack.c.l.b16 %v2046
    %v2182 = vunpack.c.l.b16 %v2047
    %v2183 = vunpack.c.l.b16 %v2048
    %v2184 = vunpack.c.l.b16 %v2049
    %v2185 = vunpack.c.l.b16 %v2050
    %v2186 = vunpack.c.l.b16 %v2051
    %v2187 = vunpack.c.l.b16 %v2052
    %v2188 = vunpack.c.l.b16 %v2053
    %v2189 = vunpack.c.l.b16 %v2054
    %v2190 = vunpack.c.l.b16 %v2055
    %v2191 = vunpack.c.l.b16 %v2056
    %v2192 = vunpack.c.l.b16 %v2057
    %v2193 = vunpack.c.l.b16 %v2058
    %v2194 = vunpack.c.l.b16 %v2059
    %v2195 = vunpack.c.l.b16 %v2060
    %v2196 = vunpack.c.l.b16 %v2061
    %v2197 = vunpack.c.l.b16 %v2062
    %v2198 = vunpack.c.l.b16 %v2063
    %v2199 = vunpack.c.l.b16 %v2064
    %v2200 = vunpack.c.l.b16 %v2065
    %v2201 = vunpack.c.l.b16 %v2066
    %v2202 = vunpack.c.l.b16 %v2067
    %v2203 = vunpack.c.l.b16 %v2068
    %v2204 = vunpack.c.l.b16 %v2069
    %v2205 = vunpack.c.l.b16 %v2070
    %v2206 = vunpack.c.l.b16 %v2071
    %v2207 = vunpack.c.l.b16 %v2072
    %v2208 = vunpack.c.l.b16 %v2073
    %v2209 = vunpack.c.l.b16 %v2074
    %v2210 = vunpack.c.l.b16 %v2075
    %v2211 = vunpack.c.l.b16 %v2076
    %v2212 = vunpack.c.l.b16 %v2077
    %v2213 = vunpack.c.l.b16 %v2078
    %v2214 = vunpack.c.l.b16 %v2079
    %v2215 = vunpack.c.l.b16 %v2080
    %v2216 = vpack.c.b16 %v2153, %v2152
    %v2217 = vpack.c.b16 %v2155, %v2154
    %v2218 = vpack.c.b16 %v2157, %v2156
    %v2219 = vpack.c.b16 %v2159, %v2158
    %v2220 = vpack.c.b16 %v2161, %v2160
    %v2221 = vpack.c.b16 %v2163, %v2162
    %v2222 = vpack.c.b16 %v2165, %v2164
    %v2223 = vpack.c.b16 %v2167, %v2166
    %v2224 = vpack.c.b16 %v2169, %v2168
    %v2225 = vpack.c.b16 %v2171, %v2170
    %v2226 = vpack.c.b16 %v2173, %v2172
    %v2227 = vpack.c.b16 %v2175, %v2174
    %v2228 = vpack.c.b16 %v2177, %v2176
    %v2229 = vpack.c.b16 %v2179, %v2178
    %v2230 = vpack.c.b16 %v2181, %v2180
    %v2231 = vpack.c.b16 %v2183, %v2182
    %v2232 = vpack.c.b16 %v2185, %v2184
    %v2233 = vpack.c.b16 %v2187, %v2186
    %v2234 = vpack.c.b16 %v2189, %v2188
    %v2235 = vpack.c.b16 %v2191, %v2190
    %v2236 = vpack.c.b16 %v2193, %v2192
    %v2237 = vpack.c.b16 %v2195, %v2194
    %v2238 = vpack.c.b16 %v2197, %v2196
    %v2239 = vpack.c.b16 %v2199, %v2198
    %v2240 = vpack.c.b16 %v2201, %v2200
    %v2241 = vpack.c.b16 %v2203, %v2202
    %v2242 = vpack.c.b16 %v2205, %v2204
    %v2243 = vpack.c.b16 %v2207, %v2206
    %v2244 = vpack.c.b16 %v2209, %v2208
    %v2245 = vpack.c.b16 %v2211, %v2210
    %v2246 = vpack.c.b16 %v2213, %v2212
    %v2247 = vpack.c.b16 %v2215, %v2214
    %2280 = vmatprep.subr.bf16.mxu0 0
    %2281 = vmatpush1.bf16.msra.mxu0 %v2223
    %2282 = vmatprep.subr.bf16.mxu0 0
    %2283 = vmatpush1.bf16.msra.mxu0 %v2222
    %2284 = vmatprep.subr.bf16.mxu0 0
    %2285 = vmatpush1.bf16.msra.mxu0 %v2221
    %2286 = vmatprep.subr.bf16.mxu0 0
    %2287 = vmatpush1.bf16.msra.mxu0 %v2220
    %2288 = vmatprep.subr.bf16.mxu0 0
    %2289 = vmatpush1.bf16.msra.mxu0 %v2219
    %2290 = vmatprep.subr.bf16.mxu0 0
    %2291 = vmatpush1.bf16.msra.mxu0 %v2218
    %2292 = vmatprep.subr.bf16.mxu0 0
    %2293 = vmatpush1.bf16.msra.mxu0 %v2217
    %2294 = vmatprep.subr.bf16.mxu0 0
    %2295 = vmatpush1.bf16.msra.mxu0 %v2216
    %2296 = vmatprep.subr.bf16.mxu0 0
    %2297 = vmatpush2.bf16.msra.mxu0 %v2231
    %2298 = vmatprep.subr.bf16.mxu0 0
    %2299 = vmatpush2.bf16.msra.mxu0 %v2230
    %2300 = vmatprep.subr.bf16.mxu0 0
    %2301 = vmatpush2.bf16.msra.mxu0 %v2229
    %2302 = vmatprep.subr.bf16.mxu0 0
    %2303 = vmatpush2.bf16.msra.mxu0 %v2228
    %2304 = vmatprep.subr.bf16.mxu0 0
    %2305 = vmatpush2.bf16.msra.mxu0 %v2227
    %2306 = vmatprep.subr.bf16.mxu0 0
    %2307 = vmatpush2.bf16.msra.mxu0 %v2226
    %2308 = vmatprep.subr.bf16.mxu0 0
    %2309 = vmatpush2.bf16.msra.mxu0 %v2225
    %2310 = vmatprep.subr.bf16.mxu0 0
    %2311 = vmatpush2.bf16.msra.mxu0 %v2224
    %2312 = vmatprep.mubr.bf16.mxu0 %v2014
    %2313 = vmatmul.mubr.bf16.gmra.mxu0 %v2013
    %v2314 = vpop.f32.mrf.mxu0
    %v2315 = vadd.f32 %v2086, %v2314
    %v2316 = vpop.f32.mrf.mxu0
    %v2317 = vpop.f32.mrf.mxu0
    %v2318 = vpop.f32.mrf.mxu0
    %2319 = vdwg.mxu0
    %2320 = vmatprep.subr.bf16.mxu0 0
    %2321 = vmatpush1.bf16.msra.mxu0 %v2239
    %2322 = vmatprep.subr.bf16.mxu0 0
    %2323 = vmatpush1.bf16.msra.mxu0 %v2238
    %2324 = vmatprep.subr.bf16.mxu0 0
    %2325 = vmatpush1.bf16.msra.mxu0 %v2237
    %2326 = vmatprep.subr.bf16.mxu0 0
    %2327 = vmatpush1.bf16.msra.mxu0 %v2236
    %2328 = vmatprep.subr.bf16.mxu0 0
    %2329 = vmatpush1.bf16.msra.mxu0 %v2235
    %2330 = vmatprep.subr.bf16.mxu0 0
    %2331 = vmatpush1.bf16.msra.mxu0 %v2234
    %2332 = vmatprep.subr.bf16.mxu0 0
    %2333 = vmatpush1.bf16.msra.mxu0 %v2233
    %2334 = vmatprep.subr.bf16.mxu0 0
    %2335 = vmatpush1.bf16.msra.mxu0 %v2232
    %2336 = vmatprep.subr.bf16.mxu0 0
    %2337 = vmatpush2.bf16.msra.mxu0 %v2247
    %2338 = vmatprep.subr.bf16.mxu0 0
    %2339 = vmatpush2.bf16.msra.mxu0 %v2246
    %2340 = vmatprep.subr.bf16.mxu0 0
    %2341 = vmatpush2.bf16.msra.mxu0 %v2245
    %2342 = vmatprep.subr.bf16.mxu0 0
    %2343 = vmatpush2.bf16.msra.mxu0 %v2244
    %2344 = vmatprep.subr.bf16.mxu0 0
    %2345 = vmatpush2.bf16.msra.mxu0 %v2243
    %2346 = vmatprep.subr.bf16.mxu0 0
    %2347 = vmatpush2.bf16.msra.mxu0 %v2242
    %2348 = vmatprep.subr.bf16.mxu0 0
    %2349 = vmatpush2.bf16.msra.mxu0 %v2241
    %2350 = vmatprep.subr.bf16.mxu0 0
    %2351 = vmatpush2.bf16.msra.mxu0 %v2240
    %2352 = vmatprep.mubr.bf16.mxu0 %v2016
    %2353 = vmatmul.mubr.bf16.gmra.mxu0 %v2015
    %v2354 = vpop.f32.mrf.mxu0
    %v2355 = vadd.f32 %v2315, %v2354
    %v2356 = vpop.f32.mrf.mxu0
    %v2357 = vpop.f32.mrf.mxu0
    %v2358 = vpop.f32.mrf.mxu0
    %2359 = vdwg.mxu0
    %v2360 = vsub.f32 0.0, %v2355
    %v2361 = vmul.f32 %v2360, 1.442695
    %v2362 = vpow.pop %v2361
    %v2363 = vadd.f32 %v2362, 1.0
    %v2364 = vrcp.pop %v2363
    %v2365 = vmul.f32 1.0, %v2364
    %v2366 = vpack.c.bf16 %v2365, %v2365
    %v2367 = vld [vmem:[#allocation23] sm:$0xff]
    %v2368 = vld [vmem:[#allocation23 + $0x8] sm:$0xff]
    %v2369 = vld [vmem:[#allocation23 + $0x10] sm:$0xff]
    %v2370 = vld [vmem:[#allocation23 + $0x18] sm:$0xff]
    %v2371 = vld [vmem:[#allocation23 + $0x20] sm:$0xff]
    %v2372 = vld [vmem:[#allocation23 + $0x28] sm:$0xff]
    %v2373 = vld [vmem:[#allocation23 + $0x30] sm:$0xff]
    %v2374 = vld [vmem:[#allocation23 + $0x38] sm:$0xff]
    %v2375 = vld [vmem:[#allocation23 + $0x40] sm:$0xff]
    %v2376 = vld [vmem:[#allocation23 + $0x48] sm:$0xff]
    %v2377 = vld [vmem:[#allocation23 + $0x50] sm:$0xff]
    %v2378 = vld [vmem:[#allocation23 + $0x58] sm:$0xff]
    %v2379 = vld [vmem:[#allocation23 + $0x60] sm:$0xff]
    %v2380 = vld [vmem:[#allocation23 + $0x68] sm:$0xff]
    %v2381 = vld [vmem:[#allocation23 + $0x70] sm:$0xff]
    %v2382 = vld [vmem:[#allocation23 + $0x78] sm:$0xff]
    %v2383 = vld [vmem:[#allocation23 + $0x80] sm:$0xff]
    %v2384 = vld [vmem:[#allocation23 + $0x88] sm:$0xff]
    %v2385 = vld [vmem:[#allocation23 + $0x90] sm:$0xff]
    %v2386 = vld [vmem:[#allocation23 + $0x98] sm:$0xff]
    %v2387 = vld [vmem:[#allocation23 + $0xa0] sm:$0xff]
    %v2388 = vld [vmem:[#allocation23 + $0xa8] sm:$0xff]
    %v2389 = vld [vmem:[#allocation23 + $0xb0] sm:$0xff]
    %v2390 = vld [vmem:[#allocation23 + $0xb8] sm:$0xff]
    %v2391 = vld [vmem:[#allocation23 + $0xc0] sm:$0xff]
    %v2392 = vld [vmem:[#allocation23 + $0xc8] sm:$0xff]
    %v2393 = vld [vmem:[#allocation23 + $0xd0] sm:$0xff]
    %v2394 = vld [vmem:[#allocation23 + $0xd8] sm:$0xff]
    %v2395 = vld [vmem:[#allocation23 + $0xe0] sm:$0xff]
    %v2396 = vld [vmem:[#allocation23 + $0xe8] sm:$0xff]
    %v2397 = vld [vmem:[#allocation23 + $0xf0] sm:$0xff]
    %v2398 = vld [vmem:[#allocation23 + $0xf8] sm:$0xff]
    %v2399 = vld [vmem:[#allocation25] sm:$0xf]
    %v2401 = vlaneseq
    %v2402 = vshrl.u32 %v2401, 7
    %v2403 = vsub.s32 0, %v2402
    %v2404 = vrot.slane %v2399, %v2403
    %v2405 = vlaneseq
    %v2406 = vshrl.u32 %v2405, 7
    %v2407 = vsub.s32 1, %v2406
    %v2408 = vrot.slane %v2399, %v2407
    %v2409 = vlaneseq
    %v2410 = vshrl.u32 %v2409, 7
    %v2411 = vsub.s32 2, %v2410
    %v2412 = vrot.slane %v2399, %v2411
    %v2413 = vlaneseq
    %v2414 = vshrl.u32 %v2413, 7
    %v2415 = vsub.s32 3, %v2414
    %v2416 = vrot.slane %v2399, %v2415
    %v2453 = vunpack.c.l.b16 %v2367
    %v2454 = vunpack.c.h.b16 %v2367
    %v2455 = vunpack.c.l.b16 %v2368
    %v2456 = vunpack.c.h.b16 %v2368
    %v2457 = vunpack.c.l.b16 %v2369
    %v2458 = vunpack.c.h.b16 %v2369
    %v2459 = vunpack.c.l.b16 %v2370
    %v2460 = vunpack.c.h.b16 %v2370
    %v2461 = vunpack.c.l.b16 %v2371
    %v2462 = vunpack.c.h.b16 %v2371
    %v2463 = vunpack.c.l.b16 %v2372
    %v2464 = vunpack.c.h.b16 %v2372
    %v2465 = vunpack.c.l.b16 %v2373
    %v2466 = vunpack.c.h.b16 %v2373
    %v2467 = vunpack.c.l.b16 %v2374
    %v2468 = vunpack.c.h.b16 %v2374
    %v2469 = vunpack.c.l.b16 %v2375
    %v2470 = vunpack.c.h.b16 %v2375
    %v2471 = vunpack.c.l.b16 %v2376
    %v2472 = vunpack.c.h.b16 %v2376
    %v2473 = vunpack.c.l.b16 %v2377
    %v2474 = vunpack.c.h.b16 %v2377
    %v2475 = vunpack.c.l.b16 %v2378
    %v2476 = vunpack.c.h.b16 %v2378
    %v2477 = vunpack.c.l.b16 %v2379
    %v2478 = vunpack.c.h.b16 %v2379
    %v2479 = vunpack.c.l.b16 %v2380
    %v2480 = vunpack.c.h.b16 %v2380
    %v2481 = vunpack.c.l.b16 %v2381
    %v2482 = vunpack.c.h.b16 %v2381
    %v2483 = vunpack.c.l.b16 %v2382
    %v2484 = vunpack.c.h.b16 %v2382
    %v2485 = vunpack.c.l.b16 %v2383
    %v2486 = vunpack.c.h.b16 %v2383
    %v2487 = vunpack.c.l.b16 %v2384
    %v2488 = vunpack.c.h.b16 %v2384
    %v2489 = vunpack.c.l.b16 %v2385
    %v2490 = vunpack.c.h.b16 %v2385
    %v2491 = vunpack.c.l.b16 %v2386
    %v2492 = vunpack.c.h.b16 %v2386
    %v2493 = vunpack.c.l.b16 %v2387
    %v2494 = vunpack.c.h.b16 %v2387
    %v2495 = vunpack.c.l.b16 %v2388
    %v2496 = vunpack.c.h.b16 %v2388
    %v2497 = vunpack.c.l.b16 %v2389
    %v2498 = vunpack.c.h.b16 %v2389
    %v2499 = vunpack.c.l.b16 %v2390
    %v2500 = vunpack.c.h.b16 %v2390
    %v2501 = vunpack.c.l.b16 %v2391
    %v2502 = vunpack.c.h.b16 %v2391
    %v2503 = vunpack.c.l.b16 %v2392
    %v2504 = vunpack.c.h.b16 %v2392
    %v2505 = vunpack.c.l.b16 %v2393
    %v2506 = vunpack.c.h.b16 %v2393
    %v2507 = vunpack.c.l.b16 %v2394
    %v2508 = vunpack.c.h.b16 %v2394
    %v2509 = vunpack.c.l.b16 %v2395
    %v2510 = vunpack.c.h.b16 %v2395
    %v2511 = vunpack.c.l.b16 %v2396
    %v2512 = vunpack.c.h.b16 %v2396
    %v2513 = vunpack.c.l.b16 %v2397
    %v2514 = vunpack.c.h.b16 %v2397
    %v2515 = vunpack.c.l.b16 %v2398
    %v2516 = vunpack.c.h.b16 %v2398
    %v2517 = vpack.c.b16 %v2457, %v2453
    %v2518 = vpack.c.b16 %v2458, %v2454
    %v2519 = vpack.c.b16 %v2459, %v2455
    %v2520 = vpack.c.b16 %v2460, %v2456
    %v2521 = vpack.c.b16 %v2465, %v2461
    %v2522 = vpack.c.b16 %v2466, %v2462
    %v2523 = vpack.c.b16 %v2467, %v2463
    %v2524 = vpack.c.b16 %v2468, %v2464
    %v2525 = vpack.c.b16 %v2473, %v2469
    %v2526 = vpack.c.b16 %v2474, %v2470
    %v2527 = vpack.c.b16 %v2475, %v2471
    %v2528 = vpack.c.b16 %v2476, %v2472
    %v2529 = vpack.c.b16 %v2481, %v2477
    %v2530 = vpack.c.b16 %v2482, %v2478
    %v2531 = vpack.c.b16 %v2483, %v2479
    %v2532 = vpack.c.b16 %v2484, %v2480
    %v2533 = vpack.c.b16 %v2489, %v2485
    %v2534 = vpack.c.b16 %v2490, %v2486
    %v2535 = vpack.c.b16 %v2491, %v2487
    %v2536 = vpack.c.b16 %v2492, %v2488
    %v2537 = vpack.c.b16 %v2497, %v2493
    %v2538 = vpack.c.b16 %v2498, %v2494
    %v2539 = vpack.c.b16 %v2499, %v2495
    %v2540 = vpack.c.b16 %v2500, %v2496
    %v2541 = vpack.c.b16 %v2505, %v2501
    %v2542 = vpack.c.b16 %v2506, %v2502
    %v2543 = vpack.c.b16 %v2507, %v2503
    %v2544 = vpack.c.b16 %v2508, %v2504
    %v2545 = vpack.c.b16 %v2513, %v2509
    %v2546 = vpack.c.b16 %v2514, %v2510
    %v2547 = vpack.c.b16 %v2515, %v2511
    %v2548 = vpack.c.b16 %v2516, %v2512
    %2581 = vmatprep.subr.bf16.mxu0 %v2546
    %2582 = vmatpush1.bf16.msra.mxu0 %v2545
    %2583 = vmatprep.subr.bf16.mxu0 %v2542
    %2584 = vmatpush1.bf16.msra.mxu0 %v2541
    %2585 = vmatprep.subr.bf16.mxu0 %v2538
    %2586 = vmatpush1.bf16.msra.mxu0 %v2537
    %2587 = vmatprep.subr.bf16.mxu0 %v2534
    %2588 = vmatpush1.bf16.msra.mxu0 %v2533
    %2589 = vmatprep.subr.bf16.mxu0 %v2530
    %2590 = vmatpush1.bf16.msra.mxu0 %v2529
    %2591 = vmatprep.subr.bf16.mxu0 %v2526
    %2592 = vmatpush1.bf16.msra.mxu0 %v2525
    %2593 = vmatprep.subr.bf16.mxu0 %v2522
    %2594 = vmatpush1.bf16.msra.mxu0 %v2521
    %2595 = vmatprep.subr.bf16.mxu0 %v2518
    %2596 = vmatpush1.bf16.msra.mxu0 %v2517
    %2597 = vmatprep.subr.bf16.mxu0 0
    %2598 = vmatpush2.bf16.msra.mxu0 0
    %2599 = vmatprep.subr.bf16.mxu0 0
    %2600 = vmatpush2.bf16.msra.mxu0 0
    %2601 = vmatprep.subr.bf16.mxu0 0
    %2602 = vmatpush2.bf16.msra.mxu0 0
    %2603 = vmatprep.subr.bf16.mxu0 0
    %2604 = vmatpush2.bf16.msra.mxu0 0
    %2605 = vmatprep.subr.bf16.mxu0 0
    %2606 = vmatpush2.bf16.msra.mxu0 0
    %2607 = vmatprep.subr.bf16.mxu0 0
    %2608 = vmatpush2.bf16.msra.mxu0 0
    %2609 = vmatprep.subr.bf16.mxu0 0
    %2610 = vmatpush2.bf16.msra.mxu0 0
    %2611 = vmatprep.subr.bf16.mxu0 0
    %2612 = vmatpush2.bf16.msra.mxu0 0
    %2613 = vmatprep.mubr.bf16.mxu0 0
    %2614 = vmatmul.mubr.bf16.gmra.mxu0 %v2366
    %v2615 = vpop.f32.mrf.mxu0
    %v2616 = vadd.f32 %v2404, %v2615
    %v2617 = vpop.f32.mrf.mxu0
    %v2618 = vadd.f32 %v2408, %v2617
    %v2619 = vpop.f32.mrf.mxu0
    %v2620 = vpop.f32.mrf.mxu0
    %2621 = vdwg.mxu0
    %2622 = vmatprep.subr.bf16.mxu0 %v2548
    %2623 = vmatpush1.bf16.msra.mxu0 %v2547
    %2624 = vmatprep.subr.bf16.mxu0 %v2544
    %2625 = vmatpush1.bf16.msra.mxu0 %v2543
    %2626 = vmatprep.subr.bf16.mxu0 %v2540
    %2627 = vmatpush1.bf16.msra.mxu0 %v2539
    %2628 = vmatprep.subr.bf16.mxu0 %v2536
    %2629 = vmatpush1.bf16.msra.mxu0 %v2535
    %2630 = vmatprep.subr.bf16.mxu0 %v2532
    %2631 = vmatpush1.bf16.msra.mxu0 %v2531
    %2632 = vmatprep.subr.bf16.mxu0 %v2528
    %2633 = vmatpush1.bf16.msra.mxu0 %v2527
    %2634 = vmatprep.subr.bf16.mxu0 %v2524
    %2635 = vmatpush1.bf16.msra.mxu0 %v2523
    %2636 = vmatprep.subr.bf16.mxu0 %v2520
    %2637 = vmatpush1.bf16.msra.mxu0 %v2519
    %2638 = vmatprep.subr.bf16.mxu0 0
    %2639 = vmatpush2.bf16.msra.mxu0 0
    %2640 = vmatprep.subr.bf16.mxu0 0
    %2641 = vmatpush2.bf16.msra.mxu0 0
    %2642 = vmatprep.subr.bf16.mxu0 0
    %2643 = vmatpush2.bf16.msra.mxu0 0
    %2644 = vmatprep.subr.bf16.mxu0 0
    %2645 = vmatpush2.bf16.msra.mxu0 0
    %2646 = vmatprep.subr.bf16.mxu0 0
    %2647 = vmatpush2.bf16.msra.mxu0 0
    %2648 = vmatprep.subr.bf16.mxu0 0
    %2649 = vmatpush2.bf16.msra.mxu0 0
    %2650 = vmatprep.subr.bf16.mxu0 0
    %2651 = vmatpush2.bf16.msra.mxu0 0
    %2652 = vmatprep.subr.bf16.mxu0 0
    %2653 = vmatpush2.bf16.msra.mxu0 0
    %2654 = vmatprep.mubr.bf16.mxu0 0
    %2655 = vmatmul.mubr.bf16.gmra.mxu0 %v2366
    %v2656 = vpop.f32.mrf.mxu0
    %v2657 = vadd.f32 %v2412, %v2656
    %v2658 = vpop.f32.mrf.mxu0
    %v2659 = vadd.f32 %v2416, %v2658
    %v2660 = vpop.f32.mrf.mxu0
    %v2661 = vpop.f32.mrf.mxu0
    %2662 = vdwg.mxu0
    %v2663 = vmax.f32 %v2616, 0.0
    %v2664 = vmax.f32 %v2618, 0.0
    %v2665 = vmax.f32 %v2657, 0.0
    %v2666 = vmax.f32 %v2659, 0.0
    %v2667 = vpack.c.bf16 %v2663, %v2663
    %v2668 = vpack.c.bf16 %v2664, %v2664
    %v2669 = vpack.c.bf16 %v2665, %v2665
    %v2670 = vpack.c.bf16 %v2666, %v2666
    %v2671 = vld [vmem:[#allocation26] sm:$0xff]
    %v2672 = vld [vmem:[#allocation26 + $0x8] sm:$0xff]
    %v2673 = vld [vmem:[#allocation26 + $0x10] sm:$0xff]
    %v2674 = vld [vmem:[#allocation26 + $0x18] sm:$0xff]
    %v2675 = vld [vmem:[#allocation26 + $0x20] sm:$0xff]
    %v2676 = vld [vmem:[#allocation26 + $0x28] sm:$0xff]
    %v2677 = vld [vmem:[#allocation26 + $0x30] sm:$0xff]
    %v2678 = vld [vmem:[#allocation26 + $0x38] sm:$0xff]
    %v2679 = vld [vmem:[#allocation26 + $0x40] sm:$0xff]
    %v2680 = vld [vmem:[#allocation26 + $0x48] sm:$0xff]
    %v2681 = vld [vmem:[#allocation26 + $0x50] sm:$0xff]
    %v2682 = vld [vmem:[#allocation26 + $0x58] sm:$0xff]
    %v2683 = vld [vmem:[#allocation26 + $0x60] sm:$0xff]
    %v2684 = vld [vmem:[#allocation26 + $0x68] sm:$0xff]
    %v2685 = vld [vmem:[#allocation26 + $0x70] sm:$0xff]
    %v2686 = vld [vmem:[#allocation26 + $0x78] sm:$0xff]
    %v2687 = vld [vmem:[#allocation26 + $0x80] sm:$0xff]
    %v2688 = vld [vmem:[#allocation26 + $0x88] sm:$0xff]
    %v2689 = vld [vmem:[#allocation26 + $0x90] sm:$0xff]
    %v2690 = vld [vmem:[#allocation26 + $0x98] sm:$0xff]
    %v2691 = vld [vmem:[#allocation26 + $0xa0] sm:$0xff]
    %v2692 = vld [vmem:[#allocation26 + $0xa8] sm:$0xff]
    %v2693 = vld [vmem:[#allocation26 + $0xb0] sm:$0xff]
    %v2694 = vld [vmem:[#allocation26 + $0xb8] sm:$0xff]
    %v2695 = vld [vmem:[#allocation26 + $0xc0] sm:$0xff]
    %v2696 = vld [vmem:[#allocation26 + $0xc8] sm:$0xff]
    %v2697 = vld [vmem:[#allocation26 + $0xd0] sm:$0xff]
    %v2698 = vld [vmem:[#allocation26 + $0xd8] sm:$0xff]
    %v2699 = vld [vmem:[#allocation26 + $0xe0] sm:$0xff]
    %v2700 = vld [vmem:[#allocation26 + $0xe8] sm:$0xff]
    %v2701 = vld [vmem:[#allocation26 + $0xf0] sm:$0xff]
    %v2702 = vld [vmem:[#allocation26 + $0xf8] sm:$0xff]
    %v2703 = vld [vmem:[#allocation26 + $0x100] sm:$0xff]
    %v2704 = vld [vmem:[#allocation26 + $0x108] sm:$0xff]
    %v2705 = vld [vmem:[#allocation26 + $0x110] sm:$0xff]
    %v2706 = vld [vmem:[#allocation26 + $0x118] sm:$0xff]
    %v2707 = vld [vmem:[#allocation26 + $0x120] sm:$0xff]
    %v2708 = vld [vmem:[#allocation26 + $0x128] sm:$0xff]
    %v2709 = vld [vmem:[#allocation26 + $0x130] sm:$0xff]
    %v2710 = vld [vmem:[#allocation26 + $0x138] sm:$0xff]
    %v2711 = vld [vmem:[#allocation26 + $0x140] sm:$0xff]
    %v2712 = vld [vmem:[#allocation26 + $0x148] sm:$0xff]
    %v2713 = vld [vmem:[#allocation26 + $0x150] sm:$0xff]
    %v2714 = vld [vmem:[#allocation26 + $0x158] sm:$0xff]
    %v2715 = vld [vmem:[#allocation26 + $0x160] sm:$0xff]
    %v2716 = vld [vmem:[#allocation26 + $0x168] sm:$0xff]
    %v2717 = vld [vmem:[#allocation26 + $0x170] sm:$0xff]
    %v2718 = vld [vmem:[#allocation26 + $0x178] sm:$0xff]
    %v2719 = vld [vmem:[#allocation26 + $0x180] sm:$0xff]
    %v2720 = vld [vmem:[#allocation26 + $0x188] sm:$0xff]
    %v2721 = vld [vmem:[#allocation26 + $0x190] sm:$0xff]
    %v2722 = vld [vmem:[#allocation26 + $0x198] sm:$0xff]
    %v2723 = vld [vmem:[#allocation26 + $0x1a0] sm:$0xff]
    %v2724 = vld [vmem:[#allocation26 + $0x1a8] sm:$0xff]
    %v2725 = vld [vmem:[#allocation26 + $0x1b0] sm:$0xff]
    %v2726 = vld [vmem:[#allocation26 + $0x1b8] sm:$0xff]
    %v2727 = vld [vmem:[#allocation26 + $0x1c0] sm:$0xff]
    %v2728 = vld [vmem:[#allocation26 + $0x1c8] sm:$0xff]
    %v2729 = vld [vmem:[#allocation26 + $0x1d0] sm:$0xff]
    %v2730 = vld [vmem:[#allocation26 + $0x1d8] sm:$0xff]
    %v2731 = vld [vmem:[#allocation26 + $0x1e0] sm:$0xff]
    %v2732 = vld [vmem:[#allocation26 + $0x1e8] sm:$0xff]
    %v2733 = vld [vmem:[#allocation26 + $0x1f0] sm:$0xff]
    %v2734 = vld [vmem:[#allocation26 + $0x1f8] sm:$0xff]
    %v2735 = vld [vmem:[#allocation28] sm:$0x3]
    %v2737 = vlaneseq
    %v2738 = vshrl.u32 %v2737, 7
    %v2739 = vsub.s32 0, %v2738
    %v2740 = vrot.slane %v2735, %v2739
    %v2741 = vlaneseq
    %v2742 = vshrl.u32 %v2741, 7
    %v2743 = vsub.s32 1, %v2742
    %v2744 = vrot.slane %v2735, %v2743
    %v2811 = vunpack.c.l.b16 %v2671
    %v2812 = vunpack.c.h.b16 %v2671
    %v2813 = vunpack.c.l.b16 %v2672
    %v2814 = vunpack.c.h.b16 %v2672
    %v2815 = vunpack.c.l.b16 %v2673
    %v2816 = vunpack.c.h.b16 %v2673
    %v2817 = vunpack.c.l.b16 %v2674
    %v2818 = vunpack.c.h.b16 %v2674
    %v2819 = vunpack.c.l.b16 %v2675
    %v2820 = vunpack.c.h.b16 %v2675
    %v2821 = vunpack.c.l.b16 %v2676
    %v2822 = vunpack.c.h.b16 %v2676
    %v2823 = vunpack.c.l.b16 %v2677
    %v2824 = vunpack.c.h.b16 %v2677
    %v2825 = vunpack.c.l.b16 %v2678
    %v2826 = vunpack.c.h.b16 %v2678
    %v2827 = vunpack.c.l.b16 %v2679
    %v2828 = vunpack.c.h.b16 %v2679
    %v2829 = vunpack.c.l.b16 %v2680
    %v2830 = vunpack.c.h.b16 %v2680
    %v2831 = vunpack.c.l.b16 %v2681
    %v2832 = vunpack.c.h.b16 %v2681
    %v2833 = vunpack.c.l.b16 %v2682
    %v2834 = vunpack.c.h.b16 %v2682
    %v2835 = vunpack.c.l.b16 %v2683
    %v2836 = vunpack.c.h.b16 %v2683
    %v2837 = vunpack.c.l.b16 %v2684
    %v2838 = vunpack.c.h.b16 %v2684
    %v2839 = vunpack.c.l.b16 %v2685
    %v2840 = vunpack.c.h.b16 %v2685
    %v2841 = vunpack.c.l.b16 %v2686
    %v2842 = vunpack.c.h.b16 %v2686
    %v2843 = vunpack.c.l.b16 %v2687
    %v2844 = vunpack.c.h.b16 %v2687
    %v2845 = vunpack.c.l.b16 %v2688
    %v2846 = vunpack.c.h.b16 %v2688
    %v2847 = vunpack.c.l.b16 %v2689
    %v2848 = vunpack.c.h.b16 %v2689
    %v2849 = vunpack.c.l.b16 %v2690
    %v2850 = vunpack.c.h.b16 %v2690
    %v2851 = vunpack.c.l.b16 %v2691
    %v2852 = vunpack.c.h.b16 %v2691
    %v2853 = vunpack.c.l.b16 %v2692
    %v2854 = vunpack.c.h.b16 %v2692
    %v2855 = vunpack.c.l.b16 %v2693
    %v2856 = vunpack.c.h.b16 %v2693
    %v2857 = vunpack.c.l.b16 %v2694
    %v2858 = vunpack.c.h.b16 %v2694
    %v2859 = vunpack.c.l.b16 %v2695
    %v2860 = vunpack.c.h.b16 %v2695
    %v2861 = vunpack.c.l.b16 %v2696
    %v2862 = vunpack.c.h.b16 %v2696
    %v2863 = vunpack.c.l.b16 %v2697
    %v2864 = vunpack.c.h.b16 %v2697
    %v2865 = vunpack.c.l.b16 %v2698
    %v2866 = vunpack.c.h.b16 %v2698
    %v2867 = vunpack.c.l.b16 %v2699
    %v2868 = vunpack.c.h.b16 %v2699
    %v2869 = vunpack.c.l.b16 %v2700
    %v2870 = vunpack.c.h.b16 %v2700
    %v2871 = vunpack.c.l.b16 %v2701
    %v2872 = vunpack.c.h.b16 %v2701
    %v2873 = vunpack.c.l.b16 %v2702
    %v2874 = vunpack.c.h.b16 %v2702
    %v2875 = vunpack.c.l.b16 %v2703
    %v2876 = vunpack.c.h.b16 %v2703
    %v2877 = vunpack.c.l.b16 %v2704
    %v2878 = vunpack.c.h.b16 %v2704
    %v2879 = vunpack.c.l.b16 %v2705
    %v2880 = vunpack.c.h.b16 %v2705
    %v2881 = vunpack.c.l.b16 %v2706
    %v2882 = vunpack.c.h.b16 %v2706
    %v2883 = vunpack.c.l.b16 %v2707
    %v2884 = vunpack.c.h.b16 %v2707
    %v2885 = vunpack.c.l.b16 %v2708
    %v2886 = vunpack.c.h.b16 %v2708
    %v2887 = vunpack.c.l.b16 %v2709
    %v2888 = vunpack.c.h.b16 %v2709
    %v2889 = vunpack.c.l.b16 %v2710
    %v2890 = vunpack.c.h.b16 %v2710
    %v2891 = vunpack.c.l.b16 %v2711
    %v2892 = vunpack.c.h.b16 %v2711
    %v2893 = vunpack.c.l.b16 %v2712
    %v2894 = vunpack.c.h.b16 %v2712
    %v2895 = vunpack.c.l.b16 %v2713
    %v2896 = vunpack.c.h.b16 %v2713
    %v2897 = vunpack.c.l.b16 %v2714
    %v2898 = vunpack.c.h.b16 %v2714
    %v2899 = vunpack.c.l.b16 %v2715
    %v2900 = vunpack.c.h.b16 %v2715
    %v2901 = vunpack.c.l.b16 %v2716
    %v2902 = vunpack.c.h.b16 %v2716
    %v2903 = vunpack.c.l.b16 %v2717
    %v2904 = vunpack.c.h.b16 %v2717
    %v2905 = vunpack.c.l.b16 %v2718
    %v2906 = vunpack.c.h.b16 %v2718
    %v2907 = vunpack.c.l.b16 %v2719
    %v2908 = vunpack.c.h.b16 %v2719
    %v2909 = vunpack.c.l.b16 %v2720
    %v2910 = vunpack.c.h.b16 %v2720
    %v2911 = vunpack.c.l.b16 %v2721
    %v2912 = vunpack.c.h.b16 %v2721
    %v2913 = vunpack.c.l.b16 %v2722
    %v2914 = vunpack.c.h.b16 %v2722
    %v2915 = vunpack.c.l.b16 %v2723
    %v2916 = vunpack.c.h.b16 %v2723
    %v2917 = vunpack.c.l.b16 %v2724
    %v2918 = vunpack.c.h.b16 %v2724
    %v2919 = vunpack.c.l.b16 %v2725
    %v2920 = vunpack.c.h.b16 %v2725
    %v2921 = vunpack.c.l.b16 %v2726
    %v2922 = vunpack.c.h.b16 %v2726
    %v2923 = vunpack.c.l.b16 %v2727
    %v2924 = vunpack.c.h.b16 %v2727
    %v2925 = vunpack.c.l.b16 %v2728
    %v2926 = vunpack.c.h.b16 %v2728
    %v2927 = vunpack.c.l.b16 %v2729
    %v2928 = vunpack.c.h.b16 %v2729
    %v2929 = vunpack.c.l.b16 %v2730
    %v2930 = vunpack.c.h.b16 %v2730
    %v2931 = vunpack.c.l.b16 %v2731
    %v2932 = vunpack.c.h.b16 %v2731
    %v2933 = vunpack.c.l.b16 %v2732
    %v2934 = vunpack.c.h.b16 %v2732
    %v2935 = vunpack.c.l.b16 %v2733
    %v2936 = vunpack.c.h.b16 %v2733
    %v2937 = vunpack.c.l.b16 %v2734
    %v2938 = vunpack.c.h.b16 %v2734
    %v2939 = vpack.c.b16 %v2813, %v2811
    %v2940 = vpack.c.b16 %v2814, %v2812
    %v2941 = vpack.c.b16 %v2817, %v2815
    %v2942 = vpack.c.b16 %v2818, %v2816
    %v2943 = vpack.c.b16 %v2821, %v2819
    %v2944 = vpack.c.b16 %v2822, %v2820
    %v2945 = vpack.c.b16 %v2825, %v2823
    %v2946 = vpack.c.b16 %v2826, %v2824
    %v2947 = vpack.c.b16 %v2829, %v2827
    %v2948 = vpack.c.b16 %v2830, %v2828
    %v2949 = vpack.c.b16 %v2833, %v2831
    %v2950 = vpack.c.b16 %v2834, %v2832
    %v2951 = vpack.c.b16 %v2837, %v2835
    %v2952 = vpack.c.b16 %v2838, %v2836
    %v2953 = vpack.c.b16 %v2841, %v2839
    %v2954 = vpack.c.b16 %v2842, %v2840
    %v2955 = vpack.c.b16 %v2845, %v2843
    %v2956 = vpack.c.b16 %v2846, %v2844
    %v2957 = vpack.c.b16 %v2849, %v2847
    %v2958 = vpack.c.b16 %v2850, %v2848
    %v2959 = vpack.c.b16 %v2853, %v2851
    %v2960 = vpack.c.b16 %v2854, %v2852
    %v2961 = vpack.c.b16 %v2857, %v2855
    %v2962 = vpack.c.b16 %v2858, %v2856
    %v2963 = vpack.c.b16 %v2861, %v2859
    %v2964 = vpack.c.b16 %v2862, %v2860
    %v2965 = vpack.c.b16 %v2865, %v2863
    %v2966 = vpack.c.b16 %v2866, %v2864
    %v2967 = vpack.c.b16 %v2869, %v2867
    %v2968 = vpack.c.b16 %v2870, %v2868
    %v2969 = vpack.c.b16 %v2873, %v2871
    %v2970 = vpack.c.b16 %v2874, %v2872
    %v2971 = vpack.c.b16 %v2877, %v2875
    %v2972 = vpack.c.b16 %v2878, %v2876
    %v2973 = vpack.c.b16 %v2881, %v2879
    %v2974 = vpack.c.b16 %v2882, %v2880
    %v2975 = vpack.c.b16 %v2885, %v2883
    %v2976 = vpack.c.b16 %v2886, %v2884
    %v2977 = vpack.c.b16 %v2889, %v2887
    %v2978 = vpack.c.b16 %v2890, %v2888
    %v2979 = vpack.c.b16 %v2893, %v2891
    %v2980 = vpack.c.b16 %v2894, %v2892
    %v2981 = vpack.c.b16 %v2897, %v2895
    %v2982 = vpack.c.b16 %v2898, %v2896
    %v2983 = vpack.c.b16 %v2901, %v2899
    %v2984 = vpack.c.b16 %v2902, %v2900
    %v2985 = vpack.c.b16 %v2905, %v2903
    %v2986 = vpack.c.b16 %v2906, %v2904
    %v2987 = vpack.c.b16 %v2909, %v2907
    %v2988 = vpack.c.b16 %v2910, %v2908
    %v2989 = vpack.c.b16 %v2913, %v2911
    %v2990 = vpack.c.b16 %v2914, %v2912
    %v2991 = vpack.c.b16 %v2917, %v2915
    %v2992 = vpack.c.b16 %v2918, %v2916
    %v2993 = vpack.c.b16 %v2921, %v2919
    %v2994 = vpack.c.b16 %v2922, %v2920
    %v2995 = vpack.c.b16 %v2925, %v2923
    %v2996 = vpack.c.b16 %v2926, %v2924
    %v2997 = vpack.c.b16 %v2929, %v2927
    %v2998 = vpack.c.b16 %v2930, %v2928
    %v2999 = vpack.c.b16 %v2933, %v2931
    %v3000 = vpack.c.b16 %v2934, %v2932
    %v3001 = vpack.c.b16 %v2937, %v2935
    %v3002 = vpack.c.b16 %v2938, %v2936
    %3067 = vmatprep.subr.bf16.mxu0 %v2954
    %3068 = vmatpush1.bf16.msra.mxu0 %v2953
    %3069 = vmatprep.subr.bf16.mxu0 %v2952
    %3070 = vmatpush1.bf16.msra.mxu0 %v2951
    %3071 = vmatprep.subr.bf16.mxu0 %v2950
    %3072 = vmatpush1.bf16.msra.mxu0 %v2949
    %3073 = vmatprep.subr.bf16.mxu0 %v2948
    %3074 = vmatpush1.bf16.msra.mxu0 %v2947
    %3075 = vmatprep.subr.bf16.mxu0 %v2946
    %3076 = vmatpush1.bf16.msra.mxu0 %v2945
    %3077 = vmatprep.subr.bf16.mxu0 %v2944
    %3078 = vmatpush1.bf16.msra.mxu0 %v2943
    %3079 = vmatprep.subr.bf16.mxu0 %v2942
    %3080 = vmatpush1.bf16.msra.mxu0 %v2941
    %3081 = vmatprep.subr.bf16.mxu0 %v2940
    %3082 = vmatpush1.bf16.msra.mxu0 %v2939
    %3083 = vmatprep.subr.bf16.mxu0 %v2970
    %3084 = vmatpush2.bf16.msra.mxu0 %v2969
    %3085 = vmatprep.subr.bf16.mxu0 %v2968
    %3086 = vmatpush2.bf16.msra.mxu0 %v2967
    %3087 = vmatprep.subr.bf16.mxu0 %v2966
    %3088 = vmatpush2.bf16.msra.mxu0 %v2965
    %3089 = vmatprep.subr.bf16.mxu0 %v2964
    %3090 = vmatpush2.bf16.msra.mxu0 %v2963
    %3091 = vmatprep.subr.bf16.mxu0 %v2962
    %3092 = vmatpush2.bf16.msra.mxu0 %v2961
    %3093 = vmatprep.subr.bf16.mxu0 %v2960
    %3094 = vmatpush2.bf16.msra.mxu0 %v2959
    %3095 = vmatprep.subr.bf16.mxu0 %v2958
    %3096 = vmatpush2.bf16.msra.mxu0 %v2957
    %3097 = vmatprep.subr.bf16.mxu0 %v2956
    %3098 = vmatpush2.bf16.msra.mxu0 %v2955
    %3099 = vmatprep.mubr.bf16.mxu0 %v2668
    %3100 = vmatmul.mubr.bf16.gmra.mxu0 %v2667
    %v3101 = vpop.f32.mrf.mxu0
    %v3102 = vadd.f32 %v2740, %v3101
    %v3103 = vpop.f32.mrf.mxu0
    %v3104 = vadd.f32 %v2744, %v3103
    %v3105 = vpop.f32.mrf.mxu0
    %v3106 = vpop.f32.mrf.mxu0
    %3107 = vdwg.mxu0
    %3108 = vmatprep.subr.bf16.mxu0 %v2986
    %3109 = vmatpush1.bf16.msra.mxu0 %v2985
    %3110 = vmatprep.subr.bf16.mxu0 %v2984
    %3111 = vmatpush1.bf16.msra.mxu0 %v2983
    %3112 = vmatprep.subr.bf16.mxu0 %v2982
    %3113 = vmatpush1.bf16.msra.mxu0 %v2981
    %3114 = vmatprep.subr.bf16.mxu0 %v2980
    %3115 = vmatpush1.bf16.msra.mxu0 %v2979
    %3116 = vmatprep.subr.bf16.mxu0 %v2978
    %3117 = vmatpush1.bf16.msra.mxu0 %v2977
    %3118 = vmatprep.subr.bf16.mxu0 %v2976
    %3119 = vmatpush1.bf16.msra.mxu0 %v2975
    %3120 = vmatprep.subr.bf16.mxu0 %v2974
    %3121 = vmatpush1.bf16.msra.mxu0 %v2973
    %3122 = vmatprep.subr.bf16.mxu0 %v2972
    %3123 = vmatpush1.bf16.msra.mxu0 %v2971
    %3124 = vmatprep.subr.bf16.mxu0 %v3002
    %3125 = vmatpush2.bf16.msra.mxu0 %v3001
    %3126 = vmatprep.subr.bf16.mxu0 %v3000
    %3127 = vmatpush2.bf16.msra.mxu0 %v2999
    %3128 = vmatprep.subr.bf16.mxu0 %v2998
    %3129 = vmatpush2.bf16.msra.mxu0 %v2997
    %3130 = vmatprep.subr.bf16.mxu0 %v2996
    %3131 = vmatpush2.bf16.msra.mxu0 %v2995
    %3132 = vmatprep.subr.bf16.mxu0 %v2994
    %3133 = vmatpush2.bf16.msra.mxu0 %v2993
    %3134 = vmatprep.subr.bf16.mxu0 %v2992
    %3135 = vmatpush2.bf16.msra.mxu0 %v2991
    %3136 = vmatprep.subr.bf16.mxu0 %v2990
    %3137 = vmatpush2.bf16.msra.mxu0 %v2989
    %3138 = vmatprep.subr.bf16.mxu0 %v2988
    %3139 = vmatpush2.bf16.msra.mxu0 %v2987
    %3140 = vmatprep.mubr.bf16.mxu0 %v2670
    %3141 = vmatmul.mubr.bf16.gmra.mxu0 %v2669
    %v3142 = vpop.f32.mrf.mxu0
    %v3143 = vadd.f32 %v3102, %v3142
    %v3144 = vpop.f32.mrf.mxu0
    %v3145 = vadd.f32 %v3104, %v3144
    %v3146 = vpop.f32.mrf.mxu0
    %v3147 = vpop.f32.mrf.mxu0
    %3148 = vdwg.mxu0
    %v3149 = vmax.f32 %v3143, 0.0
    %v3150 = vmax.f32 %v3145, 0.0
    %v3151 = vld [vmem:[#allocation29] sm:$0x3]
    %v3153 = vlaneseq
    %v3154 = vshrl.u32 %v3153, 7
    %v3155 = vsub.s32 0, %v3154
    %v3156 = vrot.slane %v3151, %v3155
    %v3157 = vlaneseq
    %v3158 = vshrl.u32 %v3157, 7
    %v3159 = vsub.s32 1, %v3158
    %v3160 = vrot.slane %v3151, %v3159
    %v3163 = vmul.f32 %v3149, %v3156
    %v3164 = vmul.f32 %v3150, %v3160
    %v3165 = vadd.f32 %v3163, %v3164
    %3166 = vadd.xlane.f32.xlu0 %v3165
    %v3167 = vpop.xlane.xlu0 %3166
    %v3168 = vld [vmem:[#allocation4] sm:$0x1]
    %v3170 = vlaneseq
    %v3171 = vshrl.u32 %v3170, 7
    %v3172 = vsub.s32 0, %v3171
    %v3173 = vrot.slane %v3168, %v3172
    %v3175 = vadd.f32 %v3167, %v3173
    %v3176 = vsub.f32 0.0, %v3175
    %v3177 = vmul.f32 %v3176, 1.442695
    %v3178 = vpow.pop %v3177
    %v3179 = vadd.f32 %v3178, 1.0
    %v3180 = vrcp.pop %v3179
    %v3181 = vmul.f32 1.0, %v3180
    %3182 = vst [vmem:[#allocation31] sm:$0xff] %v2365
    %3183 = vst [vmem:[%s27] sm:$0xff] %v1255
    %3184 = vst [vmem:[%s28] sm:$0xff] 0.0
    %3185 = vst.msk [vmem:[%s28] sm:$0xff] %vm1314, %v1273
    %3187 = vrot.lane.b32.xlu0 %v1384, 64
    %v3188 = vpop.permute.xlu0 %3187
    %vm3190 = vcmask 531968
    %3191 = vst.msk [vmem:[%s28] sm:$0xff] %vm3190, %v3188
    %3193 = vrot.lane.b32.xlu0 %v1415, 65
    %v3194 = vpop.permute.xlu0 %3193
    %vm3196 = vcmask 540168
    %3197 = vst.msk [vmem:[%s28] sm:$0xff] %vm3196, %v3194
    %3199 = vrot.lane.b32.xlu0 %v3181, 66
    %v3200 = vpop.permute.xlu0 %3199
    %vm3202 = vcmask 548368
    %3203 = vst.msk [vmem:[%s28] sm:$0xff] %vm3202, %v3200
    // Predicated region
    $region170: #{vae_forward.1} parent=1 // pred_check
      _
    $region171: #{vae_forward.1} parent=1 // pred_check_branch
      %3205 = sbr.rel (0) target = $region173
    $region172: #{vae_forward.1} parent=1 // pred_region
      %s3207 = ssub.s32 128, 128
      %3208 = vsyncadd [#allocation7], %s3207
      %s3210 = sshll.u32 [#allocation31], 4
      %s3211 = int_to_ptr.vmem [resolvable:$true] %s3210
      %3213 = dma.vmem_to_hbm [thread:$0]  %s3211, 128, %s26, [#allocation7]
    $region173: #{vae_forward.1} parent=1 // pred_fallthru
      _
    // Predicated region
    $region174: #{vae_forward.1} parent=1 // pred_check
      _
    $region175: #{vae_forward.1} parent=1 // pred_check_branch
      %3215 = sbr.rel (0) target = $region177
    $region176: #{vae_forward.1} parent=1 // pred_region
      _
    $region177: #{vae_forward.1} parent=1 // pred_fallthru
      _
    // Predicated region
    $region178: #{vae_forward.1} parent=1 // pred_check
      _
    $region179: #{vae_forward.1} parent=1 // pred_check_branch
      %3217 = sbr.rel (0) target = $region181
    $region180: #{vae_forward.1} parent=1 // pred_region
      _
    $region181: #{vae_forward.1} parent=1 // pred_fallthru
      _
    // Predicated region
    $region182: #{vae_forward.1} parent=1 // pred_check
      _
    $region183: #{vae_forward.1} parent=1 // pred_check_branch
      %3219 = sbr.rel (0) target = $region185
    $region184: #{vae_forward.1} parent=1 // pred_region
      %3220 = dma.done [#allocation7], 128
    $region185: #{vae_forward.1} parent=1 // pred_fallthru
      _
    // Predicated region
    $region186: #{vae_forward.1} parent=1 // pred_check
      _
    $region187: #{vae_forward.1} parent=1 // pred_check_branch
      %3222 = sbr.rel (0) target = $region189
    $region188: #{vae_forward.1} parent=1 // pred_region
      _
    $region189: #{vae_forward.1} parent=1 // pred_fallthru
      _
    // Predicated region
    $region190: #{vae_forward.1} parent=1 // pred_check
      _
    $region191: #{vae_forward.1} parent=1 // pred_check_branch
      %3224 = sbr.rel (0) target = $region193
    $region192: #{vae_forward.1} parent=1 // pred_region
      _
    $region193: #{vae_forward.1} parent=1 // pred_fallthru
      _
    %3225 = vsyncpa [#allocation6], 1
    %3226 = vsyncpa [#allocation9], 1
    %3227 = vsyncpa [#allocation12], 1
    %3228 = vsyncpa [#allocation15], 1
    %3229 = vsyncpa [#allocation18], 1
    %3230 = vsyncpa [#allocation21], 1
    %3231 = vsyncpa [#allocation24], 1
    %3232 = vsyncpa [#allocation27], 1
    %3233 = vsyncpa [#allocation30], 1
    %3234 = vsyncpa [#allocation7], 1

</llo_original>
